<compile_context>
chip_gen: v7x
topology: tpu7x:2x2x1
jax: 0.10.0
libtpu: 0.0.40
codegen_flags: <defaults>
</compile_context>

<pallas_src>
import jax
import jax.numpy as jnp
from jax.experimental import pallas as pl
from jax.experimental.pallas import tpu as pltpu

_LANES = 1024               # lane-dense last dim (large multiple of 128)
_ROW_TILE = 1024            # rows per grid step (multiple of 8) -> 4 MiB f32 tile
_SMALL_ELEMS = 1024 * 1024  # below ~1M elements, fused XLA is strictly faster


def _binarize_kernel(y_ref, out_ref):
    # Single vcmp + convert on the VPU; kernel is purely HBM-bandwidth bound.
    out_ref[...] = (y_ref[...] > 0).astype(jnp.float32)


def _pick_row_tile(rows):
    """Largest tile <= _ROW_TILE that still leaves >= 2 grid steps.

    Keeping >= 2 steps lets v7x shard the "parallel" row axis across both
    TensorCores; a 1-step grid would serialize the slab on one core.
    """
    if rows >= 2 * _ROW_TILE:
        return _ROW_TILE
    if rows >= 16:
        # Split roughly in half, rounded up to a multiple of 8 (sublane).
        return (((rows + 1) // 2) + 7) // 8 * 8
    return rows  # tiny slab: full extent (block dim == array dim is legal)


def _binarize_pallas(y2d):
    rows, cols = y2d.shape
    tr = _pick_row_tile(rows)
    grid = (pl.cdiv(rows, tr),)
    return pl.pallas_call(
        _binarize_kernel,
        out_shape=jax.ShapeDtypeStruct((rows, cols), jnp.float32),
        grid_spec=pltpu.PrefetchScalarGridSpec(
            num_scalar_prefetch=0,
            grid=grid,
            in_specs=[pl.BlockSpec((tr, cols), lambda i: (i, 0))],
            out_specs=pl.BlockSpec((tr, cols), lambda i: (i, 0)),
        ),
        compiler_params=pltpu.CompilerParams(
            # Rows are independent -> shard grid across TCs (megacore / v7x).
            dimension_semantics=("parallel",),
            # 16 MiB double-buffered working set; explicit limit so the
            # v5e 16 MiB scoped default is never a surprise, with headroom.
            vmem_limit_bytes=32 * 1024 * 1024,
        ),
    )(y2d)


def _binarize(y):
    """where(y > 0, 1, 0) as float32, preserving y's shape."""
    orig_shape = y.shape
    total = y.size

    # Fast paths:
    #  * tiny inputs are 100% launch overhead in Pallas; let XLA fuse.
    #  * ragged totals would need a pad/slice pair (an extra full HBM pass on
    #    a bandwidth-bound op) -- the fused XLA compare+cast is already at the
    #    elementwise roofline, so just use it.
    if total < _SMALL_ELEMS or total % _LANES != 0:
        return (y > 0).astype(jnp.float32)

    rows = total // _LANES
    y2d = y.reshape(rows, _LANES)      # free: contiguous row-major reshape
    out2d = _binarize_pallas(y2d)
    return out2d.reshape(orig_shape)


def binary_target(t):
    """JAX/Pallas equivalent of BinaryTarget.forward.

    t: tuple/list (x, y). Returns (x, where(y > 0, 1.0, 0.0) as float32).
    """
    x = t[0]
    y = t[1]
    return (x, _binarize(y))


if __name__ == "__main__":
    key = jax.random.PRNGKey(0)
    kx, ky, kz, kw = jax.random.split(key, 4)

    # Small deterministic example consistent with the module: NCHW image batch
    # and per-pixel signed targets. This size takes the fused-XLA fast path.
    x = jax.random.normal(kx, (2, 4, 16, 16), dtype=jnp.float32)
    y = jax.random.normal(ky, (2, 16, 16), dtype=jnp.float32)

    x_out, y_out = binary_target((x, y))
    jax.block_until_ready(x_out)
    jax.block_until_ready(y_out)

    y_ref = jnp.where(y > 0, 1, 0).astype(jnp.float32)
    assert y_out.dtype == jnp.float32
    assert y_out.shape == y.shape
    assert bool(jnp.all(x_out == x))
    assert bool(jnp.all(y_out == y_ref))

    # Integer targets through the fallback path (matches torch int semantics).
    y_int = jax.random.randint(ky, (2, 16, 16), -3, 4, dtype=jnp.int32)
    _, y_int_out = binary_target((x, y_int))
    jax.block_until_ready(y_int_out)
    assert bool(jnp.all(y_int_out == jnp.where(y_int > 0, 1, 0).astype(jnp.float32)))

    # Large aligned target exercising the tiled Pallas path:
    # 8*512*1024 = 4M elements -> slab (4096, 1024), 4 grid steps of (1024, 1024).
    y_big = jax.random.normal(kz, (8, 512, 1024), dtype=jnp.float32)
    _, y_big_out = binary_target((x, y_big))
    jax.block_until_ready(y_big_out)
    y_big_ref = jnp.where(y_big > 0, 1, 0).astype(jnp.float32)
    assert y_big_out.dtype == jnp.float32
    assert y_big_out.shape == y_big.shape
    assert bool(jnp.all(y_big_out == y_big_ref))

    # Mid-size aligned target: rows=1536 < 2*_ROW_TILE -> tile shrinks to 768
    # rows so the grid keeps 2 steps (both v7x TensorCores stream).
    y_mid = jax.random.normal(kw, (1536, 1024), dtype=jnp.float32)
    _, y_mid_out = binary_target((x, y_mid))
    jax.block_until_ready(y_mid_out)
    assert bool(jnp.all(y_mid_out == jnp.where(y_mid > 0, 1, 0).astype(jnp.float32)))

    # Large ragged total (> 1M elems, not a multiple of 1024): routed to the
    # fused-XLA fallback by design (avoids pad/slice HBM passes).
    y_odd = jax.random.normal(ky, (3, 600, 601), dtype=jnp.float32)
    _, y_odd_out = binary_target((x, y_odd))
    jax.block_until_ready(y_odd_out)
    y_odd_ref = jnp.where(y_odd > 0, 1, 0).astype(jnp.float32)
    assert y_odd_out.dtype == jnp.float32
    assert y_odd_out.shape == y_odd.shape
    assert bool(jnp.all(y_odd_out == y_odd_ref))

    print("KERNEL_OK")
</pallas_src>

<mosaic_0001>
module attributes {stable_mosaic.version = 11 : i64} {
  func.func @_binarize_kernel(%arg0: i32, %arg1: memref<1024x1024xf32, #tpu.memory_space<vmem>>, %arg2: memref<1024x1024xf32, #tpu.memory_space<vmem>>) attributes {dimension_semantics = [#tpu.dimension_semantics<parallel>], iteration_bounds = array<i64: 4>, scalar_prefetch = 0 : i64, scratch_operands = 0 : i64, tpu.core_type = #tpu.core_type<tc>, window_params = [{transform_indices = @transform_0, window_bounds = array<i64: 1024, 1024>}, {transform_indices = @transform_1, window_bounds = array<i64: 1024, 1024>}]} {
    %c0 = arith.constant 0 : index
    %c0_0 = arith.constant 0 : index
    %0 = vector.load %arg1[%c0, %c0_0] : memref<1024x1024xf32, #tpu.memory_space<vmem>>, vector<1024x1024xf32>
    %cst = arith.constant 0.000000e+00 : f32
    %1 = vector.broadcast %cst : f32 to vector<1024x1024xf32>
    %2 = arith.cmpf ogt, %0, %1 : vector<1024x1024xf32>
    %3 = arith.extui %2 : vector<1024x1024xi1> to vector<1024x1024xi32>
    %4 = arith.sitofp %3 : vector<1024x1024xi32> to vector<1024x1024xf32>
    %c0_1 = arith.constant 0 : index
    %c0_2 = arith.constant 0 : index
    %5 = vector.load %arg2[%c0_1, %c0_2] : memref<1024x1024xf32, #tpu.memory_space<vmem>>, vector<1024x1024xf32>
    tpu.vector_store %arg2[%c0_1, %c0_2], %4 {strides = array<i32>} : memref<1024x1024xf32, #tpu.memory_space<vmem>>, vector<1024x1024xf32>,
    return
  }
  func.func @transform_0(%arg0: i32) -> (i32, i32) {
    %c0_i32 = arith.constant 0 : i32
    %c0_i32_0 = arith.constant 0 : i32
    return %arg0, %c0_i32 : i32, i32
  }
  func.func @transform_1(%arg0: i32) -> (i32, i32) {
    %c0_i32 = arith.constant 0 : i32
    %c0_i32_0 = arith.constant 0 : i32
    return %arg0, %c0_i32 : i32, i32
  }
}

</mosaic_0001>

<llo_original>
// kernel: tpu_custom_call.1
$region0: #{tpu_custom_call.1}
  #allocation0 [shape = 'u32[]', space=smem, size = 0x4, offset = 0x4, fixed_abs, tag = 'smem constant byte address 0x4 - core index']
  #allocation1 [shape = 'u32[144,128]{1,0:T(1,128)}', space=vmem, size = 0x12000, scoped, tag = 'internal scratch']
  %s0 = inlined_call_operand.hbm [shape: f32[4096,1024], index: 0, kind: input, shape index: {}]
  %s1 = inlined_call_operand.hbm [shape: f32[4096,1024], index: 1, kind: output, shape index: {}]
  %s2 = sld [smem:[#allocation0]]
  $region41: #{tpu_custom_call.1} parent=0
    _
  %s4 = ssub.s32 1, %s2
  %s5 = scalar_select 0, %s4, %s2
  $region1: #{tpu_custom_call.1} parent=0
    #allocation2 [shape = 'u8[8388608]{0}', space=vmem, size = 0x800000, scoped, tag = 'input window, operand 0']
    #allocation3 [shape = 's32[2]{0}', space=sflag, size = 0x8, scoped, tag = 'scoped memory for tpu_custom_call.1']
    #allocation4 [shape = 's32[2]{0}', space=sflag, size = 0x8, scoped, tag = 'scoped memory for tpu_custom_call.1']
    #allocation5 [shape = 'u8[8388608]{0}', space=vmem, size = 0x800000, scoped, tag = 'output window, operand 0']
    %6 = vsyncpa [#allocation3], 0
    %s7 = scalar_lea.sflag [#allocation3], 1
    %8 = vsyncpa %s7, 0
    %9 = vsyncpa [#allocation4], 0
    %s10 = scalar_lea.sflag [#allocation4], 1
    %11 = vsyncpa %s10, 0
    loop: start=0, step=1, limit=6
    $region2: #{tpu_custom_call.1} parent=1 // loop_pre_header
      _
    $region3: #{tpu_custom_call.1} parent=1 // loop_header
      %s13 = sphi 0, %s17
      %p14 = scmp.ge.s32.totalorder %s13, 6
      %s23 = sphi 0, %s25
      %s26 = sphi 0, %s23
      %s27 = sphi 0, %s26
      %s43 = sphi 0, %s27
      %s49 = sphi 0, %s51
      %s52 = sphi 0, %s49
      %s53 = sphi 0, %s52
      %s69 = sphi 0, %s53
    $region4: #{tpu_custom_call.1} parent=1 // loop_header_branch
      %16 = sbr.rel (%p14) target = $region8
    $region5: #{tpu_custom_call.1} parent=1 // loop_body
      %s18 = ssub.s32 %s13, 1
      %s19 = ssub.s32 %s13, 2
      %s20 = sadd.s32 %s13, 1
      %s21 = ssub.s32 %s13, %s20
      %p22 = scmp.eq.s32.totalorder %s21, 0
      %s24 = sadd.s32 %s23, 1
      %s25 = scalar_select %p22, %s23, %s24
      %p28 = pneg %p22
      %p29 = scmp.eq.s32.totalorder %s13, 3
      %p30 = por %p28, %p29
      %p31 = scmp.ne.s32.totalorder %s23, %s26
      %p32 = scmp.eq.s32.totalorder %s13, 0
      %p33 = por %p31, %p32
      %p34 = scmp.ne.s32.totalorder %s23, %s26
      %p35 = scmp.eq.s32.totalorder %s18, 3
      %p36 = por %p34, %p35
      %p37 = scmp.ne.s32.totalorder %s26, %s27
      %p38 = scmp.eq.s32.totalorder %s18, 0
      %p39 = por %p37, %p38
      %p40 = scmp.ne.s32.totalorder %s26, %s27
      %p41 = scmp.eq.s32.totalorder %s19, 3
      %p42 = por %p40, %p41
      %p44 = scmp.ne.s32.totalorder %s27, %s43
      %p45 = scmp.eq.s32.totalorder %s19, 0
      %p46 = por %p44, %p45
      %s47 = ssub.s32 %s13, %s20
      %p48 = scmp.eq.s32.totalorder %s47, 0
      %s50 = sadd.s32 %s49, 1
      %s51 = scalar_select %p48, %s49, %s50
      %p54 = pneg %p48
      %p55 = scmp.eq.s32.totalorder %s13, 3
      %p56 = por %p54, %p55
      %p57 = scmp.ne.s32.totalorder %s49, %s52
      %p58 = scmp.eq.s32.totalorder %s13, 0
      %p59 = por %p57, %p58
      %p60 = scmp.ne.s32.totalorder %s49, %s52
      %p61 = scmp.eq.s32.totalorder %s18, 3
      %p62 = por %p60, %p61
      %p63 = scmp.ne.s32.totalorder %s52, %s53
      %p64 = scmp.eq.s32.totalorder %s18, 0
      %p65 = por %p63, %p64
      %p66 = scmp.ne.s32.totalorder %s52, %s53
      %p67 = scmp.eq.s32.totalorder %s19, 3
      %p68 = por %p66, %p67
      %p70 = scmp.ne.s32.totalorder %s53, %s69
      %p71 = scmp.eq.s32.totalorder %s19, 0
      %p72 = por %p70, %p71
      %p73 = scmp.le.s32.totalorder 1, %s13
      %p74 = scmp.lt.s32.totalorder %s13, 5
      %p75 = pnand %p73, %p74
      %p76 = pneg %p75
      // Predicated region
      $region9: #{tpu_custom_call.1} parent=5 // pred_check
        _
      $region10: #{tpu_custom_call.1} parent=5 // pred_check_branch
        %78 = sbr.rel (%p75) target = $region12
      $region11: #{tpu_custom_call.1} parent=5 // pred_region
        %s79 = ssub.s32 %s13, 1
      $region12: #{tpu_custom_call.1} parent=5 // pred_fallthru
        _
      %p80 = scmp.lt.s32.totalorder %s13, 4
      // Predicated region
      $region13: #{tpu_custom_call.1} parent=5 // pred_check
        %p81 = pneg %p80
      $region14: #{tpu_custom_call.1} parent=5 // pred_check_branch
        %83 = sbr.rel (%p81) target = $region16
      $region15: #{tpu_custom_call.1} parent=5 // pred_region
        // Predicated region
        $region17: #{tpu_custom_call.1} parent=15 // pred_check
          %p84 = pneg %p33
        $region18: #{tpu_custom_call.1} parent=15 // pred_check_branch
          %86 = sbr.rel (%p84) target = $region20
        $region19: #{tpu_custom_call.1} parent=15 // pred_region
          %s87 = sand.u32 %s23, 1
          %s88 = scalar_lea.sflag [#allocation3], %s87
          %s89 = sand.u32 %s23, 1
          %s90 = smul.addr %s89, 8192
          %s91 = scalar_lea.vmem [#allocation2], %s90
          %s92 = smul.u32 128, %s13
          %s94 = ssub.s32 131072, 131072
          %95 = vsyncadd %s88, %s94
          %s96 = smul.addr %s92, 8
          %s97 = smul.addr %s96, 128
          %s98 = scalar_lea.hbm %s0, %s97
          %s99 = sshll.u32 %s91, 4
          %s100 = int_to_ptr.vmem [resolvable:$true] %s99
          %105 = dma.hbm_to_vmem [thread:$0]  %s98, 131072, %s100, %s88, 1024, 1024, 64
        $region20: #{tpu_custom_call.1} parent=15 // pred_fallthru
          _
      $region16: #{tpu_custom_call.1} parent=5 // pred_fallthru
        _
      %p106 = scmp.le.s32.totalorder 1, %s13
      %p107 = scmp.lt.s32.totalorder %s13, 5
      %p108 = pnand %p106, %p107
      %p109 = pneg %p108
      // Predicated region
      $region21: #{tpu_custom_call.1} parent=5 // pred_check
        _
      $region22: #{tpu_custom_call.1} parent=5 // pred_check_branch
        %111 = sbr.rel (%p108) target = $region24
      $region23: #{tpu_custom_call.1} parent=5 // pred_region
        %s112 = ssub.s32 %s13, 1
        %s113 = sand.u32 %s26, 1
        %s114 = scalar_lea.sflag [#allocation3], %s113
        %s115 = sand.u32 %s26, 1
        %s116 = smul.addr %s115, 8192
        %s117 = scalar_lea.vmem [#allocation2], %s116
        // Predicated region
        $region25: #{tpu_custom_call.1} parent=23 // pred_check
          %p118 = pneg %p39
        $region26: #{tpu_custom_call.1} parent=23 // pred_check_branch
          %120 = sbr.rel (%p118) target = $region28
        $region27: #{tpu_custom_call.1} parent=23 // pred_region
          %121 = dma.done %s114, 131072
        $region28: #{tpu_custom_call.1} parent=23 // pred_fallthru
          _
        %s122 = sand.u32 %s26, 1
        %s123 = scalar_lea.sflag [#allocation3], %s122
        %s124 = sand.u32 %s26, 1
        %s125 = smul.addr %s124, 8192
        %s126 = scalar_lea.vmem [#allocation2], %s125
        %p127 = pneg %p39
        %p128 = pneg %p36
        %p129 = pneg %p65
        %p130 = pneg %p62
        %s131 = sand.u32 %s52, 1
        %s132 = scalar_lea.sflag [#allocation4], %s131
        %s133 = sand.u32 %s52, 1
        %s134 = smul.addr %s133, 8192
        %s135 = scalar_lea.vmem [#allocation5], %s134
        %s136 = smul.u32 128, %s18
        %s137 = smul.u32 128, %s18
        %v138 = vld [vmem:[%s117] sm:$0xff]
        %v139 = vld [vmem:[%s117 + $0x8] sm:$0xff]
        %v140 = vld [vmem:[%s117 + $0x10] sm:$0xff]
        %v141 = vld [vmem:[%s117 + $0x18] sm:$0xff]
        %v142 = vld [vmem:[%s117 + $0x20] sm:$0xff]
        %v143 = vld [vmem:[%s117 + $0x28] sm:$0xff]
        %v144 = vld [vmem:[%s117 + $0x30] sm:$0xff]
        %v145 = vld [vmem:[%s117 + $0x38] sm:$0xff]
        %v146 = vld [vmem:[%s117 + $0x40] sm:$0xff]
        %v147 = vld [vmem:[%s117 + $0x48] sm:$0xff]
        %v148 = vld [vmem:[%s117 + $0x50] sm:$0xff]
        %v149 = vld [vmem:[%s117 + $0x58] sm:$0xff]
        %v150 = vld [vmem:[%s117 + $0x60] sm:$0xff]
        %v151 = vld [vmem:[%s117 + $0x68] sm:$0xff]
        %v152 = vld [vmem:[%s117 + $0x70] sm:$0xff]
        %v153 = vld [vmem:[%s117 + $0x78] sm:$0xff]
        %v154 = vld [vmem:[%s117 + $0x80] sm:$0xff]
        %v155 = vld [vmem:[%s117 + $0x88] sm:$0xff]
        %v156 = vld [vmem:[%s117 + $0x90] sm:$0xff]
        %v157 = vld [vmem:[%s117 + $0x98] sm:$0xff]
        %v158 = vld [vmem:[%s117 + $0xa0] sm:$0xff]
        %v159 = vld [vmem:[%s117 + $0xa8] sm:$0xff]
        %v160 = vld [vmem:[%s117 + $0xb0] sm:$0xff]
        %v161 = vld [vmem:[%s117 + $0xb8] sm:$0xff]
        %v162 = vld [vmem:[%s117 + $0xc0] sm:$0xff]
        %v163 = vld [vmem:[%s117 + $0xc8] sm:$0xff]
        %v164 = vld [vmem:[%s117 + $0xd0] sm:$0xff]
        %v165 = vld [vmem:[%s117 + $0xd8] sm:$0xff]
        %v166 = vld [vmem:[%s117 + $0xe0] sm:$0xff]
        %v167 = vld [vmem:[%s117 + $0xe8] sm:$0xff]
        %v168 = vld [vmem:[%s117 + $0xf0] sm:$0xff]
        %v169 = vld [vmem:[%s117 + $0xf8] sm:$0xff]
        %v170 = vld [vmem:[%s117 + $0x100] sm:$0xff]
        %v171 = vld [vmem:[%s117 + $0x108] sm:$0xff]
        %v172 = vld [vmem:[%s117 + $0x110] sm:$0xff]
        %v173 = vld [vmem:[%s117 + $0x118] sm:$0xff]
        %v174 = vld [vmem:[%s117 + $0x120] sm:$0xff]
        %v175 = vld [vmem:[%s117 + $0x128] sm:$0xff]
        %v176 = vld [vmem:[%s117 + $0x130] sm:$0xff]
        %v177 = vld [vmem:[%s117 + $0x138] sm:$0xff]
        %v178 = vld [vmem:[%s117 + $0x140] sm:$0xff]
        %v179 = vld [vmem:[%s117 + $0x148] sm:$0xff]
        %v180 = vld [vmem:[%s117 + $0x150] sm:$0xff]
        %v181 = vld [vmem:[%s117 + $0x158] sm:$0xff]
        %v182 = vld [vmem:[%s117 + $0x160] sm:$0xff]
        %v183 = vld [vmem:[%s117 + $0x168] sm:$0xff]
        %v184 = vld [vmem:[%s117 + $0x170] sm:$0xff]
        %v185 = vld [vmem:[%s117 + $0x178] sm:$0xff]
        %v186 = vld [vmem:[%s117 + $0x180] sm:$0xff]
        %v187 = vld [vmem:[%s117 + $0x188] sm:$0xff]
        %v188 = vld [vmem:[%s117 + $0x190] sm:$0xff]
        %v189 = vld [vmem:[%s117 + $0x198] sm:$0xff]
        %v190 = vld [vmem:[%s117 + $0x1a0] sm:$0xff]
        %v191 = vld [vmem:[%s117 + $0x1a8] sm:$0xff]
        %v192 = vld [vmem:[%s117 + $0x1b0] sm:$0xff]
        %v193 = vld [vmem:[%s117 + $0x1b8] sm:$0xff]
        %v194 = vld [vmem:[%s117 + $0x1c0] sm:$0xff]
        %v195 = vld [vmem:[%s117 + $0x1c8] sm:$0xff]
        %v196 = vld [vmem:[%s117 + $0x1d0] sm:$0xff]
        %v197 = vld [vmem:[%s117 + $0x1d8] sm:$0xff]
        %v198 = vld [vmem:[%s117 + $0x1e0] sm:$0xff]
        %v199 = vld [vmem:[%s117 + $0x1e8] sm:$0xff]
        %v200 = vld [vmem:[%s117 + $0x1f0] sm:$0xff]
        %v201 = vld [vmem:[%s117 + $0x1f8] sm:$0xff]
        %v202 = vld [vmem:[%s117 + $0x200] sm:$0xff]
        %v203 = vld [vmem:[%s117 + $0x208] sm:$0xff]
        %v204 = vld [vmem:[%s117 + $0x210] sm:$0xff]
        %v205 = vld [vmem:[%s117 + $0x218] sm:$0xff]
        %v206 = vld [vmem:[%s117 + $0x220] sm:$0xff]
        %v207 = vld [vmem:[%s117 + $0x228] sm:$0xff]
        %v208 = vld [vmem:[%s117 + $0x230] sm:$0xff]
        %v209 = vld [vmem:[%s117 + $0x238] sm:$0xff]
        %v210 = vld [vmem:[%s117 + $0x240] sm:$0xff]
        %v211 = vld [vmem:[%s117 + $0x248] sm:$0xff]
        %v212 = vld [vmem:[%s117 + $0x250] sm:$0xff]
        %v213 = vld [vmem:[%s117 + $0x258] sm:$0xff]
        %v214 = vld [vmem:[%s117 + $0x260] sm:$0xff]
        %v215 = vld [vmem:[%s117 + $0x268] sm:$0xff]
        %v216 = vld [vmem:[%s117 + $0x270] sm:$0xff]
        %v217 = vld [vmem:[%s117 + $0x278] sm:$0xff]
        %v218 = vld [vmem:[%s117 + $0x280] sm:$0xff]
        %v219 = vld [vmem:[%s117 + $0x288] sm:$0xff]
        %v220 = vld [vmem:[%s117 + $0x290] sm:$0xff]
        %v221 = vld [vmem:[%s117 + $0x298] sm:$0xff]
        %v222 = vld [vmem:[%s117 + $0x2a0] sm:$0xff]
        %v223 = vld [vmem:[%s117 + $0x2a8] sm:$0xff]
        %v224 = vld [vmem:[%s117 + $0x2b0] sm:$0xff]
        %v225 = vld [vmem:[%s117 + $0x2b8] sm:$0xff]
        %v226 = vld [vmem:[%s117 + $0x2c0] sm:$0xff]
        %v227 = vld [vmem:[%s117 + $0x2c8] sm:$0xff]
        %v228 = vld [vmem:[%s117 + $0x2d0] sm:$0xff]
        %v229 = vld [vmem:[%s117 + $0x2d8] sm:$0xff]
        %v230 = vld [vmem:[%s117 + $0x2e0] sm:$0xff]
        %v231 = vld [vmem:[%s117 + $0x2e8] sm:$0xff]
        %v232 = vld [vmem:[%s117 + $0x2f0] sm:$0xff]
        %v233 = vld [vmem:[%s117 + $0x2f8] sm:$0xff]
        %v234 = vld [vmem:[%s117 + $0x300] sm:$0xff]
        %v235 = vld [vmem:[%s117 + $0x308] sm:$0xff]
        %v236 = vld [vmem:[%s117 + $0x310] sm:$0xff]
        %v237 = vld [vmem:[%s117 + $0x318] sm:$0xff]
        %v238 = vld [vmem:[%s117 + $0x320] sm:$0xff]
        %v239 = vld [vmem:[%s117 + $0x328] sm:$0xff]
        %v240 = vld [vmem:[%s117 + $0x330] sm:$0xff]
        %v241 = vld [vmem:[%s117 + $0x338] sm:$0xff]
        %v242 = vld [vmem:[%s117 + $0x340] sm:$0xff]
        %v243 = vld [vmem:[%s117 + $0x348] sm:$0xff]
        %v244 = vld [vmem:[%s117 + $0x350] sm:$0xff]
        %v245 = vld [vmem:[%s117 + $0x358] sm:$0xff]
        %v246 = vld [vmem:[%s117 + $0x360] sm:$0xff]
        %v247 = vld [vmem:[%s117 + $0x368] sm:$0xff]
        %v248 = vld [vmem:[%s117 + $0x370] sm:$0xff]
        %v249 = vld [vmem:[%s117 + $0x378] sm:$0xff]
        %v250 = vld [vmem:[%s117 + $0x380] sm:$0xff]
        %v251 = vld [vmem:[%s117 + $0x388] sm:$0xff]
        %v252 = vld [vmem:[%s117 + $0x390] sm:$0xff]
        %v253 = vld [vmem:[%s117 + $0x398] sm:$0xff]
        %v254 = vld [vmem:[%s117 + $0x3a0] sm:$0xff]
        %v255 = vld [vmem:[%s117 + $0x3a8] sm:$0xff]
        %v256 = vld [vmem:[%s117 + $0x3b0] sm:$0xff]
        %v257 = vld [vmem:[%s117 + $0x3b8] sm:$0xff]
        %v258 = vld [vmem:[%s117 + $0x3c0] sm:$0xff]
        %v259 = vld [vmem:[%s117 + $0x3c8] sm:$0xff]
        %v260 = vld [vmem:[%s117 + $0x3d0] sm:$0xff]
        %v261 = vld [vmem:[%s117 + $0x3d8] sm:$0xff]
        %v262 = vld [vmem:[%s117 + $0x3e0] sm:$0xff]
        %v263 = vld [vmem:[%s117 + $0x3e8] sm:$0xff]
        %v264 = vld [vmem:[%s117 + $0x3f0] sm:$0xff]
        %v265 = vld [vmem:[%s117 + $0x3f8] sm:$0xff]
        %v266 = vld [vmem:[%s117 + $0x400] sm:$0xff]
        %v267 = vld [vmem:[%s117 + $0x408] sm:$0xff]
        %v268 = vld [vmem:[%s117 + $0x410] sm:$0xff]
        %v269 = vld [vmem:[%s117 + $0x418] sm:$0xff]
        %v270 = vld [vmem:[%s117 + $0x420] sm:$0xff]
        %v271 = vld [vmem:[%s117 + $0x428] sm:$0xff]
        %v272 = vld [vmem:[%s117 + $0x430] sm:$0xff]
        %v273 = vld [vmem:[%s117 + $0x438] sm:$0xff]
        %v274 = vld [vmem:[%s117 + $0x440] sm:$0xff]
        %v275 = vld [vmem:[%s117 + $0x448] sm:$0xff]
        %v276 = vld [vmem:[%s117 + $0x450] sm:$0xff]
        %v277 = vld [vmem:[%s117 + $0x458] sm:$0xff]
        %v278 = vld [vmem:[%s117 + $0x460] sm:$0xff]
        %v279 = vld [vmem:[%s117 + $0x468] sm:$0xff]
        %v280 = vld [vmem:[%s117 + $0x470] sm:$0xff]
        %v281 = vld [vmem:[%s117 + $0x478] sm:$0xff]
        %v282 = vld [vmem:[%s117 + $0x480] sm:$0xff]
        %v283 = vld [vmem:[%s117 + $0x488] sm:$0xff]
        %v284 = vld [vmem:[%s117 + $0x490] sm:$0xff]
        %v285 = vld [vmem:[%s117 + $0x498] sm:$0xff]
        %v286 = vld [vmem:[%s117 + $0x4a0] sm:$0xff]
        %v287 = vld [vmem:[%s117 + $0x4a8] sm:$0xff]
        %v288 = vld [vmem:[%s117 + $0x4b0] sm:$0xff]
        %v289 = vld [vmem:[%s117 + $0x4b8] sm:$0xff]
        %v290 = vld [vmem:[%s117 + $0x4c0] sm:$0xff]
        %v291 = vld [vmem:[%s117 + $0x4c8] sm:$0xff]
        %v292 = vld [vmem:[%s117 + $0x4d0] sm:$0xff]
        %v293 = vld [vmem:[%s117 + $0x4d8] sm:$0xff]
        %v294 = vld [vmem:[%s117 + $0x4e0] sm:$0xff]
        %v295 = vld [vmem:[%s117 + $0x4e8] sm:$0xff]
        %v296 = vld [vmem:[%s117 + $0x4f0] sm:$0xff]
        %v297 = vld [vmem:[%s117 + $0x4f8] sm:$0xff]
        %v298 = vld [vmem:[%s117 + $0x500] sm:$0xff]
        %v299 = vld [vmem:[%s117 + $0x508] sm:$0xff]
        %v300 = vld [vmem:[%s117 + $0x510] sm:$0xff]
        %v301 = vld [vmem:[%s117 + $0x518] sm:$0xff]
        %v302 = vld [vmem:[%s117 + $0x520] sm:$0xff]
        %v303 = vld [vmem:[%s117 + $0x528] sm:$0xff]
        %v304 = vld [vmem:[%s117 + $0x530] sm:$0xff]
        %v305 = vld [vmem:[%s117 + $0x538] sm:$0xff]
        %v306 = vld [vmem:[%s117 + $0x540] sm:$0xff]
        %v307 = vld [vmem:[%s117 + $0x548] sm:$0xff]
        %v308 = vld [vmem:[%s117 + $0x550] sm:$0xff]
        %v309 = vld [vmem:[%s117 + $0x558] sm:$0xff]
        %v310 = vld [vmem:[%s117 + $0x560] sm:$0xff]
        %v311 = vld [vmem:[%s117 + $0x568] sm:$0xff]
        %v312 = vld [vmem:[%s117 + $0x570] sm:$0xff]
        %v313 = vld [vmem:[%s117 + $0x578] sm:$0xff]
        %v314 = vld [vmem:[%s117 + $0x580] sm:$0xff]
        %v315 = vld [vmem:[%s117 + $0x588] sm:$0xff]
        %v316 = vld [vmem:[%s117 + $0x590] sm:$0xff]
        %v317 = vld [vmem:[%s117 + $0x598] sm:$0xff]
        %v318 = vld [vmem:[%s117 + $0x5a0] sm:$0xff]
        %v319 = vld [vmem:[%s117 + $0x5a8] sm:$0xff]
        %v320 = vld [vmem:[%s117 + $0x5b0] sm:$0xff]
        %v321 = vld [vmem:[%s117 + $0x5b8] sm:$0xff]
        %v322 = vld [vmem:[%s117 + $0x5c0] sm:$0xff]
        %v323 = vld [vmem:[%s117 + $0x5c8] sm:$0xff]
        %v324 = vld [vmem:[%s117 + $0x5d0] sm:$0xff]
        %v325 = vld [vmem:[%s117 + $0x5d8] sm:$0xff]
        %v326 = vld [vmem:[%s117 + $0x5e0] sm:$0xff]
        %v327 = vld [vmem:[%s117 + $0x5e8] sm:$0xff]
        %v328 = vld [vmem:[%s117 + $0x5f0] sm:$0xff]
        %v329 = vld [vmem:[%s117 + $0x5f8] sm:$0xff]
        %v330 = vld [vmem:[%s117 + $0x600] sm:$0xff]
        %v331 = vld [vmem:[%s117 + $0x608] sm:$0xff]
        %v332 = vld [vmem:[%s117 + $0x610] sm:$0xff]
        %v333 = vld [vmem:[%s117 + $0x618] sm:$0xff]
        %v334 = vld [vmem:[%s117 + $0x620] sm:$0xff]
        %v335 = vld [vmem:[%s117 + $0x628] sm:$0xff]
        %v336 = vld [vmem:[%s117 + $0x630] sm:$0xff]
        %v337 = vld [vmem:[%s117 + $0x638] sm:$0xff]
        %v338 = vld [vmem:[%s117 + $0x640] sm:$0xff]
        %v339 = vld [vmem:[%s117 + $0x648] sm:$0xff]
        %v340 = vld [vmem:[%s117 + $0x650] sm:$0xff]
        %v341 = vld [vmem:[%s117 + $0x658] sm:$0xff]
        %v342 = vld [vmem:[%s117 + $0x660] sm:$0xff]
        %v343 = vld [vmem:[%s117 + $0x668] sm:$0xff]
        %v344 = vld [vmem:[%s117 + $0x670] sm:$0xff]
        %v345 = vld [vmem:[%s117 + $0x678] sm:$0xff]
        %v346 = vld [vmem:[%s117 + $0x680] sm:$0xff]
        %v347 = vld [vmem:[%s117 + $0x688] sm:$0xff]
        %v348 = vld [vmem:[%s117 + $0x690] sm:$0xff]
        %v349 = vld [vmem:[%s117 + $0x698] sm:$0xff]
        %v350 = vld [vmem:[%s117 + $0x6a0] sm:$0xff]
        %v351 = vld [vmem:[%s117 + $0x6a8] sm:$0xff]
        %v352 = vld [vmem:[%s117 + $0x6b0] sm:$0xff]
        %v353 = vld [vmem:[%s117 + $0x6b8] sm:$0xff]
        %v354 = vld [vmem:[%s117 + $0x6c0] sm:$0xff]
        %v355 = vld [vmem:[%s117 + $0x6c8] sm:$0xff]
        %v356 = vld [vmem:[%s117 + $0x6d0] sm:$0xff]
        %v357 = vld [vmem:[%s117 + $0x6d8] sm:$0xff]
        %v358 = vld [vmem:[%s117 + $0x6e0] sm:$0xff]
        %v359 = vld [vmem:[%s117 + $0x6e8] sm:$0xff]
        %v360 = vld [vmem:[%s117 + $0x6f0] sm:$0xff]
        %v361 = vld [vmem:[%s117 + $0x6f8] sm:$0xff]
        %v362 = vld [vmem:[%s117 + $0x700] sm:$0xff]
        %v363 = vld [vmem:[%s117 + $0x708] sm:$0xff]
        %v364 = vld [vmem:[%s117 + $0x710] sm:$0xff]
        %v365 = vld [vmem:[%s117 + $0x718] sm:$0xff]
        %v366 = vld [vmem:[%s117 + $0x720] sm:$0xff]
        %v367 = vld [vmem:[%s117 + $0x728] sm:$0xff]
        %v368 = vld [vmem:[%s117 + $0x730] sm:$0xff]
        %v369 = vld [vmem:[%s117 + $0x738] sm:$0xff]
        %v370 = vld [vmem:[%s117 + $0x740] sm:$0xff]
        %v371 = vld [vmem:[%s117 + $0x748] sm:$0xff]
        %v372 = vld [vmem:[%s117 + $0x750] sm:$0xff]
        %v373 = vld [vmem:[%s117 + $0x758] sm:$0xff]
        %v374 = vld [vmem:[%s117 + $0x760] sm:$0xff]
        %v375 = vld [vmem:[%s117 + $0x768] sm:$0xff]
        %v376 = vld [vmem:[%s117 + $0x770] sm:$0xff]
        %v377 = vld [vmem:[%s117 + $0x778] sm:$0xff]
        %v378 = vld [vmem:[%s117 + $0x780] sm:$0xff]
        %v379 = vld [vmem:[%s117 + $0x788] sm:$0xff]
        %v380 = vld [vmem:[%s117 + $0x790] sm:$0xff]
        %v381 = vld [vmem:[%s117 + $0x798] sm:$0xff]
        %v382 = vld [vmem:[%s117 + $0x7a0] sm:$0xff]
        %v383 = vld [vmem:[%s117 + $0x7a8] sm:$0xff]
        %v384 = vld [vmem:[%s117 + $0x7b0] sm:$0xff]
        %v385 = vld [vmem:[%s117 + $0x7b8] sm:$0xff]
        %v386 = vld [vmem:[%s117 + $0x7c0] sm:$0xff]
        %v387 = vld [vmem:[%s117 + $0x7c8] sm:$0xff]
        %v388 = vld [vmem:[%s117 + $0x7d0] sm:$0xff]
        %v389 = vld [vmem:[%s117 + $0x7d8] sm:$0xff]
        %v390 = vld [vmem:[%s117 + $0x7e0] sm:$0xff]
        %v391 = vld [vmem:[%s117 + $0x7e8] sm:$0xff]
        %v392 = vld [vmem:[%s117 + $0x7f0] sm:$0xff]
        %v393 = vld [vmem:[%s117 + $0x7f8] sm:$0xff]
        %v394 = vld [vmem:[%s117 + $0x800] sm:$0xff]
        %v395 = vld [vmem:[%s117 + $0x808] sm:$0xff]
        %v396 = vld [vmem:[%s117 + $0x810] sm:$0xff]
        %v397 = vld [vmem:[%s117 + $0x818] sm:$0xff]
        %v398 = vld [vmem:[%s117 + $0x820] sm:$0xff]
        %v399 = vld [vmem:[%s117 + $0x828] sm:$0xff]
        %v400 = vld [vmem:[%s117 + $0x830] sm:$0xff]
        %v401 = vld [vmem:[%s117 + $0x838] sm:$0xff]
        %v402 = vld [vmem:[%s117 + $0x840] sm:$0xff]
        %v403 = vld [vmem:[%s117 + $0x848] sm:$0xff]
        %v404 = vld [vmem:[%s117 + $0x850] sm:$0xff]
        %v405 = vld [vmem:[%s117 + $0x858] sm:$0xff]
        %v406 = vld [vmem:[%s117 + $0x860] sm:$0xff]
        %v407 = vld [vmem:[%s117 + $0x868] sm:$0xff]
        %v408 = vld [vmem:[%s117 + $0x870] sm:$0xff]
        %v409 = vld [vmem:[%s117 + $0x878] sm:$0xff]
        %v410 = vld [vmem:[%s117 + $0x880] sm:$0xff]
        %v411 = vld [vmem:[%s117 + $0x888] sm:$0xff]
        %v412 = vld [vmem:[%s117 + $0x890] sm:$0xff]
        %v413 = vld [vmem:[%s117 + $0x898] sm:$0xff]
        %v414 = vld [vmem:[%s117 + $0x8a0] sm:$0xff]
        %v415 = vld [vmem:[%s117 + $0x8a8] sm:$0xff]
        %v416 = vld [vmem:[%s117 + $0x8b0] sm:$0xff]
        %v417 = vld [vmem:[%s117 + $0x8b8] sm:$0xff]
        %v418 = vld [vmem:[%s117 + $0x8c0] sm:$0xff]
        %v419 = vld [vmem:[%s117 + $0x8c8] sm:$0xff]
        %v420 = vld [vmem:[%s117 + $0x8d0] sm:$0xff]
        %v421 = vld [vmem:[%s117 + $0x8d8] sm:$0xff]
        %v422 = vld [vmem:[%s117 + $0x8e0] sm:$0xff]
        %v423 = vld [vmem:[%s117 + $0x8e8] sm:$0xff]
        %v424 = vld [vmem:[%s117 + $0x8f0] sm:$0xff]
        %v425 = vld [vmem:[%s117 + $0x8f8] sm:$0xff]
        %v426 = vld [vmem:[%s117 + $0x900] sm:$0xff]
        %v427 = vld [vmem:[%s117 + $0x908] sm:$0xff]
        %v428 = vld [vmem:[%s117 + $0x910] sm:$0xff]
        %v429 = vld [vmem:[%s117 + $0x918] sm:$0xff]
        %v430 = vld [vmem:[%s117 + $0x920] sm:$0xff]
        %v431 = vld [vmem:[%s117 + $0x928] sm:$0xff]
        %v432 = vld [vmem:[%s117 + $0x930] sm:$0xff]
        %v433 = vld [vmem:[%s117 + $0x938] sm:$0xff]
        %v434 = vld [vmem:[%s117 + $0x940] sm:$0xff]
        %v435 = vld [vmem:[%s117 + $0x948] sm:$0xff]
        %v436 = vld [vmem:[%s117 + $0x950] sm:$0xff]
        %v437 = vld [vmem:[%s117 + $0x958] sm:$0xff]
        %v438 = vld [vmem:[%s117 + $0x960] sm:$0xff]
        %v439 = vld [vmem:[%s117 + $0x968] sm:$0xff]
        %v440 = vld [vmem:[%s117 + $0x970] sm:$0xff]
        %v441 = vld [vmem:[%s117 + $0x978] sm:$0xff]
        %v442 = vld [vmem:[%s117 + $0x980] sm:$0xff]
        %v443 = vld [vmem:[%s117 + $0x988] sm:$0xff]
        %v444 = vld [vmem:[%s117 + $0x990] sm:$0xff]
        %v445 = vld [vmem:[%s117 + $0x998] sm:$0xff]
        %v446 = vld [vmem:[%s117 + $0x9a0] sm:$0xff]
        %v447 = vld [vmem:[%s117 + $0x9a8] sm:$0xff]
        %v448 = vld [vmem:[%s117 + $0x9b0] sm:$0xff]
        %v449 = vld [vmem:[%s117 + $0x9b8] sm:$0xff]
        %v450 = vld [vmem:[%s117 + $0x9c0] sm:$0xff]
        %v451 = vld [vmem:[%s117 + $0x9c8] sm:$0xff]
        %v452 = vld [vmem:[%s117 + $0x9d0] sm:$0xff]
        %v453 = vld [vmem:[%s117 + $0x9d8] sm:$0xff]
        %v454 = vld [vmem:[%s117 + $0x9e0] sm:$0xff]
        %v455 = vld [vmem:[%s117 + $0x9e8] sm:$0xff]
        %v456 = vld [vmem:[%s117 + $0x9f0] sm:$0xff]
        %v457 = vld [vmem:[%s117 + $0x9f8] sm:$0xff]
        %v458 = vld [vmem:[%s117 + $0xa00] sm:$0xff]
        %v459 = vld [vmem:[%s117 + $0xa08] sm:$0xff]
        %v460 = vld [vmem:[%s117 + $0xa10] sm:$0xff]
        %v461 = vld [vmem:[%s117 + $0xa18] sm:$0xff]
        %v462 = vld [vmem:[%s117 + $0xa20] sm:$0xff]
        %v463 = vld [vmem:[%s117 + $0xa28] sm:$0xff]
        %v464 = vld [vmem:[%s117 + $0xa30] sm:$0xff]
        %v465 = vld [vmem:[%s117 + $0xa38] sm:$0xff]
        %v466 = vld [vmem:[%s117 + $0xa40] sm:$0xff]
        %v467 = vld [vmem:[%s117 + $0xa48] sm:$0xff]
        %v468 = vld [vmem:[%s117 + $0xa50] sm:$0xff]
        %v469 = vld [vmem:[%s117 + $0xa58] sm:$0xff]
        %v470 = vld [vmem:[%s117 + $0xa60] sm:$0xff]
        %v471 = vld [vmem:[%s117 + $0xa68] sm:$0xff]
        %v472 = vld [vmem:[%s117 + $0xa70] sm:$0xff]
        %v473 = vld [vmem:[%s117 + $0xa78] sm:$0xff]
        %v474 = vld [vmem:[%s117 + $0xa80] sm:$0xff]
        %v475 = vld [vmem:[%s117 + $0xa88] sm:$0xff]
        %v476 = vld [vmem:[%s117 + $0xa90] sm:$0xff]
        %v477 = vld [vmem:[%s117 + $0xa98] sm:$0xff]
        %v478 = vld [vmem:[%s117 + $0xaa0] sm:$0xff]
        %v479 = vld [vmem:[%s117 + $0xaa8] sm:$0xff]
        %v480 = vld [vmem:[%s117 + $0xab0] sm:$0xff]
        %v481 = vld [vmem:[%s117 + $0xab8] sm:$0xff]
        %v482 = vld [vmem:[%s117 + $0xac0] sm:$0xff]
        %v483 = vld [vmem:[%s117 + $0xac8] sm:$0xff]
        %v484 = vld [vmem:[%s117 + $0xad0] sm:$0xff]
        %v485 = vld [vmem:[%s117 + $0xad8] sm:$0xff]
        %v486 = vld [vmem:[%s117 + $0xae0] sm:$0xff]
        %v487 = vld [vmem:[%s117 + $0xae8] sm:$0xff]
        %v488 = vld [vmem:[%s117 + $0xaf0] sm:$0xff]
        %v489 = vld [vmem:[%s117 + $0xaf8] sm:$0xff]
        %v490 = vld [vmem:[%s117 + $0xb00] sm:$0xff]
        %v491 = vld [vmem:[%s117 + $0xb08] sm:$0xff]
        %v492 = vld [vmem:[%s117 + $0xb10] sm:$0xff]
        %v493 = vld [vmem:[%s117 + $0xb18] sm:$0xff]
        %v494 = vld [vmem:[%s117 + $0xb20] sm:$0xff]
        %v495 = vld [vmem:[%s117 + $0xb28] sm:$0xff]
        %v496 = vld [vmem:[%s117 + $0xb30] sm:$0xff]
        %v497 = vld [vmem:[%s117 + $0xb38] sm:$0xff]
        %v498 = vld [vmem:[%s117 + $0xb40] sm:$0xff]
        %v499 = vld [vmem:[%s117 + $0xb48] sm:$0xff]
        %v500 = vld [vmem:[%s117 + $0xb50] sm:$0xff]
        %v501 = vld [vmem:[%s117 + $0xb58] sm:$0xff]
        %v502 = vld [vmem:[%s117 + $0xb60] sm:$0xff]
        %v503 = vld [vmem:[%s117 + $0xb68] sm:$0xff]
        %v504 = vld [vmem:[%s117 + $0xb70] sm:$0xff]
        %v505 = vld [vmem:[%s117 + $0xb78] sm:$0xff]
        %v506 = vld [vmem:[%s117 + $0xb80] sm:$0xff]
        %v507 = vld [vmem:[%s117 + $0xb88] sm:$0xff]
        %v508 = vld [vmem:[%s117 + $0xb90] sm:$0xff]
        %v509 = vld [vmem:[%s117 + $0xb98] sm:$0xff]
        %v510 = vld [vmem:[%s117 + $0xba0] sm:$0xff]
        %v511 = vld [vmem:[%s117 + $0xba8] sm:$0xff]
        %v512 = vld [vmem:[%s117 + $0xbb0] sm:$0xff]
        %v513 = vld [vmem:[%s117 + $0xbb8] sm:$0xff]
        %v514 = vld [vmem:[%s117 + $0xbc0] sm:$0xff]
        %v515 = vld [vmem:[%s117 + $0xbc8] sm:$0xff]
        %v516 = vld [vmem:[%s117 + $0xbd0] sm:$0xff]
        %v517 = vld [vmem:[%s117 + $0xbd8] sm:$0xff]
        %v518 = vld [vmem:[%s117 + $0xbe0] sm:$0xff]
        %v519 = vld [vmem:[%s117 + $0xbe8] sm:$0xff]
        %v520 = vld [vmem:[%s117 + $0xbf0] sm:$0xff]
        %v521 = vld [vmem:[%s117 + $0xbf8] sm:$0xff]
        %v522 = vld [vmem:[%s117 + $0xc00] sm:$0xff]
        %v523 = vld [vmem:[%s117 + $0xc08] sm:$0xff]
        %v524 = vld [vmem:[%s117 + $0xc10] sm:$0xff]
        %v525 = vld [vmem:[%s117 + $0xc18] sm:$0xff]
        %v526 = vld [vmem:[%s117 + $0xc20] sm:$0xff]
        %v527 = vld [vmem:[%s117 + $0xc28] sm:$0xff]
        %v528 = vld [vmem:[%s117 + $0xc30] sm:$0xff]
        %v529 = vld [vmem:[%s117 + $0xc38] sm:$0xff]
        %v530 = vld [vmem:[%s117 + $0xc40] sm:$0xff]
        %v531 = vld [vmem:[%s117 + $0xc48] sm:$0xff]
        %v532 = vld [vmem:[%s117 + $0xc50] sm:$0xff]
        %v533 = vld [vmem:[%s117 + $0xc58] sm:$0xff]
        %v534 = vld [vmem:[%s117 + $0xc60] sm:$0xff]
        %v535 = vld [vmem:[%s117 + $0xc68] sm:$0xff]
        %v536 = vld [vmem:[%s117 + $0xc70] sm:$0xff]
        %v537 = vld [vmem:[%s117 + $0xc78] sm:$0xff]
        %v538 = vld [vmem:[%s117 + $0xc80] sm:$0xff]
        %v539 = vld [vmem:[%s117 + $0xc88] sm:$0xff]
        %v540 = vld [vmem:[%s117 + $0xc90] sm:$0xff]
        %v541 = vld [vmem:[%s117 + $0xc98] sm:$0xff]
        %v542 = vld [vmem:[%s117 + $0xca0] sm:$0xff]
        %v543 = vld [vmem:[%s117 + $0xca8] sm:$0xff]
        %v544 = vld [vmem:[%s117 + $0xcb0] sm:$0xff]
        %v545 = vld [vmem:[%s117 + $0xcb8] sm:$0xff]
        %v546 = vld [vmem:[%s117 + $0xcc0] sm:$0xff]
        %v547 = vld [vmem:[%s117 + $0xcc8] sm:$0xff]
        %v548 = vld [vmem:[%s117 + $0xcd0] sm:$0xff]
        %v549 = vld [vmem:[%s117 + $0xcd8] sm:$0xff]
        %v550 = vld [vmem:[%s117 + $0xce0] sm:$0xff]
        %v551 = vld [vmem:[%s117 + $0xce8] sm:$0xff]
        %v552 = vld [vmem:[%s117 + $0xcf0] sm:$0xff]
        %v553 = vld [vmem:[%s117 + $0xcf8] sm:$0xff]
        %v554 = vld [vmem:[%s117 + $0xd00] sm:$0xff]
        %v555 = vld [vmem:[%s117 + $0xd08] sm:$0xff]
        %v556 = vld [vmem:[%s117 + $0xd10] sm:$0xff]
        %v557 = vld [vmem:[%s117 + $0xd18] sm:$0xff]
        %v558 = vld [vmem:[%s117 + $0xd20] sm:$0xff]
        %v559 = vld [vmem:[%s117 + $0xd28] sm:$0xff]
        %v560 = vld [vmem:[%s117 + $0xd30] sm:$0xff]
        %v561 = vld [vmem:[%s117 + $0xd38] sm:$0xff]
        %v562 = vld [vmem:[%s117 + $0xd40] sm:$0xff]
        %v563 = vld [vmem:[%s117 + $0xd48] sm:$0xff]
        %v564 = vld [vmem:[%s117 + $0xd50] sm:$0xff]
        %v565 = vld [vmem:[%s117 + $0xd58] sm:$0xff]
        %v566 = vld [vmem:[%s117 + $0xd60] sm:$0xff]
        %v567 = vld [vmem:[%s117 + $0xd68] sm:$0xff]
        %v568 = vld [vmem:[%s117 + $0xd70] sm:$0xff]
        %v569 = vld [vmem:[%s117 + $0xd78] sm:$0xff]
        %v570 = vld [vmem:[%s117 + $0xd80] sm:$0xff]
        %v571 = vld [vmem:[%s117 + $0xd88] sm:$0xff]
        %v572 = vld [vmem:[%s117 + $0xd90] sm:$0xff]
        %v573 = vld [vmem:[%s117 + $0xd98] sm:$0xff]
        %v574 = vld [vmem:[%s117 + $0xda0] sm:$0xff]
        %v575 = vld [vmem:[%s117 + $0xda8] sm:$0xff]
        %v576 = vld [vmem:[%s117 + $0xdb0] sm:$0xff]
        %v577 = vld [vmem:[%s117 + $0xdb8] sm:$0xff]
        %v578 = vld [vmem:[%s117 + $0xdc0] sm:$0xff]
        %v579 = vld [vmem:[%s117 + $0xdc8] sm:$0xff]
        %v580 = vld [vmem:[%s117 + $0xdd0] sm:$0xff]
        %v581 = vld [vmem:[%s117 + $0xdd8] sm:$0xff]
        %v582 = vld [vmem:[%s117 + $0xde0] sm:$0xff]
        %v583 = vld [vmem:[%s117 + $0xde8] sm:$0xff]
        %v584 = vld [vmem:[%s117 + $0xdf0] sm:$0xff]
        %v585 = vld [vmem:[%s117 + $0xdf8] sm:$0xff]
        %v586 = vld [vmem:[%s117 + $0xe00] sm:$0xff]
        %v587 = vld [vmem:[%s117 + $0xe08] sm:$0xff]
        %v588 = vld [vmem:[%s117 + $0xe10] sm:$0xff]
        %v589 = vld [vmem:[%s117 + $0xe18] sm:$0xff]
        %v590 = vld [vmem:[%s117 + $0xe20] sm:$0xff]
        %v591 = vld [vmem:[%s117 + $0xe28] sm:$0xff]
        %v592 = vld [vmem:[%s117 + $0xe30] sm:$0xff]
        %v593 = vld [vmem:[%s117 + $0xe38] sm:$0xff]
        %v594 = vld [vmem:[%s117 + $0xe40] sm:$0xff]
        %v595 = vld [vmem:[%s117 + $0xe48] sm:$0xff]
        %v596 = vld [vmem:[%s117 + $0xe50] sm:$0xff]
        %v597 = vld [vmem:[%s117 + $0xe58] sm:$0xff]
        %v598 = vld [vmem:[%s117 + $0xe60] sm:$0xff]
        %v599 = vld [vmem:[%s117 + $0xe68] sm:$0xff]
        %v600 = vld [vmem:[%s117 + $0xe70] sm:$0xff]
        %v601 = vld [vmem:[%s117 + $0xe78] sm:$0xff]
        %v602 = vld [vmem:[%s117 + $0xe80] sm:$0xff]
        %v603 = vld [vmem:[%s117 + $0xe88] sm:$0xff]
        %v604 = vld [vmem:[%s117 + $0xe90] sm:$0xff]
        %v605 = vld [vmem:[%s117 + $0xe98] sm:$0xff]
        %v606 = vld [vmem:[%s117 + $0xea0] sm:$0xff]
        %v607 = vld [vmem:[%s117 + $0xea8] sm:$0xff]
        %v608 = vld [vmem:[%s117 + $0xeb0] sm:$0xff]
        %v609 = vld [vmem:[%s117 + $0xeb8] sm:$0xff]
        %v610 = vld [vmem:[%s117 + $0xec0] sm:$0xff]
        %v611 = vld [vmem:[%s117 + $0xec8] sm:$0xff]
        %v612 = vld [vmem:[%s117 + $0xed0] sm:$0xff]
        %v613 = vld [vmem:[%s117 + $0xed8] sm:$0xff]
        %v614 = vld [vmem:[%s117 + $0xee0] sm:$0xff]
        %v615 = vld [vmem:[%s117 + $0xee8] sm:$0xff]
        %v616 = vld [vmem:[%s117 + $0xef0] sm:$0xff]
        %v617 = vld [vmem:[%s117 + $0xef8] sm:$0xff]
        %v618 = vld [vmem:[%s117 + $0xf00] sm:$0xff]
        %v619 = vld [vmem:[%s117 + $0xf08] sm:$0xff]
        %v620 = vld [vmem:[%s117 + $0xf10] sm:$0xff]
        %v621 = vld [vmem:[%s117 + $0xf18] sm:$0xff]
        %v622 = vld [vmem:[%s117 + $0xf20] sm:$0xff]
        %v623 = vld [vmem:[%s117 + $0xf28] sm:$0xff]
        %v624 = vld [vmem:[%s117 + $0xf30] sm:$0xff]
        %v625 = vld [vmem:[%s117 + $0xf38] sm:$0xff]
        %v626 = vld [vmem:[%s117 + $0xf40] sm:$0xff]
        %v627 = vld [vmem:[%s117 + $0xf48] sm:$0xff]
        %v628 = vld [vmem:[%s117 + $0xf50] sm:$0xff]
        %v629 = vld [vmem:[%s117 + $0xf58] sm:$0xff]
        %v630 = vld [vmem:[%s117 + $0xf60] sm:$0xff]
        %v631 = vld [vmem:[%s117 + $0xf68] sm:$0xff]
        %v632 = vld [vmem:[%s117 + $0xf70] sm:$0xff]
        %v633 = vld [vmem:[%s117 + $0xf78] sm:$0xff]
        %v634 = vld [vmem:[%s117 + $0xf80] sm:$0xff]
        %v635 = vld [vmem:[%s117 + $0xf88] sm:$0xff]
        %v636 = vld [vmem:[%s117 + $0xf90] sm:$0xff]
        %v637 = vld [vmem:[%s117 + $0xf98] sm:$0xff]
        %v638 = vld [vmem:[%s117 + $0xfa0] sm:$0xff]
        %v639 = vld [vmem:[%s117 + $0xfa8] sm:$0xff]
        %v640 = vld [vmem:[%s117 + $0xfb0] sm:$0xff]
        %v641 = vld [vmem:[%s117 + $0xfb8] sm:$0xff]
        %v642 = vld [vmem:[%s117 + $0xfc0] sm:$0xff]
        %v643 = vld [vmem:[%s117 + $0xfc8] sm:$0xff]
        %v644 = vld [vmem:[%s117 + $0xfd0] sm:$0xff]
        %v645 = vld [vmem:[%s117 + $0xfd8] sm:$0xff]
        %v646 = vld [vmem:[%s117 + $0xfe0] sm:$0xff]
        %v647 = vld [vmem:[%s117 + $0xfe8] sm:$0xff]
        %v648 = vld [vmem:[%s117 + $0xff0] sm:$0xff]
        %v649 = vld [vmem:[%s117 + $0xff8] sm:$0xff]
        %v650 = vld [vmem:[%s117 + $0x1000] sm:$0xff]
        %v651 = vld [vmem:[%s117 + $0x1008] sm:$0xff]
        %v652 = vld [vmem:[%s117 + $0x1010] sm:$0xff]
        %v653 = vld [vmem:[%s117 + $0x1018] sm:$0xff]
        %v654 = vld [vmem:[%s117 + $0x1020] sm:$0xff]
        %v655 = vld [vmem:[%s117 + $0x1028] sm:$0xff]
        %v656 = vld [vmem:[%s117 + $0x1030] sm:$0xff]
        %v657 = vld [vmem:[%s117 + $0x1038] sm:$0xff]
        %v658 = vld [vmem:[%s117 + $0x1040] sm:$0xff]
        %v659 = vld [vmem:[%s117 + $0x1048] sm:$0xff]
        %v660 = vld [vmem:[%s117 + $0x1050] sm:$0xff]
        %v661 = vld [vmem:[%s117 + $0x1058] sm:$0xff]
        %v662 = vld [vmem:[%s117 + $0x1060] sm:$0xff]
        %v663 = vld [vmem:[%s117 + $0x1068] sm:$0xff]
        %v664 = vld [vmem:[%s117 + $0x1070] sm:$0xff]
        %v665 = vld [vmem:[%s117 + $0x1078] sm:$0xff]
        %v666 = vld [vmem:[%s117 + $0x1080] sm:$0xff]
        %v667 = vld [vmem:[%s117 + $0x1088] sm:$0xff]
        %v668 = vld [vmem:[%s117 + $0x1090] sm:$0xff]
        %v669 = vld [vmem:[%s117 + $0x1098] sm:$0xff]
        %v670 = vld [vmem:[%s117 + $0x10a0] sm:$0xff]
        %v671 = vld [vmem:[%s117 + $0x10a8] sm:$0xff]
        %v672 = vld [vmem:[%s117 + $0x10b0] sm:$0xff]
        %v673 = vld [vmem:[%s117 + $0x10b8] sm:$0xff]
        %v674 = vld [vmem:[%s117 + $0x10c0] sm:$0xff]
        %v675 = vld [vmem:[%s117 + $0x10c8] sm:$0xff]
        %v676 = vld [vmem:[%s117 + $0x10d0] sm:$0xff]
        %v677 = vld [vmem:[%s117 + $0x10d8] sm:$0xff]
        %v678 = vld [vmem:[%s117 + $0x10e0] sm:$0xff]
        %v679 = vld [vmem:[%s117 + $0x10e8] sm:$0xff]
        %v680 = vld [vmem:[%s117 + $0x10f0] sm:$0xff]
        %v681 = vld [vmem:[%s117 + $0x10f8] sm:$0xff]
        %v682 = vld [vmem:[%s117 + $0x1100] sm:$0xff]
        %v683 = vld [vmem:[%s117 + $0x1108] sm:$0xff]
        %v684 = vld [vmem:[%s117 + $0x1110] sm:$0xff]
        %v685 = vld [vmem:[%s117 + $0x1118] sm:$0xff]
        %v686 = vld [vmem:[%s117 + $0x1120] sm:$0xff]
        %v687 = vld [vmem:[%s117 + $0x1128] sm:$0xff]
        %v688 = vld [vmem:[%s117 + $0x1130] sm:$0xff]
        %v689 = vld [vmem:[%s117 + $0x1138] sm:$0xff]
        %v690 = vld [vmem:[%s117 + $0x1140] sm:$0xff]
        %v691 = vld [vmem:[%s117 + $0x1148] sm:$0xff]
        %v692 = vld [vmem:[%s117 + $0x1150] sm:$0xff]
        %v693 = vld [vmem:[%s117 + $0x1158] sm:$0xff]
        %v694 = vld [vmem:[%s117 + $0x1160] sm:$0xff]
        %v695 = vld [vmem:[%s117 + $0x1168] sm:$0xff]
        %v696 = vld [vmem:[%s117 + $0x1170] sm:$0xff]
        %v697 = vld [vmem:[%s117 + $0x1178] sm:$0xff]
        %v698 = vld [vmem:[%s117 + $0x1180] sm:$0xff]
        %v699 = vld [vmem:[%s117 + $0x1188] sm:$0xff]
        %v700 = vld [vmem:[%s117 + $0x1190] sm:$0xff]
        %v701 = vld [vmem:[%s117 + $0x1198] sm:$0xff]
        %v702 = vld [vmem:[%s117 + $0x11a0] sm:$0xff]
        %v703 = vld [vmem:[%s117 + $0x11a8] sm:$0xff]
        %v704 = vld [vmem:[%s117 + $0x11b0] sm:$0xff]
        %v705 = vld [vmem:[%s117 + $0x11b8] sm:$0xff]
        %v706 = vld [vmem:[%s117 + $0x11c0] sm:$0xff]
        %v707 = vld [vmem:[%s117 + $0x11c8] sm:$0xff]
        %v708 = vld [vmem:[%s117 + $0x11d0] sm:$0xff]
        %v709 = vld [vmem:[%s117 + $0x11d8] sm:$0xff]
        %v710 = vld [vmem:[%s117 + $0x11e0] sm:$0xff]
        %v711 = vld [vmem:[%s117 + $0x11e8] sm:$0xff]
        %v712 = vld [vmem:[%s117 + $0x11f0] sm:$0xff]
        %v713 = vld [vmem:[%s117 + $0x11f8] sm:$0xff]
        %v714 = vld [vmem:[%s117 + $0x1200] sm:$0xff]
        %v715 = vld [vmem:[%s117 + $0x1208] sm:$0xff]
        %v716 = vld [vmem:[%s117 + $0x1210] sm:$0xff]
        %v717 = vld [vmem:[%s117 + $0x1218] sm:$0xff]
        %v718 = vld [vmem:[%s117 + $0x1220] sm:$0xff]
        %v719 = vld [vmem:[%s117 + $0x1228] sm:$0xff]
        %v720 = vld [vmem:[%s117 + $0x1230] sm:$0xff]
        %v721 = vld [vmem:[%s117 + $0x1238] sm:$0xff]
        %v722 = vld [vmem:[%s117 + $0x1240] sm:$0xff]
        %v723 = vld [vmem:[%s117 + $0x1248] sm:$0xff]
        %v724 = vld [vmem:[%s117 + $0x1250] sm:$0xff]
        %v725 = vld [vmem:[%s117 + $0x1258] sm:$0xff]
        %v726 = vld [vmem:[%s117 + $0x1260] sm:$0xff]
        %v727 = vld [vmem:[%s117 + $0x1268] sm:$0xff]
        %v728 = vld [vmem:[%s117 + $0x1270] sm:$0xff]
        %v729 = vld [vmem:[%s117 + $0x1278] sm:$0xff]
        %v730 = vld [vmem:[%s117 + $0x1280] sm:$0xff]
        %v731 = vld [vmem:[%s117 + $0x1288] sm:$0xff]
        %v732 = vld [vmem:[%s117 + $0x1290] sm:$0xff]
        %v733 = vld [vmem:[%s117 + $0x1298] sm:$0xff]
        %v734 = vld [vmem:[%s117 + $0x12a0] sm:$0xff]
        %v735 = vld [vmem:[%s117 + $0x12a8] sm:$0xff]
        %v736 = vld [vmem:[%s117 + $0x12b0] sm:$0xff]
        %v737 = vld [vmem:[%s117 + $0x12b8] sm:$0xff]
        %v738 = vld [vmem:[%s117 + $0x12c0] sm:$0xff]
        %v739 = vld [vmem:[%s117 + $0x12c8] sm:$0xff]
        %v740 = vld [vmem:[%s117 + $0x12d0] sm:$0xff]
        %v741 = vld [vmem:[%s117 + $0x12d8] sm:$0xff]
        %v742 = vld [vmem:[%s117 + $0x12e0] sm:$0xff]
        %v743 = vld [vmem:[%s117 + $0x12e8] sm:$0xff]
        %v744 = vld [vmem:[%s117 + $0x12f0] sm:$0xff]
        %v745 = vld [vmem:[%s117 + $0x12f8] sm:$0xff]
        %v746 = vld [vmem:[%s117 + $0x1300] sm:$0xff]
        %v747 = vld [vmem:[%s117 + $0x1308] sm:$0xff]
        %v748 = vld [vmem:[%s117 + $0x1310] sm:$0xff]
        %v749 = vld [vmem:[%s117 + $0x1318] sm:$0xff]
        %v750 = vld [vmem:[%s117 + $0x1320] sm:$0xff]
        %v751 = vld [vmem:[%s117 + $0x1328] sm:$0xff]
        %v752 = vld [vmem:[%s117 + $0x1330] sm:$0xff]
        %v753 = vld [vmem:[%s117 + $0x1338] sm:$0xff]
        %v754 = vld [vmem:[%s117 + $0x1340] sm:$0xff]
        %v755 = vld [vmem:[%s117 + $0x1348] sm:$0xff]
        %v756 = vld [vmem:[%s117 + $0x1350] sm:$0xff]
        %v757 = vld [vmem:[%s117 + $0x1358] sm:$0xff]
        %v758 = vld [vmem:[%s117 + $0x1360] sm:$0xff]
        %v759 = vld [vmem:[%s117 + $0x1368] sm:$0xff]
        %v760 = vld [vmem:[%s117 + $0x1370] sm:$0xff]
        %v761 = vld [vmem:[%s117 + $0x1378] sm:$0xff]
        %v762 = vld [vmem:[%s117 + $0x1380] sm:$0xff]
        %v763 = vld [vmem:[%s117 + $0x1388] sm:$0xff]
        %v764 = vld [vmem:[%s117 + $0x1390] sm:$0xff]
        %v765 = vld [vmem:[%s117 + $0x1398] sm:$0xff]
        %v766 = vld [vmem:[%s117 + $0x13a0] sm:$0xff]
        %v767 = vld [vmem:[%s117 + $0x13a8] sm:$0xff]
        %v768 = vld [vmem:[%s117 + $0x13b0] sm:$0xff]
        %v769 = vld [vmem:[%s117 + $0x13b8] sm:$0xff]
        %v770 = vld [vmem:[%s117 + $0x13c0] sm:$0xff]
        %v771 = vld [vmem:[%s117 + $0x13c8] sm:$0xff]
        %v772 = vld [vmem:[%s117 + $0x13d0] sm:$0xff]
        %v773 = vld [vmem:[%s117 + $0x13d8] sm:$0xff]
        %v774 = vld [vmem:[%s117 + $0x13e0] sm:$0xff]
        %v775 = vld [vmem:[%s117 + $0x13e8] sm:$0xff]
        %v776 = vld [vmem:[%s117 + $0x13f0] sm:$0xff]
        %v777 = vld [vmem:[%s117 + $0x13f8] sm:$0xff]
        %v778 = vld [vmem:[%s117 + $0x1400] sm:$0xff]
        %v779 = vld [vmem:[%s117 + $0x1408] sm:$0xff]
        %v780 = vld [vmem:[%s117 + $0x1410] sm:$0xff]
        %v781 = vld [vmem:[%s117 + $0x1418] sm:$0xff]
        %v782 = vld [vmem:[%s117 + $0x1420] sm:$0xff]
        %v783 = vld [vmem:[%s117 + $0x1428] sm:$0xff]
        %v784 = vld [vmem:[%s117 + $0x1430] sm:$0xff]
        %v785 = vld [vmem:[%s117 + $0x1438] sm:$0xff]
        %v786 = vld [vmem:[%s117 + $0x1440] sm:$0xff]
        %v787 = vld [vmem:[%s117 + $0x1448] sm:$0xff]
        %v788 = vld [vmem:[%s117 + $0x1450] sm:$0xff]
        %v789 = vld [vmem:[%s117 + $0x1458] sm:$0xff]
        %v790 = vld [vmem:[%s117 + $0x1460] sm:$0xff]
        %v791 = vld [vmem:[%s117 + $0x1468] sm:$0xff]
        %v792 = vld [vmem:[%s117 + $0x1470] sm:$0xff]
        %v793 = vld [vmem:[%s117 + $0x1478] sm:$0xff]
        %v794 = vld [vmem:[%s117 + $0x1480] sm:$0xff]
        %v795 = vld [vmem:[%s117 + $0x1488] sm:$0xff]
        %v796 = vld [vmem:[%s117 + $0x1490] sm:$0xff]
        %v797 = vld [vmem:[%s117 + $0x1498] sm:$0xff]
        %v798 = vld [vmem:[%s117 + $0x14a0] sm:$0xff]
        %v799 = vld [vmem:[%s117 + $0x14a8] sm:$0xff]
        %v800 = vld [vmem:[%s117 + $0x14b0] sm:$0xff]
        %v801 = vld [vmem:[%s117 + $0x14b8] sm:$0xff]
        %v802 = vld [vmem:[%s117 + $0x14c0] sm:$0xff]
        %v803 = vld [vmem:[%s117 + $0x14c8] sm:$0xff]
        %v804 = vld [vmem:[%s117 + $0x14d0] sm:$0xff]
        %v805 = vld [vmem:[%s117 + $0x14d8] sm:$0xff]
        %v806 = vld [vmem:[%s117 + $0x14e0] sm:$0xff]
        %v807 = vld [vmem:[%s117 + $0x14e8] sm:$0xff]
        %v808 = vld [vmem:[%s117 + $0x14f0] sm:$0xff]
        %v809 = vld [vmem:[%s117 + $0x14f8] sm:$0xff]
        %v810 = vld [vmem:[%s117 + $0x1500] sm:$0xff]
        %v811 = vld [vmem:[%s117 + $0x1508] sm:$0xff]
        %v812 = vld [vmem:[%s117 + $0x1510] sm:$0xff]
        %v813 = vld [vmem:[%s117 + $0x1518] sm:$0xff]
        %v814 = vld [vmem:[%s117 + $0x1520] sm:$0xff]
        %v815 = vld [vmem:[%s117 + $0x1528] sm:$0xff]
        %v816 = vld [vmem:[%s117 + $0x1530] sm:$0xff]
        %v817 = vld [vmem:[%s117 + $0x1538] sm:$0xff]
        %v818 = vld [vmem:[%s117 + $0x1540] sm:$0xff]
        %v819 = vld [vmem:[%s117 + $0x1548] sm:$0xff]
        %v820 = vld [vmem:[%s117 + $0x1550] sm:$0xff]
        %v821 = vld [vmem:[%s117 + $0x1558] sm:$0xff]
        %v822 = vld [vmem:[%s117 + $0x1560] sm:$0xff]
        %v823 = vld [vmem:[%s117 + $0x1568] sm:$0xff]
        %v824 = vld [vmem:[%s117 + $0x1570] sm:$0xff]
        %v825 = vld [vmem:[%s117 + $0x1578] sm:$0xff]
        %v826 = vld [vmem:[%s117 + $0x1580] sm:$0xff]
        %v827 = vld [vmem:[%s117 + $0x1588] sm:$0xff]
        %v828 = vld [vmem:[%s117 + $0x1590] sm:$0xff]
        %v829 = vld [vmem:[%s117 + $0x1598] sm:$0xff]
        %v830 = vld [vmem:[%s117 + $0x15a0] sm:$0xff]
        %v831 = vld [vmem:[%s117 + $0x15a8] sm:$0xff]
        %v832 = vld [vmem:[%s117 + $0x15b0] sm:$0xff]
        %v833 = vld [vmem:[%s117 + $0x15b8] sm:$0xff]
        %v834 = vld [vmem:[%s117 + $0x15c0] sm:$0xff]
        %v835 = vld [vmem:[%s117 + $0x15c8] sm:$0xff]
        %v836 = vld [vmem:[%s117 + $0x15d0] sm:$0xff]
        %v837 = vld [vmem:[%s117 + $0x15d8] sm:$0xff]
        %v838 = vld [vmem:[%s117 + $0x15e0] sm:$0xff]
        %v839 = vld [vmem:[%s117 + $0x15e8] sm:$0xff]
        %v840 = vld [vmem:[%s117 + $0x15f0] sm:$0xff]
        %v841 = vld [vmem:[%s117 + $0x15f8] sm:$0xff]
        %v842 = vld [vmem:[%s117 + $0x1600] sm:$0xff]
        %v843 = vld [vmem:[%s117 + $0x1608] sm:$0xff]
        %v844 = vld [vmem:[%s117 + $0x1610] sm:$0xff]
        %v845 = vld [vmem:[%s117 + $0x1618] sm:$0xff]
        %v846 = vld [vmem:[%s117 + $0x1620] sm:$0xff]
        %v847 = vld [vmem:[%s117 + $0x1628] sm:$0xff]
        %v848 = vld [vmem:[%s117 + $0x1630] sm:$0xff]
        %v849 = vld [vmem:[%s117 + $0x1638] sm:$0xff]
        %v850 = vld [vmem:[%s117 + $0x1640] sm:$0xff]
        %v851 = vld [vmem:[%s117 + $0x1648] sm:$0xff]
        %v852 = vld [vmem:[%s117 + $0x1650] sm:$0xff]
        %v853 = vld [vmem:[%s117 + $0x1658] sm:$0xff]
        %v854 = vld [vmem:[%s117 + $0x1660] sm:$0xff]
        %v855 = vld [vmem:[%s117 + $0x1668] sm:$0xff]
        %v856 = vld [vmem:[%s117 + $0x1670] sm:$0xff]
        %v857 = vld [vmem:[%s117 + $0x1678] sm:$0xff]
        %v858 = vld [vmem:[%s117 + $0x1680] sm:$0xff]
        %v859 = vld [vmem:[%s117 + $0x1688] sm:$0xff]
        %v860 = vld [vmem:[%s117 + $0x1690] sm:$0xff]
        %v861 = vld [vmem:[%s117 + $0x1698] sm:$0xff]
        %v862 = vld [vmem:[%s117 + $0x16a0] sm:$0xff]
        %v863 = vld [vmem:[%s117 + $0x16a8] sm:$0xff]
        %v864 = vld [vmem:[%s117 + $0x16b0] sm:$0xff]
        %v865 = vld [vmem:[%s117 + $0x16b8] sm:$0xff]
        %v866 = vld [vmem:[%s117 + $0x16c0] sm:$0xff]
        %v867 = vld [vmem:[%s117 + $0x16c8] sm:$0xff]
        %v868 = vld [vmem:[%s117 + $0x16d0] sm:$0xff]
        %v869 = vld [vmem:[%s117 + $0x16d8] sm:$0xff]
        %v870 = vld [vmem:[%s117 + $0x16e0] sm:$0xff]
        %v871 = vld [vmem:[%s117 + $0x16e8] sm:$0xff]
        %v872 = vld [vmem:[%s117 + $0x16f0] sm:$0xff]
        %v873 = vld [vmem:[%s117 + $0x16f8] sm:$0xff]
        %v874 = vld [vmem:[%s117 + $0x1700] sm:$0xff]
        %v875 = vld [vmem:[%s117 + $0x1708] sm:$0xff]
        %v876 = vld [vmem:[%s117 + $0x1710] sm:$0xff]
        %v877 = vld [vmem:[%s117 + $0x1718] sm:$0xff]
        %v878 = vld [vmem:[%s117 + $0x1720] sm:$0xff]
        %v879 = vld [vmem:[%s117 + $0x1728] sm:$0xff]
        %v880 = vld [vmem:[%s117 + $0x1730] sm:$0xff]
        %v881 = vld [vmem:[%s117 + $0x1738] sm:$0xff]
        %v882 = vld [vmem:[%s117 + $0x1740] sm:$0xff]
        %v883 = vld [vmem:[%s117 + $0x1748] sm:$0xff]
        %v884 = vld [vmem:[%s117 + $0x1750] sm:$0xff]
        %v885 = vld [vmem:[%s117 + $0x1758] sm:$0xff]
        %v886 = vld [vmem:[%s117 + $0x1760] sm:$0xff]
        %v887 = vld [vmem:[%s117 + $0x1768] sm:$0xff]
        %v888 = vld [vmem:[%s117 + $0x1770] sm:$0xff]
        %v889 = vld [vmem:[%s117 + $0x1778] sm:$0xff]
        %v890 = vld [vmem:[%s117 + $0x1780] sm:$0xff]
        %v891 = vld [vmem:[%s117 + $0x1788] sm:$0xff]
        %v892 = vld [vmem:[%s117 + $0x1790] sm:$0xff]
        %v893 = vld [vmem:[%s117 + $0x1798] sm:$0xff]
        %v894 = vld [vmem:[%s117 + $0x17a0] sm:$0xff]
        %v895 = vld [vmem:[%s117 + $0x17a8] sm:$0xff]
        %v896 = vld [vmem:[%s117 + $0x17b0] sm:$0xff]
        %v897 = vld [vmem:[%s117 + $0x17b8] sm:$0xff]
        %v898 = vld [vmem:[%s117 + $0x17c0] sm:$0xff]
        %v899 = vld [vmem:[%s117 + $0x17c8] sm:$0xff]
        %v900 = vld [vmem:[%s117 + $0x17d0] sm:$0xff]
        %v901 = vld [vmem:[%s117 + $0x17d8] sm:$0xff]
        %v902 = vld [vmem:[%s117 + $0x17e0] sm:$0xff]
        %v903 = vld [vmem:[%s117 + $0x17e8] sm:$0xff]
        %v904 = vld [vmem:[%s117 + $0x17f0] sm:$0xff]
        %v905 = vld [vmem:[%s117 + $0x17f8] sm:$0xff]
        %v906 = vld [vmem:[%s117 + $0x1800] sm:$0xff]
        %v907 = vld [vmem:[%s117 + $0x1808] sm:$0xff]
        %v908 = vld [vmem:[%s117 + $0x1810] sm:$0xff]
        %v909 = vld [vmem:[%s117 + $0x1818] sm:$0xff]
        %v910 = vld [vmem:[%s117 + $0x1820] sm:$0xff]
        %v911 = vld [vmem:[%s117 + $0x1828] sm:$0xff]
        %v912 = vld [vmem:[%s117 + $0x1830] sm:$0xff]
        %v913 = vld [vmem:[%s117 + $0x1838] sm:$0xff]
        %v914 = vld [vmem:[%s117 + $0x1840] sm:$0xff]
        %v915 = vld [vmem:[%s117 + $0x1848] sm:$0xff]
        %v916 = vld [vmem:[%s117 + $0x1850] sm:$0xff]
        %v917 = vld [vmem:[%s117 + $0x1858] sm:$0xff]
        %v918 = vld [vmem:[%s117 + $0x1860] sm:$0xff]
        %v919 = vld [vmem:[%s117 + $0x1868] sm:$0xff]
        %v920 = vld [vmem:[%s117 + $0x1870] sm:$0xff]
        %v921 = vld [vmem:[%s117 + $0x1878] sm:$0xff]
        %v922 = vld [vmem:[%s117 + $0x1880] sm:$0xff]
        %v923 = vld [vmem:[%s117 + $0x1888] sm:$0xff]
        %v924 = vld [vmem:[%s117 + $0x1890] sm:$0xff]
        %v925 = vld [vmem:[%s117 + $0x1898] sm:$0xff]
        %v926 = vld [vmem:[%s117 + $0x18a0] sm:$0xff]
        %v927 = vld [vmem:[%s117 + $0x18a8] sm:$0xff]
        %v928 = vld [vmem:[%s117 + $0x18b0] sm:$0xff]
        %v929 = vld [vmem:[%s117 + $0x18b8] sm:$0xff]
        %v930 = vld [vmem:[%s117 + $0x18c0] sm:$0xff]
        %v931 = vld [vmem:[%s117 + $0x18c8] sm:$0xff]
        %v932 = vld [vmem:[%s117 + $0x18d0] sm:$0xff]
        %v933 = vld [vmem:[%s117 + $0x18d8] sm:$0xff]
        %v934 = vld [vmem:[%s117 + $0x18e0] sm:$0xff]
        %v935 = vld [vmem:[%s117 + $0x18e8] sm:$0xff]
        %v936 = vld [vmem:[%s117 + $0x18f0] sm:$0xff]
        %v937 = vld [vmem:[%s117 + $0x18f8] sm:$0xff]
        %v938 = vld [vmem:[%s117 + $0x1900] sm:$0xff]
        %v939 = vld [vmem:[%s117 + $0x1908] sm:$0xff]
        %v940 = vld [vmem:[%s117 + $0x1910] sm:$0xff]
        %v941 = vld [vmem:[%s117 + $0x1918] sm:$0xff]
        %v942 = vld [vmem:[%s117 + $0x1920] sm:$0xff]
        %v943 = vld [vmem:[%s117 + $0x1928] sm:$0xff]
        %v944 = vld [vmem:[%s117 + $0x1930] sm:$0xff]
        %v945 = vld [vmem:[%s117 + $0x1938] sm:$0xff]
        %v946 = vld [vmem:[%s117 + $0x1940] sm:$0xff]
        %v947 = vld [vmem:[%s117 + $0x1948] sm:$0xff]
        %v948 = vld [vmem:[%s117 + $0x1950] sm:$0xff]
        %v949 = vld [vmem:[%s117 + $0x1958] sm:$0xff]
        %v950 = vld [vmem:[%s117 + $0x1960] sm:$0xff]
        %v951 = vld [vmem:[%s117 + $0x1968] sm:$0xff]
        %v952 = vld [vmem:[%s117 + $0x1970] sm:$0xff]
        %v953 = vld [vmem:[%s117 + $0x1978] sm:$0xff]
        %v954 = vld [vmem:[%s117 + $0x1980] sm:$0xff]
        %v955 = vld [vmem:[%s117 + $0x1988] sm:$0xff]
        %v956 = vld [vmem:[%s117 + $0x1990] sm:$0xff]
        %v957 = vld [vmem:[%s117 + $0x1998] sm:$0xff]
        %v958 = vld [vmem:[%s117 + $0x19a0] sm:$0xff]
        %v959 = vld [vmem:[%s117 + $0x19a8] sm:$0xff]
        %v960 = vld [vmem:[%s117 + $0x19b0] sm:$0xff]
        %v961 = vld [vmem:[%s117 + $0x19b8] sm:$0xff]
        %v962 = vld [vmem:[%s117 + $0x19c0] sm:$0xff]
        %v963 = vld [vmem:[%s117 + $0x19c8] sm:$0xff]
        %v964 = vld [vmem:[%s117 + $0x19d0] sm:$0xff]
        %v965 = vld [vmem:[%s117 + $0x19d8] sm:$0xff]
        %v966 = vld [vmem:[%s117 + $0x19e0] sm:$0xff]
        %v967 = vld [vmem:[%s117 + $0x19e8] sm:$0xff]
        %v968 = vld [vmem:[%s117 + $0x19f0] sm:$0xff]
        %v969 = vld [vmem:[%s117 + $0x19f8] sm:$0xff]
        %v970 = vld [vmem:[%s117 + $0x1a00] sm:$0xff]
        %v971 = vld [vmem:[%s117 + $0x1a08] sm:$0xff]
        %v972 = vld [vmem:[%s117 + $0x1a10] sm:$0xff]
        %v973 = vld [vmem:[%s117 + $0x1a18] sm:$0xff]
        %v974 = vld [vmem:[%s117 + $0x1a20] sm:$0xff]
        %v975 = vld [vmem:[%s117 + $0x1a28] sm:$0xff]
        %v976 = vld [vmem:[%s117 + $0x1a30] sm:$0xff]
        %v977 = vld [vmem:[%s117 + $0x1a38] sm:$0xff]
        %v978 = vld [vmem:[%s117 + $0x1a40] sm:$0xff]
        %v979 = vld [vmem:[%s117 + $0x1a48] sm:$0xff]
        %v980 = vld [vmem:[%s117 + $0x1a50] sm:$0xff]
        %v981 = vld [vmem:[%s117 + $0x1a58] sm:$0xff]
        %v982 = vld [vmem:[%s117 + $0x1a60] sm:$0xff]
        %v983 = vld [vmem:[%s117 + $0x1a68] sm:$0xff]
        %v984 = vld [vmem:[%s117 + $0x1a70] sm:$0xff]
        %v985 = vld [vmem:[%s117 + $0x1a78] sm:$0xff]
        %v986 = vld [vmem:[%s117 + $0x1a80] sm:$0xff]
        %v987 = vld [vmem:[%s117 + $0x1a88] sm:$0xff]
        %v988 = vld [vmem:[%s117 + $0x1a90] sm:$0xff]
        %v989 = vld [vmem:[%s117 + $0x1a98] sm:$0xff]
        %v990 = vld [vmem:[%s117 + $0x1aa0] sm:$0xff]
        %v991 = vld [vmem:[%s117 + $0x1aa8] sm:$0xff]
        %v992 = vld [vmem:[%s117 + $0x1ab0] sm:$0xff]
        %v993 = vld [vmem:[%s117 + $0x1ab8] sm:$0xff]
        %v994 = vld [vmem:[%s117 + $0x1ac0] sm:$0xff]
        %v995 = vld [vmem:[%s117 + $0x1ac8] sm:$0xff]
        %v996 = vld [vmem:[%s117 + $0x1ad0] sm:$0xff]
        %v997 = vld [vmem:[%s117 + $0x1ad8] sm:$0xff]
        %v998 = vld [vmem:[%s117 + $0x1ae0] sm:$0xff]
        %v999 = vld [vmem:[%s117 + $0x1ae8] sm:$0xff]
        %v1000 = vld [vmem:[%s117 + $0x1af0] sm:$0xff]
        %v1001 = vld [vmem:[%s117 + $0x1af8] sm:$0xff]
        %v1002 = vld [vmem:[%s117 + $0x1b00] sm:$0xff]
        %v1003 = vld [vmem:[%s117 + $0x1b08] sm:$0xff]
        %v1004 = vld [vmem:[%s117 + $0x1b10] sm:$0xff]
        %v1005 = vld [vmem:[%s117 + $0x1b18] sm:$0xff]
        %v1006 = vld [vmem:[%s117 + $0x1b20] sm:$0xff]
        %v1007 = vld [vmem:[%s117 + $0x1b28] sm:$0xff]
        %v1008 = vld [vmem:[%s117 + $0x1b30] sm:$0xff]
        %v1009 = vld [vmem:[%s117 + $0x1b38] sm:$0xff]
        %v1010 = vld [vmem:[%s117 + $0x1b40] sm:$0xff]
        %v1011 = vld [vmem:[%s117 + $0x1b48] sm:$0xff]
        %v1012 = vld [vmem:[%s117 + $0x1b50] sm:$0xff]
        %v1013 = vld [vmem:[%s117 + $0x1b58] sm:$0xff]
        %v1014 = vld [vmem:[%s117 + $0x1b60] sm:$0xff]
        %v1015 = vld [vmem:[%s117 + $0x1b68] sm:$0xff]
        %v1016 = vld [vmem:[%s117 + $0x1b70] sm:$0xff]
        %v1017 = vld [vmem:[%s117 + $0x1b78] sm:$0xff]
        %v1018 = vld [vmem:[%s117 + $0x1b80] sm:$0xff]
        %v1019 = vld [vmem:[%s117 + $0x1b88] sm:$0xff]
        %v1020 = vld [vmem:[%s117 + $0x1b90] sm:$0xff]
        %v1021 = vld [vmem:[%s117 + $0x1b98] sm:$0xff]
        %v1022 = vld [vmem:[%s117 + $0x1ba0] sm:$0xff]
        %v1023 = vld [vmem:[%s117 + $0x1ba8] sm:$0xff]
        %v1024 = vld [vmem:[%s117 + $0x1bb0] sm:$0xff]
        %v1025 = vld [vmem:[%s117 + $0x1bb8] sm:$0xff]
        %v1026 = vld [vmem:[%s117 + $0x1bc0] sm:$0xff]
        %v1027 = vld [vmem:[%s117 + $0x1bc8] sm:$0xff]
        %v1028 = vld [vmem:[%s117 + $0x1bd0] sm:$0xff]
        %v1029 = vld [vmem:[%s117 + $0x1bd8] sm:$0xff]
        %v1030 = vld [vmem:[%s117 + $0x1be0] sm:$0xff]
        %v1031 = vld [vmem:[%s117 + $0x1be8] sm:$0xff]
        %v1032 = vld [vmem:[%s117 + $0x1bf0] sm:$0xff]
        %v1033 = vld [vmem:[%s117 + $0x1bf8] sm:$0xff]
        %v1034 = vld [vmem:[%s117 + $0x1c00] sm:$0xff]
        %v1035 = vld [vmem:[%s117 + $0x1c08] sm:$0xff]
        %v1036 = vld [vmem:[%s117 + $0x1c10] sm:$0xff]
        %v1037 = vld [vmem:[%s117 + $0x1c18] sm:$0xff]
        %v1038 = vld [vmem:[%s117 + $0x1c20] sm:$0xff]
        %v1039 = vld [vmem:[%s117 + $0x1c28] sm:$0xff]
        %v1040 = vld [vmem:[%s117 + $0x1c30] sm:$0xff]
        %v1041 = vld [vmem:[%s117 + $0x1c38] sm:$0xff]
        %v1042 = vld [vmem:[%s117 + $0x1c40] sm:$0xff]
        %v1043 = vld [vmem:[%s117 + $0x1c48] sm:$0xff]
        %v1044 = vld [vmem:[%s117 + $0x1c50] sm:$0xff]
        %v1045 = vld [vmem:[%s117 + $0x1c58] sm:$0xff]
        %v1046 = vld [vmem:[%s117 + $0x1c60] sm:$0xff]
        %v1047 = vld [vmem:[%s117 + $0x1c68] sm:$0xff]
        %v1048 = vld [vmem:[%s117 + $0x1c70] sm:$0xff]
        %v1049 = vld [vmem:[%s117 + $0x1c78] sm:$0xff]
        %v1050 = vld [vmem:[%s117 + $0x1c80] sm:$0xff]
        %v1051 = vld [vmem:[%s117 + $0x1c88] sm:$0xff]
        %v1052 = vld [vmem:[%s117 + $0x1c90] sm:$0xff]
        %v1053 = vld [vmem:[%s117 + $0x1c98] sm:$0xff]
        %v1054 = vld [vmem:[%s117 + $0x1ca0] sm:$0xff]
        %v1055 = vld [vmem:[%s117 + $0x1ca8] sm:$0xff]
        %v1056 = vld [vmem:[%s117 + $0x1cb0] sm:$0xff]
        %v1057 = vld [vmem:[%s117 + $0x1cb8] sm:$0xff]
        %v1058 = vld [vmem:[%s117 + $0x1cc0] sm:$0xff]
        %v1059 = vld [vmem:[%s117 + $0x1cc8] sm:$0xff]
        %v1060 = vld [vmem:[%s117 + $0x1cd0] sm:$0xff]
        %v1061 = vld [vmem:[%s117 + $0x1cd8] sm:$0xff]
        %v1062 = vld [vmem:[%s117 + $0x1ce0] sm:$0xff]
        %v1063 = vld [vmem:[%s117 + $0x1ce8] sm:$0xff]
        %v1064 = vld [vmem:[%s117 + $0x1cf0] sm:$0xff]
        %v1065 = vld [vmem:[%s117 + $0x1cf8] sm:$0xff]
        %v1066 = vld [vmem:[%s117 + $0x1d00] sm:$0xff]
        %v1067 = vld [vmem:[%s117 + $0x1d08] sm:$0xff]
        %v1068 = vld [vmem:[%s117 + $0x1d10] sm:$0xff]
        %v1069 = vld [vmem:[%s117 + $0x1d18] sm:$0xff]
        %v1070 = vld [vmem:[%s117 + $0x1d20] sm:$0xff]
        %v1071 = vld [vmem:[%s117 + $0x1d28] sm:$0xff]
        %v1072 = vld [vmem:[%s117 + $0x1d30] sm:$0xff]
        %v1073 = vld [vmem:[%s117 + $0x1d38] sm:$0xff]
        %v1074 = vld [vmem:[%s117 + $0x1d40] sm:$0xff]
        %v1075 = vld [vmem:[%s117 + $0x1d48] sm:$0xff]
        %v1076 = vld [vmem:[%s117 + $0x1d50] sm:$0xff]
        %v1077 = vld [vmem:[%s117 + $0x1d58] sm:$0xff]
        %v1078 = vld [vmem:[%s117 + $0x1d60] sm:$0xff]
        %v1079 = vld [vmem:[%s117 + $0x1d68] sm:$0xff]
        %v1080 = vld [vmem:[%s117 + $0x1d70] sm:$0xff]
        %v1081 = vld [vmem:[%s117 + $0x1d78] sm:$0xff]
        %v1082 = vld [vmem:[%s117 + $0x1d80] sm:$0xff]
        %v1083 = vld [vmem:[%s117 + $0x1d88] sm:$0xff]
        %v1084 = vld [vmem:[%s117 + $0x1d90] sm:$0xff]
        %v1085 = vld [vmem:[%s117 + $0x1d98] sm:$0xff]
        %v1086 = vld [vmem:[%s117 + $0x1da0] sm:$0xff]
        %v1087 = vld [vmem:[%s117 + $0x1da8] sm:$0xff]
        %v1088 = vld [vmem:[%s117 + $0x1db0] sm:$0xff]
        %v1089 = vld [vmem:[%s117 + $0x1db8] sm:$0xff]
        %v1090 = vld [vmem:[%s117 + $0x1dc0] sm:$0xff]
        %v1091 = vld [vmem:[%s117 + $0x1dc8] sm:$0xff]
        %v1092 = vld [vmem:[%s117 + $0x1dd0] sm:$0xff]
        %v1093 = vld [vmem:[%s117 + $0x1dd8] sm:$0xff]
        %v1094 = vld [vmem:[%s117 + $0x1de0] sm:$0xff]
        %v1095 = vld [vmem:[%s117 + $0x1de8] sm:$0xff]
        %v1096 = vld [vmem:[%s117 + $0x1df0] sm:$0xff]
        %v1097 = vld [vmem:[%s117 + $0x1df8] sm:$0xff]
        %v1098 = vld [vmem:[%s117 + $0x1e00] sm:$0xff]
        %v1099 = vld [vmem:[%s117 + $0x1e08] sm:$0xff]
        %v1100 = vld [vmem:[%s117 + $0x1e10] sm:$0xff]
        %v1101 = vld [vmem:[%s117 + $0x1e18] sm:$0xff]
        %v1102 = vld [vmem:[%s117 + $0x1e20] sm:$0xff]
        %v1103 = vld [vmem:[%s117 + $0x1e28] sm:$0xff]
        %v1104 = vld [vmem:[%s117 + $0x1e30] sm:$0xff]
        %v1105 = vld [vmem:[%s117 + $0x1e38] sm:$0xff]
        %v1106 = vld [vmem:[%s117 + $0x1e40] sm:$0xff]
        %v1107 = vld [vmem:[%s117 + $0x1e48] sm:$0xff]
        %v1108 = vld [vmem:[%s117 + $0x1e50] sm:$0xff]
        %v1109 = vld [vmem:[%s117 + $0x1e58] sm:$0xff]
        %v1110 = vld [vmem:[%s117 + $0x1e60] sm:$0xff]
        %v1111 = vld [vmem:[%s117 + $0x1e68] sm:$0xff]
        %v1112 = vld [vmem:[%s117 + $0x1e70] sm:$0xff]
        %v1113 = vld [vmem:[%s117 + $0x1e78] sm:$0xff]
        %v1114 = vld [vmem:[%s117 + $0x1e80] sm:$0xff]
        %v1115 = vld [vmem:[%s117 + $0x1e88] sm:$0xff]
        %v1116 = vld [vmem:[%s117 + $0x1e90] sm:$0xff]
        %v1117 = vld [vmem:[%s117 + $0x1e98] sm:$0xff]
        %v1118 = vld [vmem:[%s117 + $0x1ea0] sm:$0xff]
        %v1119 = vld [vmem:[%s117 + $0x1ea8] sm:$0xff]
        %v1120 = vld [vmem:[%s117 + $0x1eb0] sm:$0xff]
        %v1121 = vld [vmem:[%s117 + $0x1eb8] sm:$0xff]
        %v1122 = vld [vmem:[%s117 + $0x1ec0] sm:$0xff]
        %v1123 = vld [vmem:[%s117 + $0x1ec8] sm:$0xff]
        %v1124 = vld [vmem:[%s117 + $0x1ed0] sm:$0xff]
        %v1125 = vld [vmem:[%s117 + $0x1ed8] sm:$0xff]
        %v1126 = vld [vmem:[%s117 + $0x1ee0] sm:$0xff]
        %v1127 = vld [vmem:[%s117 + $0x1ee8] sm:$0xff]
        %v1128 = vld [vmem:[%s117 + $0x1ef0] sm:$0xff]
        %v1129 = vld [vmem:[%s117 + $0x1ef8] sm:$0xff]
        %v1130 = vld [vmem:[%s117 + $0x1f00] sm:$0xff]
        %v1131 = vld [vmem:[%s117 + $0x1f08] sm:$0xff]
        %v1132 = vld [vmem:[%s117 + $0x1f10] sm:$0xff]
        %v1133 = vld [vmem:[%s117 + $0x1f18] sm:$0xff]
        %v1134 = vld [vmem:[%s117 + $0x1f20] sm:$0xff]
        %v1135 = vld [vmem:[%s117 + $0x1f28] sm:$0xff]
        %v1136 = vld [vmem:[%s117 + $0x1f30] sm:$0xff]
        %v1137 = vld [vmem:[%s117 + $0x1f38] sm:$0xff]
        %v1138 = vld [vmem:[%s117 + $0x1f40] sm:$0xff]
        %v1139 = vld [vmem:[%s117 + $0x1f48] sm:$0xff]
        %v1140 = vld [vmem:[%s117 + $0x1f50] sm:$0xff]
        %v1141 = vld [vmem:[%s117 + $0x1f58] sm:$0xff]
        %v1142 = vld [vmem:[%s117 + $0x1f60] sm:$0xff]
        %v1143 = vld [vmem:[%s117 + $0x1f68] sm:$0xff]
        %v1144 = vld [vmem:[%s117 + $0x1f70] sm:$0xff]
        %v1145 = vld [vmem:[%s117 + $0x1f78] sm:$0xff]
        %v1146 = vld [vmem:[%s117 + $0x1f80] sm:$0xff]
        %v1147 = vld [vmem:[%s117 + $0x1f88] sm:$0xff]
        %v1148 = vld [vmem:[%s117 + $0x1f90] sm:$0xff]
        %v1149 = vld [vmem:[%s117 + $0x1f98] sm:$0xff]
        %v1150 = vld [vmem:[%s117 + $0x1fa0] sm:$0xff]
        %v1151 = vld [vmem:[%s117 + $0x1fa8] sm:$0xff]
        %v1152 = vld [vmem:[%s117 + $0x1fb0] sm:$0xff]
        %v1153 = vld [vmem:[%s117 + $0x1fb8] sm:$0xff]
        %v1154 = vld [vmem:[%s117 + $0x1fc0] sm:$0xff]
        %v1155 = vld [vmem:[%s117 + $0x1fc8] sm:$0xff]
        %v1156 = vld [vmem:[%s117 + $0x1fd0] sm:$0xff]
        %v1157 = vld [vmem:[%s117 + $0x1fd8] sm:$0xff]
        %v1158 = vld [vmem:[%s117 + $0x1fe0] sm:$0xff]
        %v1159 = vld [vmem:[%s117 + $0x1fe8] sm:$0xff]
        %v1160 = vld [vmem:[%s117 + $0x1ff0] sm:$0xff]
        %v1161 = vld [vmem:[%s117 + $0x1ff8] sm:$0xff]
        %vm1162 = vcmp.gt.f32.partialorder %v138, 0.0
        %vm1163 = vcmp.gt.f32.partialorder %v139, 0.0
        %vm1164 = vcmp.gt.f32.partialorder %v140, 0.0
        %vm1165 = vcmp.gt.f32.partialorder %v141, 0.0
        %vm1166 = vcmp.gt.f32.partialorder %v142, 0.0
        %vm1167 = vcmp.gt.f32.partialorder %v143, 0.0
        %vm1168 = vcmp.gt.f32.partialorder %v144, 0.0
        %vm1169 = vcmp.gt.f32.partialorder %v145, 0.0
        %vm1170 = vcmp.gt.f32.partialorder %v146, 0.0
        %vm1171 = vcmp.gt.f32.partialorder %v147, 0.0
        %vm1172 = vcmp.gt.f32.partialorder %v148, 0.0
        %vm1173 = vcmp.gt.f32.partialorder %v149, 0.0
        %vm1174 = vcmp.gt.f32.partialorder %v150, 0.0
        %vm1175 = vcmp.gt.f32.partialorder %v151, 0.0
        %vm1176 = vcmp.gt.f32.partialorder %v152, 0.0
        %vm1177 = vcmp.gt.f32.partialorder %v153, 0.0
        %vm1178 = vcmp.gt.f32.partialorder %v154, 0.0
        %vm1179 = vcmp.gt.f32.partialorder %v155, 0.0
        %vm1180 = vcmp.gt.f32.partialorder %v156, 0.0
        %vm1181 = vcmp.gt.f32.partialorder %v157, 0.0
        %vm1182 = vcmp.gt.f32.partialorder %v158, 0.0
        %vm1183 = vcmp.gt.f32.partialorder %v159, 0.0
        %vm1184 = vcmp.gt.f32.partialorder %v160, 0.0
        %vm1185 = vcmp.gt.f32.partialorder %v161, 0.0
        %vm1186 = vcmp.gt.f32.partialorder %v162, 0.0
        %vm1187 = vcmp.gt.f32.partialorder %v163, 0.0
        %vm1188 = vcmp.gt.f32.partialorder %v164, 0.0
        %vm1189 = vcmp.gt.f32.partialorder %v165, 0.0
        %vm1190 = vcmp.gt.f32.partialorder %v166, 0.0
        %vm1191 = vcmp.gt.f32.partialorder %v167, 0.0
        %vm1192 = vcmp.gt.f32.partialorder %v168, 0.0
        %vm1193 = vcmp.gt.f32.partialorder %v169, 0.0
        %vm1194 = vcmp.gt.f32.partialorder %v170, 0.0
        %vm1195 = vcmp.gt.f32.partialorder %v171, 0.0
        %vm1196 = vcmp.gt.f32.partialorder %v172, 0.0
        %vm1197 = vcmp.gt.f32.partialorder %v173, 0.0
        %vm1198 = vcmp.gt.f32.partialorder %v174, 0.0
        %vm1199 = vcmp.gt.f32.partialorder %v175, 0.0
        %vm1200 = vcmp.gt.f32.partialorder %v176, 0.0
        %vm1201 = vcmp.gt.f32.partialorder %v177, 0.0
        %vm1202 = vcmp.gt.f32.partialorder %v178, 0.0
        %vm1203 = vcmp.gt.f32.partialorder %v179, 0.0
        %vm1204 = vcmp.gt.f32.partialorder %v180, 0.0
        %vm1205 = vcmp.gt.f32.partialorder %v181, 0.0
        %vm1206 = vcmp.gt.f32.partialorder %v182, 0.0
        %vm1207 = vcmp.gt.f32.partialorder %v183, 0.0
        %vm1208 = vcmp.gt.f32.partialorder %v184, 0.0
        %vm1209 = vcmp.gt.f32.partialorder %v185, 0.0
        %vm1210 = vcmp.gt.f32.partialorder %v186, 0.0
        %vm1211 = vcmp.gt.f32.partialorder %v187, 0.0
        %vm1212 = vcmp.gt.f32.partialorder %v188, 0.0
        %vm1213 = vcmp.gt.f32.partialorder %v189, 0.0
        %vm1214 = vcmp.gt.f32.partialorder %v190, 0.0
        %vm1215 = vcmp.gt.f32.partialorder %v191, 0.0
        %vm1216 = vcmp.gt.f32.partialorder %v192, 0.0
        %vm1217 = vcmp.gt.f32.partialorder %v193, 0.0
        %vm1218 = vcmp.gt.f32.partialorder %v194, 0.0
        %vm1219 = vcmp.gt.f32.partialorder %v195, 0.0
        %vm1220 = vcmp.gt.f32.partialorder %v196, 0.0
        %vm1221 = vcmp.gt.f32.partialorder %v197, 0.0
        %vm1222 = vcmp.gt.f32.partialorder %v198, 0.0
        %vm1223 = vcmp.gt.f32.partialorder %v199, 0.0
        %vm1224 = vcmp.gt.f32.partialorder %v200, 0.0
        %vm1225 = vcmp.gt.f32.partialorder %v201, 0.0
        %vm1226 = vcmp.gt.f32.partialorder %v202, 0.0
        %vm1227 = vcmp.gt.f32.partialorder %v203, 0.0
        %vm1228 = vcmp.gt.f32.partialorder %v204, 0.0
        %vm1229 = vcmp.gt.f32.partialorder %v205, 0.0
        %vm1230 = vcmp.gt.f32.partialorder %v206, 0.0
        %vm1231 = vcmp.gt.f32.partialorder %v207, 0.0
        %vm1232 = vcmp.gt.f32.partialorder %v208, 0.0
        %vm1233 = vcmp.gt.f32.partialorder %v209, 0.0
        %vm1234 = vcmp.gt.f32.partialorder %v210, 0.0
        %vm1235 = vcmp.gt.f32.partialorder %v211, 0.0
        %vm1236 = vcmp.gt.f32.partialorder %v212, 0.0
        %vm1237 = vcmp.gt.f32.partialorder %v213, 0.0
        %vm1238 = vcmp.gt.f32.partialorder %v214, 0.0
        %vm1239 = vcmp.gt.f32.partialorder %v215, 0.0
        %vm1240 = vcmp.gt.f32.partialorder %v216, 0.0
        %vm1241 = vcmp.gt.f32.partialorder %v217, 0.0
        %vm1242 = vcmp.gt.f32.partialorder %v218, 0.0
        %vm1243 = vcmp.gt.f32.partialorder %v219, 0.0
        %vm1244 = vcmp.gt.f32.partialorder %v220, 0.0
        %vm1245 = vcmp.gt.f32.partialorder %v221, 0.0
        %vm1246 = vcmp.gt.f32.partialorder %v222, 0.0
        %vm1247 = vcmp.gt.f32.partialorder %v223, 0.0
        %vm1248 = vcmp.gt.f32.partialorder %v224, 0.0
        %vm1249 = vcmp.gt.f32.partialorder %v225, 0.0
        %vm1250 = vcmp.gt.f32.partialorder %v226, 0.0
        %vm1251 = vcmp.gt.f32.partialorder %v227, 0.0
        %vm1252 = vcmp.gt.f32.partialorder %v228, 0.0
        %vm1253 = vcmp.gt.f32.partialorder %v229, 0.0
        %vm1254 = vcmp.gt.f32.partialorder %v230, 0.0
        %vm1255 = vcmp.gt.f32.partialorder %v231, 0.0
        %vm1256 = vcmp.gt.f32.partialorder %v232, 0.0
        %vm1257 = vcmp.gt.f32.partialorder %v233, 0.0
        %vm1258 = vcmp.gt.f32.partialorder %v234, 0.0
        %vm1259 = vcmp.gt.f32.partialorder %v235, 0.0
        %vm1260 = vcmp.gt.f32.partialorder %v236, 0.0
        %vm1261 = vcmp.gt.f32.partialorder %v237, 0.0
        %vm1262 = vcmp.gt.f32.partialorder %v238, 0.0
        %vm1263 = vcmp.gt.f32.partialorder %v239, 0.0
        %vm1264 = vcmp.gt.f32.partialorder %v240, 0.0
        %vm1265 = vcmp.gt.f32.partialorder %v241, 0.0
        %vm1266 = vcmp.gt.f32.partialorder %v242, 0.0
        %vm1267 = vcmp.gt.f32.partialorder %v243, 0.0
        %vm1268 = vcmp.gt.f32.partialorder %v244, 0.0
        %vm1269 = vcmp.gt.f32.partialorder %v245, 0.0
        %vm1270 = vcmp.gt.f32.partialorder %v246, 0.0
        %vm1271 = vcmp.gt.f32.partialorder %v247, 0.0
        %vm1272 = vcmp.gt.f32.partialorder %v248, 0.0
        %vm1273 = vcmp.gt.f32.partialorder %v249, 0.0
        %vm1274 = vcmp.gt.f32.partialorder %v250, 0.0
        %vm1275 = vcmp.gt.f32.partialorder %v251, 0.0
        %vm1276 = vcmp.gt.f32.partialorder %v252, 0.0
        %vm1277 = vcmp.gt.f32.partialorder %v253, 0.0
        %vm1278 = vcmp.gt.f32.partialorder %v254, 0.0
        %vm1279 = vcmp.gt.f32.partialorder %v255, 0.0
        %vm1280 = vcmp.gt.f32.partialorder %v256, 0.0
        %vm1281 = vcmp.gt.f32.partialorder %v257, 0.0
        %vm1282 = vcmp.gt.f32.partialorder %v258, 0.0
        %vm1283 = vcmp.gt.f32.partialorder %v259, 0.0
        %vm1284 = vcmp.gt.f32.partialorder %v260, 0.0
        %vm1285 = vcmp.gt.f32.partialorder %v261, 0.0
        %vm1286 = vcmp.gt.f32.partialorder %v262, 0.0
        %vm1287 = vcmp.gt.f32.partialorder %v263, 0.0
        %vm1288 = vcmp.gt.f32.partialorder %v264, 0.0
        %vm1289 = vcmp.gt.f32.partialorder %v265, 0.0
        %vm1290 = vcmp.gt.f32.partialorder %v266, 0.0
        %vm1291 = vcmp.gt.f32.partialorder %v267, 0.0
        %vm1292 = vcmp.gt.f32.partialorder %v268, 0.0
        %vm1293 = vcmp.gt.f32.partialorder %v269, 0.0
        %vm1294 = vcmp.gt.f32.partialorder %v270, 0.0
        %vm1295 = vcmp.gt.f32.partialorder %v271, 0.0
        %vm1296 = vcmp.gt.f32.partialorder %v272, 0.0
        %vm1297 = vcmp.gt.f32.partialorder %v273, 0.0
        %vm1298 = vcmp.gt.f32.partialorder %v274, 0.0
        %vm1299 = vcmp.gt.f32.partialorder %v275, 0.0
        %vm1300 = vcmp.gt.f32.partialorder %v276, 0.0
        %vm1301 = vcmp.gt.f32.partialorder %v277, 0.0
        %vm1302 = vcmp.gt.f32.partialorder %v278, 0.0
        %vm1303 = vcmp.gt.f32.partialorder %v279, 0.0
        %vm1304 = vcmp.gt.f32.partialorder %v280, 0.0
        %vm1305 = vcmp.gt.f32.partialorder %v281, 0.0
        %vm1306 = vcmp.gt.f32.partialorder %v282, 0.0
        %vm1307 = vcmp.gt.f32.partialorder %v283, 0.0
        %vm1308 = vcmp.gt.f32.partialorder %v284, 0.0
        %vm1309 = vcmp.gt.f32.partialorder %v285, 0.0
        %vm1310 = vcmp.gt.f32.partialorder %v286, 0.0
        %vm1311 = vcmp.gt.f32.partialorder %v287, 0.0
        %vm1312 = vcmp.gt.f32.partialorder %v288, 0.0
        %vm1313 = vcmp.gt.f32.partialorder %v289, 0.0
        %vm1314 = vcmp.gt.f32.partialorder %v290, 0.0
        %vm1315 = vcmp.gt.f32.partialorder %v291, 0.0
        %vm1316 = vcmp.gt.f32.partialorder %v292, 0.0
        %vm1317 = vcmp.gt.f32.partialorder %v293, 0.0
        %vm1318 = vcmp.gt.f32.partialorder %v294, 0.0
        %vm1319 = vcmp.gt.f32.partialorder %v295, 0.0
        %vm1320 = vcmp.gt.f32.partialorder %v296, 0.0
        %vm1321 = vcmp.gt.f32.partialorder %v297, 0.0
        %vm1322 = vcmp.gt.f32.partialorder %v298, 0.0
        %vm1323 = vcmp.gt.f32.partialorder %v299, 0.0
        %vm1324 = vcmp.gt.f32.partialorder %v300, 0.0
        %vm1325 = vcmp.gt.f32.partialorder %v301, 0.0
        %vm1326 = vcmp.gt.f32.partialorder %v302, 0.0
        %vm1327 = vcmp.gt.f32.partialorder %v303, 0.0
        %vm1328 = vcmp.gt.f32.partialorder %v304, 0.0
        %vm1329 = vcmp.gt.f32.partialorder %v305, 0.0
        %vm1330 = vcmp.gt.f32.partialorder %v306, 0.0
        %vm1331 = vcmp.gt.f32.partialorder %v307, 0.0
        %vm1332 = vcmp.gt.f32.partialorder %v308, 0.0
        %vm1333 = vcmp.gt.f32.partialorder %v309, 0.0
        %vm1334 = vcmp.gt.f32.partialorder %v310, 0.0
        %vm1335 = vcmp.gt.f32.partialorder %v311, 0.0
        %vm1336 = vcmp.gt.f32.partialorder %v312, 0.0
        %vm1337 = vcmp.gt.f32.partialorder %v313, 0.0
        %vm1338 = vcmp.gt.f32.partialorder %v314, 0.0
        %vm1339 = vcmp.gt.f32.partialorder %v315, 0.0
        %vm1340 = vcmp.gt.f32.partialorder %v316, 0.0
        %vm1341 = vcmp.gt.f32.partialorder %v317, 0.0
        %vm1342 = vcmp.gt.f32.partialorder %v318, 0.0
        %vm1343 = vcmp.gt.f32.partialorder %v319, 0.0
        %vm1344 = vcmp.gt.f32.partialorder %v320, 0.0
        %vm1345 = vcmp.gt.f32.partialorder %v321, 0.0
        %vm1346 = vcmp.gt.f32.partialorder %v322, 0.0
        %vm1347 = vcmp.gt.f32.partialorder %v323, 0.0
        %vm1348 = vcmp.gt.f32.partialorder %v324, 0.0
        %vm1349 = vcmp.gt.f32.partialorder %v325, 0.0
        %vm1350 = vcmp.gt.f32.partialorder %v326, 0.0
        %vm1351 = vcmp.gt.f32.partialorder %v327, 0.0
        %vm1352 = vcmp.gt.f32.partialorder %v328, 0.0
        %vm1353 = vcmp.gt.f32.partialorder %v329, 0.0
        %vm1354 = vcmp.gt.f32.partialorder %v330, 0.0
        %vm1355 = vcmp.gt.f32.partialorder %v331, 0.0
        %vm1356 = vcmp.gt.f32.partialorder %v332, 0.0
        %vm1357 = vcmp.gt.f32.partialorder %v333, 0.0
        %vm1358 = vcmp.gt.f32.partialorder %v334, 0.0
        %vm1359 = vcmp.gt.f32.partialorder %v335, 0.0
        %vm1360 = vcmp.gt.f32.partialorder %v336, 0.0
        %vm1361 = vcmp.gt.f32.partialorder %v337, 0.0
        %vm1362 = vcmp.gt.f32.partialorder %v338, 0.0
        %vm1363 = vcmp.gt.f32.partialorder %v339, 0.0
        %vm1364 = vcmp.gt.f32.partialorder %v340, 0.0
        %vm1365 = vcmp.gt.f32.partialorder %v341, 0.0
        %vm1366 = vcmp.gt.f32.partialorder %v342, 0.0
        %vm1367 = vcmp.gt.f32.partialorder %v343, 0.0
        %vm1368 = vcmp.gt.f32.partialorder %v344, 0.0
        %vm1369 = vcmp.gt.f32.partialorder %v345, 0.0
        %vm1370 = vcmp.gt.f32.partialorder %v346, 0.0
        %vm1371 = vcmp.gt.f32.partialorder %v347, 0.0
        %vm1372 = vcmp.gt.f32.partialorder %v348, 0.0
        %vm1373 = vcmp.gt.f32.partialorder %v349, 0.0
        %vm1374 = vcmp.gt.f32.partialorder %v350, 0.0
        %vm1375 = vcmp.gt.f32.partialorder %v351, 0.0
        %vm1376 = vcmp.gt.f32.partialorder %v352, 0.0
        %vm1377 = vcmp.gt.f32.partialorder %v353, 0.0
        %vm1378 = vcmp.gt.f32.partialorder %v354, 0.0
        %vm1379 = vcmp.gt.f32.partialorder %v355, 0.0
        %vm1380 = vcmp.gt.f32.partialorder %v356, 0.0
        %vm1381 = vcmp.gt.f32.partialorder %v357, 0.0
        %vm1382 = vcmp.gt.f32.partialorder %v358, 0.0
        %vm1383 = vcmp.gt.f32.partialorder %v359, 0.0
        %vm1384 = vcmp.gt.f32.partialorder %v360, 0.0
        %vm1385 = vcmp.gt.f32.partialorder %v361, 0.0
        %vm1386 = vcmp.gt.f32.partialorder %v362, 0.0
        %vm1387 = vcmp.gt.f32.partialorder %v363, 0.0
        %vm1388 = vcmp.gt.f32.partialorder %v364, 0.0
        %vm1389 = vcmp.gt.f32.partialorder %v365, 0.0
        %vm1390 = vcmp.gt.f32.partialorder %v366, 0.0
        %vm1391 = vcmp.gt.f32.partialorder %v367, 0.0
        %vm1392 = vcmp.gt.f32.partialorder %v368, 0.0
        %vm1393 = vcmp.gt.f32.partialorder %v369, 0.0
        %vm1394 = vcmp.gt.f32.partialorder %v370, 0.0
        %vm1395 = vcmp.gt.f32.partialorder %v371, 0.0
        %vm1396 = vcmp.gt.f32.partialorder %v372, 0.0
        %vm1397 = vcmp.gt.f32.partialorder %v373, 0.0
        %vm1398 = vcmp.gt.f32.partialorder %v374, 0.0
        %vm1399 = vcmp.gt.f32.partialorder %v375, 0.0
        %vm1400 = vcmp.gt.f32.partialorder %v376, 0.0
        %vm1401 = vcmp.gt.f32.partialorder %v377, 0.0
        %vm1402 = vcmp.gt.f32.partialorder %v378, 0.0
        %vm1403 = vcmp.gt.f32.partialorder %v379, 0.0
        %vm1404 = vcmp.gt.f32.partialorder %v380, 0.0
        %vm1405 = vcmp.gt.f32.partialorder %v381, 0.0
        %vm1406 = vcmp.gt.f32.partialorder %v382, 0.0
        %vm1407 = vcmp.gt.f32.partialorder %v383, 0.0
        %vm1408 = vcmp.gt.f32.partialorder %v384, 0.0
        %vm1409 = vcmp.gt.f32.partialorder %v385, 0.0
        %vm1410 = vcmp.gt.f32.partialorder %v386, 0.0
        %vm1411 = vcmp.gt.f32.partialorder %v387, 0.0
        %vm1412 = vcmp.gt.f32.partialorder %v388, 0.0
        %vm1413 = vcmp.gt.f32.partialorder %v389, 0.0
        %vm1414 = vcmp.gt.f32.partialorder %v390, 0.0
        %vm1415 = vcmp.gt.f32.partialorder %v391, 0.0
        %vm1416 = vcmp.gt.f32.partialorder %v392, 0.0
        %vm1417 = vcmp.gt.f32.partialorder %v393, 0.0
        %vm1418 = vcmp.gt.f32.partialorder %v394, 0.0
        %vm1419 = vcmp.gt.f32.partialorder %v395, 0.0
        %vm1420 = vcmp.gt.f32.partialorder %v396, 0.0
        %vm1421 = vcmp.gt.f32.partialorder %v397, 0.0
        %vm1422 = vcmp.gt.f32.partialorder %v398, 0.0
        %vm1423 = vcmp.gt.f32.partialorder %v399, 0.0
        %vm1424 = vcmp.gt.f32.partialorder %v400, 0.0
        %vm1425 = vcmp.gt.f32.partialorder %v401, 0.0
        %vm1426 = vcmp.gt.f32.partialorder %v402, 0.0
        %vm1427 = vcmp.gt.f32.partialorder %v403, 0.0
        %vm1428 = vcmp.gt.f32.partialorder %v404, 0.0
        %vm1429 = vcmp.gt.f32.partialorder %v405, 0.0
        %vm1430 = vcmp.gt.f32.partialorder %v406, 0.0
        %vm1431 = vcmp.gt.f32.partialorder %v407, 0.0
        %vm1432 = vcmp.gt.f32.partialorder %v408, 0.0
        %vm1433 = vcmp.gt.f32.partialorder %v409, 0.0
        %vm1434 = vcmp.gt.f32.partialorder %v410, 0.0
        %vm1435 = vcmp.gt.f32.partialorder %v411, 0.0
        %vm1436 = vcmp.gt.f32.partialorder %v412, 0.0
        %vm1437 = vcmp.gt.f32.partialorder %v413, 0.0
        %vm1438 = vcmp.gt.f32.partialorder %v414, 0.0
        %vm1439 = vcmp.gt.f32.partialorder %v415, 0.0
        %vm1440 = vcmp.gt.f32.partialorder %v416, 0.0
        %vm1441 = vcmp.gt.f32.partialorder %v417, 0.0
        %vm1442 = vcmp.gt.f32.partialorder %v418, 0.0
        %vm1443 = vcmp.gt.f32.partialorder %v419, 0.0
        %vm1444 = vcmp.gt.f32.partialorder %v420, 0.0
        %vm1445 = vcmp.gt.f32.partialorder %v421, 0.0
        %vm1446 = vcmp.gt.f32.partialorder %v422, 0.0
        %vm1447 = vcmp.gt.f32.partialorder %v423, 0.0
        %vm1448 = vcmp.gt.f32.partialorder %v424, 0.0
        %vm1449 = vcmp.gt.f32.partialorder %v425, 0.0
        %vm1450 = vcmp.gt.f32.partialorder %v426, 0.0
        %vm1451 = vcmp.gt.f32.partialorder %v427, 0.0
        %vm1452 = vcmp.gt.f32.partialorder %v428, 0.0
        %vm1453 = vcmp.gt.f32.partialorder %v429, 0.0
        %vm1454 = vcmp.gt.f32.partialorder %v430, 0.0
        %vm1455 = vcmp.gt.f32.partialorder %v431, 0.0
        %vm1456 = vcmp.gt.f32.partialorder %v432, 0.0
        %vm1457 = vcmp.gt.f32.partialorder %v433, 0.0
        %vm1458 = vcmp.gt.f32.partialorder %v434, 0.0
        %vm1459 = vcmp.gt.f32.partialorder %v435, 0.0
        %vm1460 = vcmp.gt.f32.partialorder %v436, 0.0
        %vm1461 = vcmp.gt.f32.partialorder %v437, 0.0
        %vm1462 = vcmp.gt.f32.partialorder %v438, 0.0
        %vm1463 = vcmp.gt.f32.partialorder %v439, 0.0
        %vm1464 = vcmp.gt.f32.partialorder %v440, 0.0
        %vm1465 = vcmp.gt.f32.partialorder %v441, 0.0
        %vm1466 = vcmp.gt.f32.partialorder %v442, 0.0
        %vm1467 = vcmp.gt.f32.partialorder %v443, 0.0
        %vm1468 = vcmp.gt.f32.partialorder %v444, 0.0
        %vm1469 = vcmp.gt.f32.partialorder %v445, 0.0
        %vm1470 = vcmp.gt.f32.partialorder %v446, 0.0
        %vm1471 = vcmp.gt.f32.partialorder %v447, 0.0
        %vm1472 = vcmp.gt.f32.partialorder %v448, 0.0
        %vm1473 = vcmp.gt.f32.partialorder %v449, 0.0
        %vm1474 = vcmp.gt.f32.partialorder %v450, 0.0
        %vm1475 = vcmp.gt.f32.partialorder %v451, 0.0
        %vm1476 = vcmp.gt.f32.partialorder %v452, 0.0
        %vm1477 = vcmp.gt.f32.partialorder %v453, 0.0
        %vm1478 = vcmp.gt.f32.partialorder %v454, 0.0
        %vm1479 = vcmp.gt.f32.partialorder %v455, 0.0
        %vm1480 = vcmp.gt.f32.partialorder %v456, 0.0
        %vm1481 = vcmp.gt.f32.partialorder %v457, 0.0
        %vm1482 = vcmp.gt.f32.partialorder %v458, 0.0
        %vm1483 = vcmp.gt.f32.partialorder %v459, 0.0
        %vm1484 = vcmp.gt.f32.partialorder %v460, 0.0
        %vm1485 = vcmp.gt.f32.partialorder %v461, 0.0
        %vm1486 = vcmp.gt.f32.partialorder %v462, 0.0
        %vm1487 = vcmp.gt.f32.partialorder %v463, 0.0
        %vm1488 = vcmp.gt.f32.partialorder %v464, 0.0
        %vm1489 = vcmp.gt.f32.partialorder %v465, 0.0
        %vm1490 = vcmp.gt.f32.partialorder %v466, 0.0
        %vm1491 = vcmp.gt.f32.partialorder %v467, 0.0
        %vm1492 = vcmp.gt.f32.partialorder %v468, 0.0
        %vm1493 = vcmp.gt.f32.partialorder %v469, 0.0
        %vm1494 = vcmp.gt.f32.partialorder %v470, 0.0
        %vm1495 = vcmp.gt.f32.partialorder %v471, 0.0
        %vm1496 = vcmp.gt.f32.partialorder %v472, 0.0
        %vm1497 = vcmp.gt.f32.partialorder %v473, 0.0
        %vm1498 = vcmp.gt.f32.partialorder %v474, 0.0
        %vm1499 = vcmp.gt.f32.partialorder %v475, 0.0
        %vm1500 = vcmp.gt.f32.partialorder %v476, 0.0
        %vm1501 = vcmp.gt.f32.partialorder %v477, 0.0
        %vm1502 = vcmp.gt.f32.partialorder %v478, 0.0
        %vm1503 = vcmp.gt.f32.partialorder %v479, 0.0
        %vm1504 = vcmp.gt.f32.partialorder %v480, 0.0
        %vm1505 = vcmp.gt.f32.partialorder %v481, 0.0
        %vm1506 = vcmp.gt.f32.partialorder %v482, 0.0
        %vm1507 = vcmp.gt.f32.partialorder %v483, 0.0
        %vm1508 = vcmp.gt.f32.partialorder %v484, 0.0
        %vm1509 = vcmp.gt.f32.partialorder %v485, 0.0
        %vm1510 = vcmp.gt.f32.partialorder %v486, 0.0
        %vm1511 = vcmp.gt.f32.partialorder %v487, 0.0
        %vm1512 = vcmp.gt.f32.partialorder %v488, 0.0
        %vm1513 = vcmp.gt.f32.partialorder %v489, 0.0
        %vm1514 = vcmp.gt.f32.partialorder %v490, 0.0
        %vm1515 = vcmp.gt.f32.partialorder %v491, 0.0
        %vm1516 = vcmp.gt.f32.partialorder %v492, 0.0
        %vm1517 = vcmp.gt.f32.partialorder %v493, 0.0
        %vm1518 = vcmp.gt.f32.partialorder %v494, 0.0
        %vm1519 = vcmp.gt.f32.partialorder %v495, 0.0
        %vm1520 = vcmp.gt.f32.partialorder %v496, 0.0
        %vm1521 = vcmp.gt.f32.partialorder %v497, 0.0
        %vm1522 = vcmp.gt.f32.partialorder %v498, 0.0
        %vm1523 = vcmp.gt.f32.partialorder %v499, 0.0
        %vm1524 = vcmp.gt.f32.partialorder %v500, 0.0
        %vm1525 = vcmp.gt.f32.partialorder %v501, 0.0
        %vm1526 = vcmp.gt.f32.partialorder %v502, 0.0
        %vm1527 = vcmp.gt.f32.partialorder %v503, 0.0
        %vm1528 = vcmp.gt.f32.partialorder %v504, 0.0
        %vm1529 = vcmp.gt.f32.partialorder %v505, 0.0
        %vm1530 = vcmp.gt.f32.partialorder %v506, 0.0
        %vm1531 = vcmp.gt.f32.partialorder %v507, 0.0
        %vm1532 = vcmp.gt.f32.partialorder %v508, 0.0
        %vm1533 = vcmp.gt.f32.partialorder %v509, 0.0
        %vm1534 = vcmp.gt.f32.partialorder %v510, 0.0
        %vm1535 = vcmp.gt.f32.partialorder %v511, 0.0
        %vm1536 = vcmp.gt.f32.partialorder %v512, 0.0
        %vm1537 = vcmp.gt.f32.partialorder %v513, 0.0
        %vm1538 = vcmp.gt.f32.partialorder %v514, 0.0
        %vm1539 = vcmp.gt.f32.partialorder %v515, 0.0
        %vm1540 = vcmp.gt.f32.partialorder %v516, 0.0
        %vm1541 = vcmp.gt.f32.partialorder %v517, 0.0
        %vm1542 = vcmp.gt.f32.partialorder %v518, 0.0
        %vm1543 = vcmp.gt.f32.partialorder %v519, 0.0
        %vm1544 = vcmp.gt.f32.partialorder %v520, 0.0
        %vm1545 = vcmp.gt.f32.partialorder %v521, 0.0
        %vm1546 = vcmp.gt.f32.partialorder %v522, 0.0
        %vm1547 = vcmp.gt.f32.partialorder %v523, 0.0
        %vm1548 = vcmp.gt.f32.partialorder %v524, 0.0
        %vm1549 = vcmp.gt.f32.partialorder %v525, 0.0
        %vm1550 = vcmp.gt.f32.partialorder %v526, 0.0
        %vm1551 = vcmp.gt.f32.partialorder %v527, 0.0
        %vm1552 = vcmp.gt.f32.partialorder %v528, 0.0
        %vm1553 = vcmp.gt.f32.partialorder %v529, 0.0
        %vm1554 = vcmp.gt.f32.partialorder %v530, 0.0
        %vm1555 = vcmp.gt.f32.partialorder %v531, 0.0
        %vm1556 = vcmp.gt.f32.partialorder %v532, 0.0
        %vm1557 = vcmp.gt.f32.partialorder %v533, 0.0
        %vm1558 = vcmp.gt.f32.partialorder %v534, 0.0
        %vm1559 = vcmp.gt.f32.partialorder %v535, 0.0
        %vm1560 = vcmp.gt.f32.partialorder %v536, 0.0
        %vm1561 = vcmp.gt.f32.partialorder %v537, 0.0
        %vm1562 = vcmp.gt.f32.partialorder %v538, 0.0
        %vm1563 = vcmp.gt.f32.partialorder %v539, 0.0
        %vm1564 = vcmp.gt.f32.partialorder %v540, 0.0
        %vm1565 = vcmp.gt.f32.partialorder %v541, 0.0
        %vm1566 = vcmp.gt.f32.partialorder %v542, 0.0
        %vm1567 = vcmp.gt.f32.partialorder %v543, 0.0
        %vm1568 = vcmp.gt.f32.partialorder %v544, 0.0
        %vm1569 = vcmp.gt.f32.partialorder %v545, 0.0
        %vm1570 = vcmp.gt.f32.partialorder %v546, 0.0
        %vm1571 = vcmp.gt.f32.partialorder %v547, 0.0
        %vm1572 = vcmp.gt.f32.partialorder %v548, 0.0
        %vm1573 = vcmp.gt.f32.partialorder %v549, 0.0
        %vm1574 = vcmp.gt.f32.partialorder %v550, 0.0
        %vm1575 = vcmp.gt.f32.partialorder %v551, 0.0
        %vm1576 = vcmp.gt.f32.partialorder %v552, 0.0
        %vm1577 = vcmp.gt.f32.partialorder %v553, 0.0
        %vm1578 = vcmp.gt.f32.partialorder %v554, 0.0
        %vm1579 = vcmp.gt.f32.partialorder %v555, 0.0
        %vm1580 = vcmp.gt.f32.partialorder %v556, 0.0
        %vm1581 = vcmp.gt.f32.partialorder %v557, 0.0
        %vm1582 = vcmp.gt.f32.partialorder %v558, 0.0
        %vm1583 = vcmp.gt.f32.partialorder %v559, 0.0
        %vm1584 = vcmp.gt.f32.partialorder %v560, 0.0
        %vm1585 = vcmp.gt.f32.partialorder %v561, 0.0
        %vm1586 = vcmp.gt.f32.partialorder %v562, 0.0
        %vm1587 = vcmp.gt.f32.partialorder %v563, 0.0
        %vm1588 = vcmp.gt.f32.partialorder %v564, 0.0
        %vm1589 = vcmp.gt.f32.partialorder %v565, 0.0
        %vm1590 = vcmp.gt.f32.partialorder %v566, 0.0
        %vm1591 = vcmp.gt.f32.partialorder %v567, 0.0
        %vm1592 = vcmp.gt.f32.partialorder %v568, 0.0
        %vm1593 = vcmp.gt.f32.partialorder %v569, 0.0
        %vm1594 = vcmp.gt.f32.partialorder %v570, 0.0
        %vm1595 = vcmp.gt.f32.partialorder %v571, 0.0
        %vm1596 = vcmp.gt.f32.partialorder %v572, 0.0
        %vm1597 = vcmp.gt.f32.partialorder %v573, 0.0
        %vm1598 = vcmp.gt.f32.partialorder %v574, 0.0
        %vm1599 = vcmp.gt.f32.partialorder %v575, 0.0
        %vm1600 = vcmp.gt.f32.partialorder %v576, 0.0
        %vm1601 = vcmp.gt.f32.partialorder %v577, 0.0
        %vm1602 = vcmp.gt.f32.partialorder %v578, 0.0
        %vm1603 = vcmp.gt.f32.partialorder %v579, 0.0
        %vm1604 = vcmp.gt.f32.partialorder %v580, 0.0
        %vm1605 = vcmp.gt.f32.partialorder %v581, 0.0
        %vm1606 = vcmp.gt.f32.partialorder %v582, 0.0
        %vm1607 = vcmp.gt.f32.partialorder %v583, 0.0
        %vm1608 = vcmp.gt.f32.partialorder %v584, 0.0
        %vm1609 = vcmp.gt.f32.partialorder %v585, 0.0
        %vm1610 = vcmp.gt.f32.partialorder %v586, 0.0
        %vm1611 = vcmp.gt.f32.partialorder %v587, 0.0
        %vm1612 = vcmp.gt.f32.partialorder %v588, 0.0
        %vm1613 = vcmp.gt.f32.partialorder %v589, 0.0
        %vm1614 = vcmp.gt.f32.partialorder %v590, 0.0
        %vm1615 = vcmp.gt.f32.partialorder %v591, 0.0
        %vm1616 = vcmp.gt.f32.partialorder %v592, 0.0
        %vm1617 = vcmp.gt.f32.partialorder %v593, 0.0
        %vm1618 = vcmp.gt.f32.partialorder %v594, 0.0
        %vm1619 = vcmp.gt.f32.partialorder %v595, 0.0
        %vm1620 = vcmp.gt.f32.partialorder %v596, 0.0
        %vm1621 = vcmp.gt.f32.partialorder %v597, 0.0
        %vm1622 = vcmp.gt.f32.partialorder %v598, 0.0
        %vm1623 = vcmp.gt.f32.partialorder %v599, 0.0
        %vm1624 = vcmp.gt.f32.partialorder %v600, 0.0
        %vm1625 = vcmp.gt.f32.partialorder %v601, 0.0
        %vm1626 = vcmp.gt.f32.partialorder %v602, 0.0
        %vm1627 = vcmp.gt.f32.partialorder %v603, 0.0
        %vm1628 = vcmp.gt.f32.partialorder %v604, 0.0
        %vm1629 = vcmp.gt.f32.partialorder %v605, 0.0
        %vm1630 = vcmp.gt.f32.partialorder %v606, 0.0
        %vm1631 = vcmp.gt.f32.partialorder %v607, 0.0
        %vm1632 = vcmp.gt.f32.partialorder %v608, 0.0
        %vm1633 = vcmp.gt.f32.partialorder %v609, 0.0
        %vm1634 = vcmp.gt.f32.partialorder %v610, 0.0
        %vm1635 = vcmp.gt.f32.partialorder %v611, 0.0
        %vm1636 = vcmp.gt.f32.partialorder %v612, 0.0
        %vm1637 = vcmp.gt.f32.partialorder %v613, 0.0
        %vm1638 = vcmp.gt.f32.partialorder %v614, 0.0
        %vm1639 = vcmp.gt.f32.partialorder %v615, 0.0
        %vm1640 = vcmp.gt.f32.partialorder %v616, 0.0
        %vm1641 = vcmp.gt.f32.partialorder %v617, 0.0
        %vm1642 = vcmp.gt.f32.partialorder %v618, 0.0
        %vm1643 = vcmp.gt.f32.partialorder %v619, 0.0
        %vm1644 = vcmp.gt.f32.partialorder %v620, 0.0
        %vm1645 = vcmp.gt.f32.partialorder %v621, 0.0
        %vm1646 = vcmp.gt.f32.partialorder %v622, 0.0
        %vm1647 = vcmp.gt.f32.partialorder %v623, 0.0
        %vm1648 = vcmp.gt.f32.partialorder %v624, 0.0
        %vm1649 = vcmp.gt.f32.partialorder %v625, 0.0
        %vm1650 = vcmp.gt.f32.partialorder %v626, 0.0
        %vm1651 = vcmp.gt.f32.partialorder %v627, 0.0
        %vm1652 = vcmp.gt.f32.partialorder %v628, 0.0
        %vm1653 = vcmp.gt.f32.partialorder %v629, 0.0
        %vm1654 = vcmp.gt.f32.partialorder %v630, 0.0
        %vm1655 = vcmp.gt.f32.partialorder %v631, 0.0
        %vm1656 = vcmp.gt.f32.partialorder %v632, 0.0
        %vm1657 = vcmp.gt.f32.partialorder %v633, 0.0
        %vm1658 = vcmp.gt.f32.partialorder %v634, 0.0
        %vm1659 = vcmp.gt.f32.partialorder %v635, 0.0
        %vm1660 = vcmp.gt.f32.partialorder %v636, 0.0
        %vm1661 = vcmp.gt.f32.partialorder %v637, 0.0
        %vm1662 = vcmp.gt.f32.partialorder %v638, 0.0
        %vm1663 = vcmp.gt.f32.partialorder %v639, 0.0
        %vm1664 = vcmp.gt.f32.partialorder %v640, 0.0
        %vm1665 = vcmp.gt.f32.partialorder %v641, 0.0
        %vm1666 = vcmp.gt.f32.partialorder %v642, 0.0
        %vm1667 = vcmp.gt.f32.partialorder %v643, 0.0
        %vm1668 = vcmp.gt.f32.partialorder %v644, 0.0
        %vm1669 = vcmp.gt.f32.partialorder %v645, 0.0
        %vm1670 = vcmp.gt.f32.partialorder %v646, 0.0
        %vm1671 = vcmp.gt.f32.partialorder %v647, 0.0
        %vm1672 = vcmp.gt.f32.partialorder %v648, 0.0
        %vm1673 = vcmp.gt.f32.partialorder %v649, 0.0
        %vm1674 = vcmp.gt.f32.partialorder %v650, 0.0
        %vm1675 = vcmp.gt.f32.partialorder %v651, 0.0
        %vm1676 = vcmp.gt.f32.partialorder %v652, 0.0
        %vm1677 = vcmp.gt.f32.partialorder %v653, 0.0
        %vm1678 = vcmp.gt.f32.partialorder %v654, 0.0
        %vm1679 = vcmp.gt.f32.partialorder %v655, 0.0
        %vm1680 = vcmp.gt.f32.partialorder %v656, 0.0
        %vm1681 = vcmp.gt.f32.partialorder %v657, 0.0
        %vm1682 = vcmp.gt.f32.partialorder %v658, 0.0
        %vm1683 = vcmp.gt.f32.partialorder %v659, 0.0
        %vm1684 = vcmp.gt.f32.partialorder %v660, 0.0
        %vm1685 = vcmp.gt.f32.partialorder %v661, 0.0
        %vm1686 = vcmp.gt.f32.partialorder %v662, 0.0
        %vm1687 = vcmp.gt.f32.partialorder %v663, 0.0
        %vm1688 = vcmp.gt.f32.partialorder %v664, 0.0
        %vm1689 = vcmp.gt.f32.partialorder %v665, 0.0
        %vm1690 = vcmp.gt.f32.partialorder %v666, 0.0
        %vm1691 = vcmp.gt.f32.partialorder %v667, 0.0
        %vm1692 = vcmp.gt.f32.partialorder %v668, 0.0
        %vm1693 = vcmp.gt.f32.partialorder %v669, 0.0
        %vm1694 = vcmp.gt.f32.partialorder %v670, 0.0
        %vm1695 = vcmp.gt.f32.partialorder %v671, 0.0
        %vm1696 = vcmp.gt.f32.partialorder %v672, 0.0
        %vm1697 = vcmp.gt.f32.partialorder %v673, 0.0
        %vm1698 = vcmp.gt.f32.partialorder %v674, 0.0
        %vm1699 = vcmp.gt.f32.partialorder %v675, 0.0
        %vm1700 = vcmp.gt.f32.partialorder %v676, 0.0
        %vm1701 = vcmp.gt.f32.partialorder %v677, 0.0
        %vm1702 = vcmp.gt.f32.partialorder %v678, 0.0
        %vm1703 = vcmp.gt.f32.partialorder %v679, 0.0
        %vm1704 = vcmp.gt.f32.partialorder %v680, 0.0
        %vm1705 = vcmp.gt.f32.partialorder %v681, 0.0
        %vm1706 = vcmp.gt.f32.partialorder %v682, 0.0
        %vm1707 = vcmp.gt.f32.partialorder %v683, 0.0
        %vm1708 = vcmp.gt.f32.partialorder %v684, 0.0
        %vm1709 = vcmp.gt.f32.partialorder %v685, 0.0
        %vm1710 = vcmp.gt.f32.partialorder %v686, 0.0
        %vm1711 = vcmp.gt.f32.partialorder %v687, 0.0
        %vm1712 = vcmp.gt.f32.partialorder %v688, 0.0
        %vm1713 = vcmp.gt.f32.partialorder %v689, 0.0
        %vm1714 = vcmp.gt.f32.partialorder %v690, 0.0
        %vm1715 = vcmp.gt.f32.partialorder %v691, 0.0
        %vm1716 = vcmp.gt.f32.partialorder %v692, 0.0
        %vm1717 = vcmp.gt.f32.partialorder %v693, 0.0
        %vm1718 = vcmp.gt.f32.partialorder %v694, 0.0
        %vm1719 = vcmp.gt.f32.partialorder %v695, 0.0
        %vm1720 = vcmp.gt.f32.partialorder %v696, 0.0
        %vm1721 = vcmp.gt.f32.partialorder %v697, 0.0
        %vm1722 = vcmp.gt.f32.partialorder %v698, 0.0
        %vm1723 = vcmp.gt.f32.partialorder %v699, 0.0
        %vm1724 = vcmp.gt.f32.partialorder %v700, 0.0
        %vm1725 = vcmp.gt.f32.partialorder %v701, 0.0
        %vm1726 = vcmp.gt.f32.partialorder %v702, 0.0
        %vm1727 = vcmp.gt.f32.partialorder %v703, 0.0
        %vm1728 = vcmp.gt.f32.partialorder %v704, 0.0
        %vm1729 = vcmp.gt.f32.partialorder %v705, 0.0
        %vm1730 = vcmp.gt.f32.partialorder %v706, 0.0
        %vm1731 = vcmp.gt.f32.partialorder %v707, 0.0
        %vm1732 = vcmp.gt.f32.partialorder %v708, 0.0
        %vm1733 = vcmp.gt.f32.partialorder %v709, 0.0
        %vm1734 = vcmp.gt.f32.partialorder %v710, 0.0
        %vm1735 = vcmp.gt.f32.partialorder %v711, 0.0
        %vm1736 = vcmp.gt.f32.partialorder %v712, 0.0
        %vm1737 = vcmp.gt.f32.partialorder %v713, 0.0
        %vm1738 = vcmp.gt.f32.partialorder %v714, 0.0
        %vm1739 = vcmp.gt.f32.partialorder %v715, 0.0
        %vm1740 = vcmp.gt.f32.partialorder %v716, 0.0
        %vm1741 = vcmp.gt.f32.partialorder %v717, 0.0
        %vm1742 = vcmp.gt.f32.partialorder %v718, 0.0
        %vm1743 = vcmp.gt.f32.partialorder %v719, 0.0
        %vm1744 = vcmp.gt.f32.partialorder %v720, 0.0
        %vm1745 = vcmp.gt.f32.partialorder %v721, 0.0
        %vm1746 = vcmp.gt.f32.partialorder %v722, 0.0
        %vm1747 = vcmp.gt.f32.partialorder %v723, 0.0
        %vm1748 = vcmp.gt.f32.partialorder %v724, 0.0
        %vm1749 = vcmp.gt.f32.partialorder %v725, 0.0
        %vm1750 = vcmp.gt.f32.partialorder %v726, 0.0
        %vm1751 = vcmp.gt.f32.partialorder %v727, 0.0
        %vm1752 = vcmp.gt.f32.partialorder %v728, 0.0
        %vm1753 = vcmp.gt.f32.partialorder %v729, 0.0
        %vm1754 = vcmp.gt.f32.partialorder %v730, 0.0
        %vm1755 = vcmp.gt.f32.partialorder %v731, 0.0
        %vm1756 = vcmp.gt.f32.partialorder %v732, 0.0
        %vm1757 = vcmp.gt.f32.partialorder %v733, 0.0
        %vm1758 = vcmp.gt.f32.partialorder %v734, 0.0
        %vm1759 = vcmp.gt.f32.partialorder %v735, 0.0
        %vm1760 = vcmp.gt.f32.partialorder %v736, 0.0
        %vm1761 = vcmp.gt.f32.partialorder %v737, 0.0
        %vm1762 = vcmp.gt.f32.partialorder %v738, 0.0
        %vm1763 = vcmp.gt.f32.partialorder %v739, 0.0
        %vm1764 = vcmp.gt.f32.partialorder %v740, 0.0
        %vm1765 = vcmp.gt.f32.partialorder %v741, 0.0
        %vm1766 = vcmp.gt.f32.partialorder %v742, 0.0
        %vm1767 = vcmp.gt.f32.partialorder %v743, 0.0
        %vm1768 = vcmp.gt.f32.partialorder %v744, 0.0
        %vm1769 = vcmp.gt.f32.partialorder %v745, 0.0
        %vm1770 = vcmp.gt.f32.partialorder %v746, 0.0
        %vm1771 = vcmp.gt.f32.partialorder %v747, 0.0
        %vm1772 = vcmp.gt.f32.partialorder %v748, 0.0
        %vm1773 = vcmp.gt.f32.partialorder %v749, 0.0
        %vm1774 = vcmp.gt.f32.partialorder %v750, 0.0
        %vm1775 = vcmp.gt.f32.partialorder %v751, 0.0
        %vm1776 = vcmp.gt.f32.partialorder %v752, 0.0
        %vm1777 = vcmp.gt.f32.partialorder %v753, 0.0
        %vm1778 = vcmp.gt.f32.partialorder %v754, 0.0
        %vm1779 = vcmp.gt.f32.partialorder %v755, 0.0
        %vm1780 = vcmp.gt.f32.partialorder %v756, 0.0
        %vm1781 = vcmp.gt.f32.partialorder %v757, 0.0
        %vm1782 = vcmp.gt.f32.partialorder %v758, 0.0
        %vm1783 = vcmp.gt.f32.partialorder %v759, 0.0
        %vm1784 = vcmp.gt.f32.partialorder %v760, 0.0
        %vm1785 = vcmp.gt.f32.partialorder %v761, 0.0
        %vm1786 = vcmp.gt.f32.partialorder %v762, 0.0
        %vm1787 = vcmp.gt.f32.partialorder %v763, 0.0
        %vm1788 = vcmp.gt.f32.partialorder %v764, 0.0
        %vm1789 = vcmp.gt.f32.partialorder %v765, 0.0
        %vm1790 = vcmp.gt.f32.partialorder %v766, 0.0
        %vm1791 = vcmp.gt.f32.partialorder %v767, 0.0
        %vm1792 = vcmp.gt.f32.partialorder %v768, 0.0
        %vm1793 = vcmp.gt.f32.partialorder %v769, 0.0
        %vm1794 = vcmp.gt.f32.partialorder %v770, 0.0
        %vm1795 = vcmp.gt.f32.partialorder %v771, 0.0
        %vm1796 = vcmp.gt.f32.partialorder %v772, 0.0
        %vm1797 = vcmp.gt.f32.partialorder %v773, 0.0
        %vm1798 = vcmp.gt.f32.partialorder %v774, 0.0
        %vm1799 = vcmp.gt.f32.partialorder %v775, 0.0
        %vm1800 = vcmp.gt.f32.partialorder %v776, 0.0
        %vm1801 = vcmp.gt.f32.partialorder %v777, 0.0
        %vm1802 = vcmp.gt.f32.partialorder %v778, 0.0
        %vm1803 = vcmp.gt.f32.partialorder %v779, 0.0
        %vm1804 = vcmp.gt.f32.partialorder %v780, 0.0
        %vm1805 = vcmp.gt.f32.partialorder %v781, 0.0
        %vm1806 = vcmp.gt.f32.partialorder %v782, 0.0
        %vm1807 = vcmp.gt.f32.partialorder %v783, 0.0
        %vm1808 = vcmp.gt.f32.partialorder %v784, 0.0
        %vm1809 = vcmp.gt.f32.partialorder %v785, 0.0
        %vm1810 = vcmp.gt.f32.partialorder %v786, 0.0
        %vm1811 = vcmp.gt.f32.partialorder %v787, 0.0
        %vm1812 = vcmp.gt.f32.partialorder %v788, 0.0
        %vm1813 = vcmp.gt.f32.partialorder %v789, 0.0
        %vm1814 = vcmp.gt.f32.partialorder %v790, 0.0
        %vm1815 = vcmp.gt.f32.partialorder %v791, 0.0
        %vm1816 = vcmp.gt.f32.partialorder %v792, 0.0
        %vm1817 = vcmp.gt.f32.partialorder %v793, 0.0
        %vm1818 = vcmp.gt.f32.partialorder %v794, 0.0
        %vm1819 = vcmp.gt.f32.partialorder %v795, 0.0
        %vm1820 = vcmp.gt.f32.partialorder %v796, 0.0
        %vm1821 = vcmp.gt.f32.partialorder %v797, 0.0
        %vm1822 = vcmp.gt.f32.partialorder %v798, 0.0
        %vm1823 = vcmp.gt.f32.partialorder %v799, 0.0
        %vm1824 = vcmp.gt.f32.partialorder %v800, 0.0
        %vm1825 = vcmp.gt.f32.partialorder %v801, 0.0
        %vm1826 = vcmp.gt.f32.partialorder %v802, 0.0
        %vm1827 = vcmp.gt.f32.partialorder %v803, 0.0
        %vm1828 = vcmp.gt.f32.partialorder %v804, 0.0
        %vm1829 = vcmp.gt.f32.partialorder %v805, 0.0
        %vm1830 = vcmp.gt.f32.partialorder %v806, 0.0
        %vm1831 = vcmp.gt.f32.partialorder %v807, 0.0
        %vm1832 = vcmp.gt.f32.partialorder %v808, 0.0
        %vm1833 = vcmp.gt.f32.partialorder %v809, 0.0
        %vm1834 = vcmp.gt.f32.partialorder %v810, 0.0
        %vm1835 = vcmp.gt.f32.partialorder %v811, 0.0
        %vm1836 = vcmp.gt.f32.partialorder %v812, 0.0
        %vm1837 = vcmp.gt.f32.partialorder %v813, 0.0
        %vm1838 = vcmp.gt.f32.partialorder %v814, 0.0
        %vm1839 = vcmp.gt.f32.partialorder %v815, 0.0
        %vm1840 = vcmp.gt.f32.partialorder %v816, 0.0
        %vm1841 = vcmp.gt.f32.partialorder %v817, 0.0
        %vm1842 = vcmp.gt.f32.partialorder %v818, 0.0
        %vm1843 = vcmp.gt.f32.partialorder %v819, 0.0
        %vm1844 = vcmp.gt.f32.partialorder %v820, 0.0
        %vm1845 = vcmp.gt.f32.partialorder %v821, 0.0
        %vm1846 = vcmp.gt.f32.partialorder %v822, 0.0
        %vm1847 = vcmp.gt.f32.partialorder %v823, 0.0
        %vm1848 = vcmp.gt.f32.partialorder %v824, 0.0
        %vm1849 = vcmp.gt.f32.partialorder %v825, 0.0
        %vm1850 = vcmp.gt.f32.partialorder %v826, 0.0
        %vm1851 = vcmp.gt.f32.partialorder %v827, 0.0
        %vm1852 = vcmp.gt.f32.partialorder %v828, 0.0
        %vm1853 = vcmp.gt.f32.partialorder %v829, 0.0
        %vm1854 = vcmp.gt.f32.partialorder %v830, 0.0
        %vm1855 = vcmp.gt.f32.partialorder %v831, 0.0
        %vm1856 = vcmp.gt.f32.partialorder %v832, 0.0
        %vm1857 = vcmp.gt.f32.partialorder %v833, 0.0
        %vm1858 = vcmp.gt.f32.partialorder %v834, 0.0
        %vm1859 = vcmp.gt.f32.partialorder %v835, 0.0
        %vm1860 = vcmp.gt.f32.partialorder %v836, 0.0
        %vm1861 = vcmp.gt.f32.partialorder %v837, 0.0
        %vm1862 = vcmp.gt.f32.partialorder %v838, 0.0
        %vm1863 = vcmp.gt.f32.partialorder %v839, 0.0
        %vm1864 = vcmp.gt.f32.partialorder %v840, 0.0
        %vm1865 = vcmp.gt.f32.partialorder %v841, 0.0
        %vm1866 = vcmp.gt.f32.partialorder %v842, 0.0
        %vm1867 = vcmp.gt.f32.partialorder %v843, 0.0
        %vm1868 = vcmp.gt.f32.partialorder %v844, 0.0
        %vm1869 = vcmp.gt.f32.partialorder %v845, 0.0
        %vm1870 = vcmp.gt.f32.partialorder %v846, 0.0
        %vm1871 = vcmp.gt.f32.partialorder %v847, 0.0
        %vm1872 = vcmp.gt.f32.partialorder %v848, 0.0
        %vm1873 = vcmp.gt.f32.partialorder %v849, 0.0
        %vm1874 = vcmp.gt.f32.partialorder %v850, 0.0
        %vm1875 = vcmp.gt.f32.partialorder %v851, 0.0
        %vm1876 = vcmp.gt.f32.partialorder %v852, 0.0
        %vm1877 = vcmp.gt.f32.partialorder %v853, 0.0
        %vm1878 = vcmp.gt.f32.partialorder %v854, 0.0
        %vm1879 = vcmp.gt.f32.partialorder %v855, 0.0
        %vm1880 = vcmp.gt.f32.partialorder %v856, 0.0
        %vm1881 = vcmp.gt.f32.partialorder %v857, 0.0
        %vm1882 = vcmp.gt.f32.partialorder %v858, 0.0
        %vm1883 = vcmp.gt.f32.partialorder %v859, 0.0
        %vm1884 = vcmp.gt.f32.partialorder %v860, 0.0
        %vm1885 = vcmp.gt.f32.partialorder %v861, 0.0
        %vm1886 = vcmp.gt.f32.partialorder %v862, 0.0
        %vm1887 = vcmp.gt.f32.partialorder %v863, 0.0
        %vm1888 = vcmp.gt.f32.partialorder %v864, 0.0
        %vm1889 = vcmp.gt.f32.partialorder %v865, 0.0
        %vm1890 = vcmp.gt.f32.partialorder %v866, 0.0
        %vm1891 = vcmp.gt.f32.partialorder %v867, 0.0
        %vm1892 = vcmp.gt.f32.partialorder %v868, 0.0
        %vm1893 = vcmp.gt.f32.partialorder %v869, 0.0
        %vm1894 = vcmp.gt.f32.partialorder %v870, 0.0
        %vm1895 = vcmp.gt.f32.partialorder %v871, 0.0
        %vm1896 = vcmp.gt.f32.partialorder %v872, 0.0
        %vm1897 = vcmp.gt.f32.partialorder %v873, 0.0
        %vm1898 = vcmp.gt.f32.partialorder %v874, 0.0
        %vm1899 = vcmp.gt.f32.partialorder %v875, 0.0
        %vm1900 = vcmp.gt.f32.partialorder %v876, 0.0
        %vm1901 = vcmp.gt.f32.partialorder %v877, 0.0
        %vm1902 = vcmp.gt.f32.partialorder %v878, 0.0
        %vm1903 = vcmp.gt.f32.partialorder %v879, 0.0
        %vm1904 = vcmp.gt.f32.partialorder %v880, 0.0
        %vm1905 = vcmp.gt.f32.partialorder %v881, 0.0
        %vm1906 = vcmp.gt.f32.partialorder %v882, 0.0
        %vm1907 = vcmp.gt.f32.partialorder %v883, 0.0
        %vm1908 = vcmp.gt.f32.partialorder %v884, 0.0
        %vm1909 = vcmp.gt.f32.partialorder %v885, 0.0
        %vm1910 = vcmp.gt.f32.partialorder %v886, 0.0
        %vm1911 = vcmp.gt.f32.partialorder %v887, 0.0
        %vm1912 = vcmp.gt.f32.partialorder %v888, 0.0
        %vm1913 = vcmp.gt.f32.partialorder %v889, 0.0
        %vm1914 = vcmp.gt.f32.partialorder %v890, 0.0
        %vm1915 = vcmp.gt.f32.partialorder %v891, 0.0
        %vm1916 = vcmp.gt.f32.partialorder %v892, 0.0
        %vm1917 = vcmp.gt.f32.partialorder %v893, 0.0
        %vm1918 = vcmp.gt.f32.partialorder %v894, 0.0
        %vm1919 = vcmp.gt.f32.partialorder %v895, 0.0
        %vm1920 = vcmp.gt.f32.partialorder %v896, 0.0
        %vm1921 = vcmp.gt.f32.partialorder %v897, 0.0
        %vm1922 = vcmp.gt.f32.partialorder %v898, 0.0
        %vm1923 = vcmp.gt.f32.partialorder %v899, 0.0
        %vm1924 = vcmp.gt.f32.partialorder %v900, 0.0
        %vm1925 = vcmp.gt.f32.partialorder %v901, 0.0
        %vm1926 = vcmp.gt.f32.partialorder %v902, 0.0
        %vm1927 = vcmp.gt.f32.partialorder %v903, 0.0
        %vm1928 = vcmp.gt.f32.partialorder %v904, 0.0
        %vm1929 = vcmp.gt.f32.partialorder %v905, 0.0
        %vm1930 = vcmp.gt.f32.partialorder %v906, 0.0
        %vm1931 = vcmp.gt.f32.partialorder %v907, 0.0
        %vm1932 = vcmp.gt.f32.partialorder %v908, 0.0
        %vm1933 = vcmp.gt.f32.partialorder %v909, 0.0
        %vm1934 = vcmp.gt.f32.partialorder %v910, 0.0
        %vm1935 = vcmp.gt.f32.partialorder %v911, 0.0
        %vm1936 = vcmp.gt.f32.partialorder %v912, 0.0
        %vm1937 = vcmp.gt.f32.partialorder %v913, 0.0
        %vm1938 = vcmp.gt.f32.partialorder %v914, 0.0
        %vm1939 = vcmp.gt.f32.partialorder %v915, 0.0
        %vm1940 = vcmp.gt.f32.partialorder %v916, 0.0
        %vm1941 = vcmp.gt.f32.partialorder %v917, 0.0
        %vm1942 = vcmp.gt.f32.partialorder %v918, 0.0
        %vm1943 = vcmp.gt.f32.partialorder %v919, 0.0
        %vm1944 = vcmp.gt.f32.partialorder %v920, 0.0
        %vm1945 = vcmp.gt.f32.partialorder %v921, 0.0
        %vm1946 = vcmp.gt.f32.partialorder %v922, 0.0
        %vm1947 = vcmp.gt.f32.partialorder %v923, 0.0
        %vm1948 = vcmp.gt.f32.partialorder %v924, 0.0
        %vm1949 = vcmp.gt.f32.partialorder %v925, 0.0
        %vm1950 = vcmp.gt.f32.partialorder %v926, 0.0
        %vm1951 = vcmp.gt.f32.partialorder %v927, 0.0
        %vm1952 = vcmp.gt.f32.partialorder %v928, 0.0
        %vm1953 = vcmp.gt.f32.partialorder %v929, 0.0
        %vm1954 = vcmp.gt.f32.partialorder %v930, 0.0
        %vm1955 = vcmp.gt.f32.partialorder %v931, 0.0
        %vm1956 = vcmp.gt.f32.partialorder %v932, 0.0
        %vm1957 = vcmp.gt.f32.partialorder %v933, 0.0
        %vm1958 = vcmp.gt.f32.partialorder %v934, 0.0
        %vm1959 = vcmp.gt.f32.partialorder %v935, 0.0
        %vm1960 = vcmp.gt.f32.partialorder %v936, 0.0
        %vm1961 = vcmp.gt.f32.partialorder %v937, 0.0
        %vm1962 = vcmp.gt.f32.partialorder %v938, 0.0
        %vm1963 = vcmp.gt.f32.partialorder %v939, 0.0
        %vm1964 = vcmp.gt.f32.partialorder %v940, 0.0
        %vm1965 = vcmp.gt.f32.partialorder %v941, 0.0
        %vm1966 = vcmp.gt.f32.partialorder %v942, 0.0
        %vm1967 = vcmp.gt.f32.partialorder %v943, 0.0
        %vm1968 = vcmp.gt.f32.partialorder %v944, 0.0
        %vm1969 = vcmp.gt.f32.partialorder %v945, 0.0
        %vm1970 = vcmp.gt.f32.partialorder %v946, 0.0
        %vm1971 = vcmp.gt.f32.partialorder %v947, 0.0
        %vm1972 = vcmp.gt.f32.partialorder %v948, 0.0
        %vm1973 = vcmp.gt.f32.partialorder %v949, 0.0
        %vm1974 = vcmp.gt.f32.partialorder %v950, 0.0
        %vm1975 = vcmp.gt.f32.partialorder %v951, 0.0
        %vm1976 = vcmp.gt.f32.partialorder %v952, 0.0
        %vm1977 = vcmp.gt.f32.partialorder %v953, 0.0
        %vm1978 = vcmp.gt.f32.partialorder %v954, 0.0
        %vm1979 = vcmp.gt.f32.partialorder %v955, 0.0
        %vm1980 = vcmp.gt.f32.partialorder %v956, 0.0
        %vm1981 = vcmp.gt.f32.partialorder %v957, 0.0
        %vm1982 = vcmp.gt.f32.partialorder %v958, 0.0
        %vm1983 = vcmp.gt.f32.partialorder %v959, 0.0
        %vm1984 = vcmp.gt.f32.partialorder %v960, 0.0
        %vm1985 = vcmp.gt.f32.partialorder %v961, 0.0
        %vm1986 = vcmp.gt.f32.partialorder %v962, 0.0
        %vm1987 = vcmp.gt.f32.partialorder %v963, 0.0
        %vm1988 = vcmp.gt.f32.partialorder %v964, 0.0
        %vm1989 = vcmp.gt.f32.partialorder %v965, 0.0
        %vm1990 = vcmp.gt.f32.partialorder %v966, 0.0
        %vm1991 = vcmp.gt.f32.partialorder %v967, 0.0
        %vm1992 = vcmp.gt.f32.partialorder %v968, 0.0
        %vm1993 = vcmp.gt.f32.partialorder %v969, 0.0
        %vm1994 = vcmp.gt.f32.partialorder %v970, 0.0
        %vm1995 = vcmp.gt.f32.partialorder %v971, 0.0
        %vm1996 = vcmp.gt.f32.partialorder %v972, 0.0
        %vm1997 = vcmp.gt.f32.partialorder %v973, 0.0
        %vm1998 = vcmp.gt.f32.partialorder %v974, 0.0
        %vm1999 = vcmp.gt.f32.partialorder %v975, 0.0
        %vm2000 = vcmp.gt.f32.partialorder %v976, 0.0
        %vm2001 = vcmp.gt.f32.partialorder %v977, 0.0
        %vm2002 = vcmp.gt.f32.partialorder %v978, 0.0
        %vm2003 = vcmp.gt.f32.partialorder %v979, 0.0
        %vm2004 = vcmp.gt.f32.partialorder %v980, 0.0
        %vm2005 = vcmp.gt.f32.partialorder %v981, 0.0
        %vm2006 = vcmp.gt.f32.partialorder %v982, 0.0
        %vm2007 = vcmp.gt.f32.partialorder %v983, 0.0
        %vm2008 = vcmp.gt.f32.partialorder %v984, 0.0
        %vm2009 = vcmp.gt.f32.partialorder %v985, 0.0
        %vm2010 = vcmp.gt.f32.partialorder %v986, 0.0
        %vm2011 = vcmp.gt.f32.partialorder %v987, 0.0
        %vm2012 = vcmp.gt.f32.partialorder %v988, 0.0
        %vm2013 = vcmp.gt.f32.partialorder %v989, 0.0
        %vm2014 = vcmp.gt.f32.partialorder %v990, 0.0
        %vm2015 = vcmp.gt.f32.partialorder %v991, 0.0
        %vm2016 = vcmp.gt.f32.partialorder %v992, 0.0
        %vm2017 = vcmp.gt.f32.partialorder %v993, 0.0
        %vm2018 = vcmp.gt.f32.partialorder %v994, 0.0
        %vm2019 = vcmp.gt.f32.partialorder %v995, 0.0
        %vm2020 = vcmp.gt.f32.partialorder %v996, 0.0
        %vm2021 = vcmp.gt.f32.partialorder %v997, 0.0
        %vm2022 = vcmp.gt.f32.partialorder %v998, 0.0
        %vm2023 = vcmp.gt.f32.partialorder %v999, 0.0
        %vm2024 = vcmp.gt.f32.partialorder %v1000, 0.0
        %vm2025 = vcmp.gt.f32.partialorder %v1001, 0.0
        %vm2026 = vcmp.gt.f32.partialorder %v1002, 0.0
        %vm2027 = vcmp.gt.f32.partialorder %v1003, 0.0
        %vm2028 = vcmp.gt.f32.partialorder %v1004, 0.0
        %vm2029 = vcmp.gt.f32.partialorder %v1005, 0.0
        %vm2030 = vcmp.gt.f32.partialorder %v1006, 0.0
        %vm2031 = vcmp.gt.f32.partialorder %v1007, 0.0
        %vm2032 = vcmp.gt.f32.partialorder %v1008, 0.0
        %vm2033 = vcmp.gt.f32.partialorder %v1009, 0.0
        %vm2034 = vcmp.gt.f32.partialorder %v1010, 0.0
        %vm2035 = vcmp.gt.f32.partialorder %v1011, 0.0
        %vm2036 = vcmp.gt.f32.partialorder %v1012, 0.0
        %vm2037 = vcmp.gt.f32.partialorder %v1013, 0.0
        %vm2038 = vcmp.gt.f32.partialorder %v1014, 0.0
        %vm2039 = vcmp.gt.f32.partialorder %v1015, 0.0
        %vm2040 = vcmp.gt.f32.partialorder %v1016, 0.0
        %vm2041 = vcmp.gt.f32.partialorder %v1017, 0.0
        %vm2042 = vcmp.gt.f32.partialorder %v1018, 0.0
        %vm2043 = vcmp.gt.f32.partialorder %v1019, 0.0
        %vm2044 = vcmp.gt.f32.partialorder %v1020, 0.0
        %vm2045 = vcmp.gt.f32.partialorder %v1021, 0.0
        %vm2046 = vcmp.gt.f32.partialorder %v1022, 0.0
        %vm2047 = vcmp.gt.f32.partialorder %v1023, 0.0
        %vm2048 = vcmp.gt.f32.partialorder %v1024, 0.0
        %vm2049 = vcmp.gt.f32.partialorder %v1025, 0.0
        %vm2050 = vcmp.gt.f32.partialorder %v1026, 0.0
        %vm2051 = vcmp.gt.f32.partialorder %v1027, 0.0
        %vm2052 = vcmp.gt.f32.partialorder %v1028, 0.0
        %vm2053 = vcmp.gt.f32.partialorder %v1029, 0.0
        %vm2054 = vcmp.gt.f32.partialorder %v1030, 0.0
        %vm2055 = vcmp.gt.f32.partialorder %v1031, 0.0
        %vm2056 = vcmp.gt.f32.partialorder %v1032, 0.0
        %vm2057 = vcmp.gt.f32.partialorder %v1033, 0.0
        %vm2058 = vcmp.gt.f32.partialorder %v1034, 0.0
        %vm2059 = vcmp.gt.f32.partialorder %v1035, 0.0
        %vm2060 = vcmp.gt.f32.partialorder %v1036, 0.0
        %vm2061 = vcmp.gt.f32.partialorder %v1037, 0.0
        %vm2062 = vcmp.gt.f32.partialorder %v1038, 0.0
        %vm2063 = vcmp.gt.f32.partialorder %v1039, 0.0
        %vm2064 = vcmp.gt.f32.partialorder %v1040, 0.0
        %vm2065 = vcmp.gt.f32.partialorder %v1041, 0.0
        %vm2066 = vcmp.gt.f32.partialorder %v1042, 0.0
        %vm2067 = vcmp.gt.f32.partialorder %v1043, 0.0
        %vm2068 = vcmp.gt.f32.partialorder %v1044, 0.0
        %vm2069 = vcmp.gt.f32.partialorder %v1045, 0.0
        %vm2070 = vcmp.gt.f32.partialorder %v1046, 0.0
        %vm2071 = vcmp.gt.f32.partialorder %v1047, 0.0
        %vm2072 = vcmp.gt.f32.partialorder %v1048, 0.0
        %vm2073 = vcmp.gt.f32.partialorder %v1049, 0.0
        %vm2074 = vcmp.gt.f32.partialorder %v1050, 0.0
        %vm2075 = vcmp.gt.f32.partialorder %v1051, 0.0
        %vm2076 = vcmp.gt.f32.partialorder %v1052, 0.0
        %vm2077 = vcmp.gt.f32.partialorder %v1053, 0.0
        %vm2078 = vcmp.gt.f32.partialorder %v1054, 0.0
        %vm2079 = vcmp.gt.f32.partialorder %v1055, 0.0
        %vm2080 = vcmp.gt.f32.partialorder %v1056, 0.0
        %vm2081 = vcmp.gt.f32.partialorder %v1057, 0.0
        %vm2082 = vcmp.gt.f32.partialorder %v1058, 0.0
        %vm2083 = vcmp.gt.f32.partialorder %v1059, 0.0
        %vm2084 = vcmp.gt.f32.partialorder %v1060, 0.0
        %vm2085 = vcmp.gt.f32.partialorder %v1061, 0.0
        %vm2086 = vcmp.gt.f32.partialorder %v1062, 0.0
        %vm2087 = vcmp.gt.f32.partialorder %v1063, 0.0
        %vm2088 = vcmp.gt.f32.partialorder %v1064, 0.0
        %vm2089 = vcmp.gt.f32.partialorder %v1065, 0.0
        %vm2090 = vcmp.gt.f32.partialorder %v1066, 0.0
        %vm2091 = vcmp.gt.f32.partialorder %v1067, 0.0
        %vm2092 = vcmp.gt.f32.partialorder %v1068, 0.0
        %vm2093 = vcmp.gt.f32.partialorder %v1069, 0.0
        %vm2094 = vcmp.gt.f32.partialorder %v1070, 0.0
        %vm2095 = vcmp.gt.f32.partialorder %v1071, 0.0
        %vm2096 = vcmp.gt.f32.partialorder %v1072, 0.0
        %vm2097 = vcmp.gt.f32.partialorder %v1073, 0.0
        %vm2098 = vcmp.gt.f32.partialorder %v1074, 0.0
        %vm2099 = vcmp.gt.f32.partialorder %v1075, 0.0
        %vm2100 = vcmp.gt.f32.partialorder %v1076, 0.0
        %vm2101 = vcmp.gt.f32.partialorder %v1077, 0.0
        %vm2102 = vcmp.gt.f32.partialorder %v1078, 0.0
        %vm2103 = vcmp.gt.f32.partialorder %v1079, 0.0
        %vm2104 = vcmp.gt.f32.partialorder %v1080, 0.0
        %vm2105 = vcmp.gt.f32.partialorder %v1081, 0.0
        %vm2106 = vcmp.gt.f32.partialorder %v1082, 0.0
        %vm2107 = vcmp.gt.f32.partialorder %v1083, 0.0
        %vm2108 = vcmp.gt.f32.partialorder %v1084, 0.0
        %vm2109 = vcmp.gt.f32.partialorder %v1085, 0.0
        %vm2110 = vcmp.gt.f32.partialorder %v1086, 0.0
        %vm2111 = vcmp.gt.f32.partialorder %v1087, 0.0
        %vm2112 = vcmp.gt.f32.partialorder %v1088, 0.0
        %vm2113 = vcmp.gt.f32.partialorder %v1089, 0.0
        %vm2114 = vcmp.gt.f32.partialorder %v1090, 0.0
        %vm2115 = vcmp.gt.f32.partialorder %v1091, 0.0
        %vm2116 = vcmp.gt.f32.partialorder %v1092, 0.0
        %vm2117 = vcmp.gt.f32.partialorder %v1093, 0.0
        %vm2118 = vcmp.gt.f32.partialorder %v1094, 0.0
        %vm2119 = vcmp.gt.f32.partialorder %v1095, 0.0
        %vm2120 = vcmp.gt.f32.partialorder %v1096, 0.0
        %vm2121 = vcmp.gt.f32.partialorder %v1097, 0.0
        %vm2122 = vcmp.gt.f32.partialorder %v1098, 0.0
        %vm2123 = vcmp.gt.f32.partialorder %v1099, 0.0
        %vm2124 = vcmp.gt.f32.partialorder %v1100, 0.0
        %vm2125 = vcmp.gt.f32.partialorder %v1101, 0.0
        %vm2126 = vcmp.gt.f32.partialorder %v1102, 0.0
        %vm2127 = vcmp.gt.f32.partialorder %v1103, 0.0
        %vm2128 = vcmp.gt.f32.partialorder %v1104, 0.0
        %vm2129 = vcmp.gt.f32.partialorder %v1105, 0.0
        %vm2130 = vcmp.gt.f32.partialorder %v1106, 0.0
        %vm2131 = vcmp.gt.f32.partialorder %v1107, 0.0
        %vm2132 = vcmp.gt.f32.partialorder %v1108, 0.0
        %vm2133 = vcmp.gt.f32.partialorder %v1109, 0.0
        %vm2134 = vcmp.gt.f32.partialorder %v1110, 0.0
        %vm2135 = vcmp.gt.f32.partialorder %v1111, 0.0
        %vm2136 = vcmp.gt.f32.partialorder %v1112, 0.0
        %vm2137 = vcmp.gt.f32.partialorder %v1113, 0.0
        %vm2138 = vcmp.gt.f32.partialorder %v1114, 0.0
        %vm2139 = vcmp.gt.f32.partialorder %v1115, 0.0
        %vm2140 = vcmp.gt.f32.partialorder %v1116, 0.0
        %vm2141 = vcmp.gt.f32.partialorder %v1117, 0.0
        %vm2142 = vcmp.gt.f32.partialorder %v1118, 0.0
        %vm2143 = vcmp.gt.f32.partialorder %v1119, 0.0
        %vm2144 = vcmp.gt.f32.partialorder %v1120, 0.0
        %vm2145 = vcmp.gt.f32.partialorder %v1121, 0.0
        %vm2146 = vcmp.gt.f32.partialorder %v1122, 0.0
        %vm2147 = vcmp.gt.f32.partialorder %v1123, 0.0
        %vm2148 = vcmp.gt.f32.partialorder %v1124, 0.0
        %vm2149 = vcmp.gt.f32.partialorder %v1125, 0.0
        %vm2150 = vcmp.gt.f32.partialorder %v1126, 0.0
        %vm2151 = vcmp.gt.f32.partialorder %v1127, 0.0
        %vm2152 = vcmp.gt.f32.partialorder %v1128, 0.0
        %vm2153 = vcmp.gt.f32.partialorder %v1129, 0.0
        %vm2154 = vcmp.gt.f32.partialorder %v1130, 0.0
        %vm2155 = vcmp.gt.f32.partialorder %v1131, 0.0
        %vm2156 = vcmp.gt.f32.partialorder %v1132, 0.0
        %vm2157 = vcmp.gt.f32.partialorder %v1133, 0.0
        %vm2158 = vcmp.gt.f32.partialorder %v1134, 0.0
        %vm2159 = vcmp.gt.f32.partialorder %v1135, 0.0
        %vm2160 = vcmp.gt.f32.partialorder %v1136, 0.0
        %vm2161 = vcmp.gt.f32.partialorder %v1137, 0.0
        %vm2162 = vcmp.gt.f32.partialorder %v1138, 0.0
        %vm2163 = vcmp.gt.f32.partialorder %v1139, 0.0
        %vm2164 = vcmp.gt.f32.partialorder %v1140, 0.0
        %vm2165 = vcmp.gt.f32.partialorder %v1141, 0.0
        %vm2166 = vcmp.gt.f32.partialorder %v1142, 0.0
        %vm2167 = vcmp.gt.f32.partialorder %v1143, 0.0
        %vm2168 = vcmp.gt.f32.partialorder %v1144, 0.0
        %vm2169 = vcmp.gt.f32.partialorder %v1145, 0.0
        %vm2170 = vcmp.gt.f32.partialorder %v1146, 0.0
        %vm2171 = vcmp.gt.f32.partialorder %v1147, 0.0
        %vm2172 = vcmp.gt.f32.partialorder %v1148, 0.0
        %vm2173 = vcmp.gt.f32.partialorder %v1149, 0.0
        %vm2174 = vcmp.gt.f32.partialorder %v1150, 0.0
        %vm2175 = vcmp.gt.f32.partialorder %v1151, 0.0
        %vm2176 = vcmp.gt.f32.partialorder %v1152, 0.0
        %vm2177 = vcmp.gt.f32.partialorder %v1153, 0.0
        %vm2178 = vcmp.gt.f32.partialorder %v1154, 0.0
        %vm2179 = vcmp.gt.f32.partialorder %v1155, 0.0
        %vm2180 = vcmp.gt.f32.partialorder %v1156, 0.0
        %vm2181 = vcmp.gt.f32.partialorder %v1157, 0.0
        %vm2182 = vcmp.gt.f32.partialorder %v1158, 0.0
        %vm2183 = vcmp.gt.f32.partialorder %v1159, 0.0
        %vm2184 = vcmp.gt.f32.partialorder %v1160, 0.0
        %vm2185 = vcmp.gt.f32.partialorder %v1161, 0.0
        %v2186 = vsel %vm1162, 1, 0
        %v2187 = vsel %vm1163, 1, 0
        %v2188 = vsel %vm1164, 1, 0
        %v2189 = vsel %vm1165, 1, 0
        %v2190 = vsel %vm1166, 1, 0
        %v2191 = vsel %vm1167, 1, 0
        %v2192 = vsel %vm1168, 1, 0
        %v2193 = vsel %vm1169, 1, 0
        %v2194 = vsel %vm1170, 1, 0
        %v2195 = vsel %vm1171, 1, 0
        %v2196 = vsel %vm1172, 1, 0
        %v2197 = vsel %vm1173, 1, 0
        %v2198 = vsel %vm1174, 1, 0
        %v2199 = vsel %vm1175, 1, 0
        %v2200 = vsel %vm1176, 1, 0
        %v2201 = vsel %vm1177, 1, 0
        %v2202 = vsel %vm1178, 1, 0
        %v2203 = vsel %vm1179, 1, 0
        %v2204 = vsel %vm1180, 1, 0
        %v2205 = vsel %vm1181, 1, 0
        %v2206 = vsel %vm1182, 1, 0
        %v2207 = vsel %vm1183, 1, 0
        %v2208 = vsel %vm1184, 1, 0
        %v2209 = vsel %vm1185, 1, 0
        %v2210 = vsel %vm1186, 1, 0
        %v2211 = vsel %vm1187, 1, 0
        %v2212 = vsel %vm1188, 1, 0
        %v2213 = vsel %vm1189, 1, 0
        %v2214 = vsel %vm1190, 1, 0
        %v2215 = vsel %vm1191, 1, 0
        %v2216 = vsel %vm1192, 1, 0
        %v2217 = vsel %vm1193, 1, 0
        %v2218 = vsel %vm1194, 1, 0
        %v2219 = vsel %vm1195, 1, 0
        %v2220 = vsel %vm1196, 1, 0
        %v2221 = vsel %vm1197, 1, 0
        %v2222 = vsel %vm1198, 1, 0
        %v2223 = vsel %vm1199, 1, 0
        %v2224 = vsel %vm1200, 1, 0
        %v2225 = vsel %vm1201, 1, 0
        %v2226 = vsel %vm1202, 1, 0
        %v2227 = vsel %vm1203, 1, 0
        %v2228 = vsel %vm1204, 1, 0
        %v2229 = vsel %vm1205, 1, 0
        %v2230 = vsel %vm1206, 1, 0
        %v2231 = vsel %vm1207, 1, 0
        %v2232 = vsel %vm1208, 1, 0
        %v2233 = vsel %vm1209, 1, 0
        %v2234 = vsel %vm1210, 1, 0
        %v2235 = vsel %vm1211, 1, 0
        %v2236 = vsel %vm1212, 1, 0
        %v2237 = vsel %vm1213, 1, 0
        %v2238 = vsel %vm1214, 1, 0
        %v2239 = vsel %vm1215, 1, 0
        %v2240 = vsel %vm1216, 1, 0
        %v2241 = vsel %vm1217, 1, 0
        %v2242 = vsel %vm1218, 1, 0
        %v2243 = vsel %vm1219, 1, 0
        %v2244 = vsel %vm1220, 1, 0
        %v2245 = vsel %vm1221, 1, 0
        %v2246 = vsel %vm1222, 1, 0
        %v2247 = vsel %vm1223, 1, 0
        %v2248 = vsel %vm1224, 1, 0
        %v2249 = vsel %vm1225, 1, 0
        %v2250 = vsel %vm1226, 1, 0
        %v2251 = vsel %vm1227, 1, 0
        %v2252 = vsel %vm1228, 1, 0
        %v2253 = vsel %vm1229, 1, 0
        %v2254 = vsel %vm1230, 1, 0
        %v2255 = vsel %vm1231, 1, 0
        %v2256 = vsel %vm1232, 1, 0
        %v2257 = vsel %vm1233, 1, 0
        %v2258 = vsel %vm1234, 1, 0
        %v2259 = vsel %vm1235, 1, 0
        %v2260 = vsel %vm1236, 1, 0
        %v2261 = vsel %vm1237, 1, 0
        %v2262 = vsel %vm1238, 1, 0
        %v2263 = vsel %vm1239, 1, 0
        %v2264 = vsel %vm1240, 1, 0
        %v2265 = vsel %vm1241, 1, 0
        %v2266 = vsel %vm1242, 1, 0
        %v2267 = vsel %vm1243, 1, 0
        %v2268 = vsel %vm1244, 1, 0
        %v2269 = vsel %vm1245, 1, 0
        %v2270 = vsel %vm1246, 1, 0
        %v2271 = vsel %vm1247, 1, 0
        %v2272 = vsel %vm1248, 1, 0
        %v2273 = vsel %vm1249, 1, 0
        %v2274 = vsel %vm1250, 1, 0
        %v2275 = vsel %vm1251, 1, 0
        %v2276 = vsel %vm1252, 1, 0
        %v2277 = vsel %vm1253, 1, 0
        %v2278 = vsel %vm1254, 1, 0
        %v2279 = vsel %vm1255, 1, 0
        %v2280 = vsel %vm1256, 1, 0
        %v2281 = vsel %vm1257, 1, 0
        %v2282 = vsel %vm1258, 1, 0
        %v2283 = vsel %vm1259, 1, 0
        %v2284 = vsel %vm1260, 1, 0
        %v2285 = vsel %vm1261, 1, 0
        %v2286 = vsel %vm1262, 1, 0
        %v2287 = vsel %vm1263, 1, 0
        %v2288 = vsel %vm1264, 1, 0
        %v2289 = vsel %vm1265, 1, 0
        %v2290 = vsel %vm1266, 1, 0
        %v2291 = vsel %vm1267, 1, 0
        %v2292 = vsel %vm1268, 1, 0
        %v2293 = vsel %vm1269, 1, 0
        %v2294 = vsel %vm1270, 1, 0
        %v2295 = vsel %vm1271, 1, 0
        %v2296 = vsel %vm1272, 1, 0
        %v2297 = vsel %vm1273, 1, 0
        %v2298 = vsel %vm1274, 1, 0
        %v2299 = vsel %vm1275, 1, 0
        %v2300 = vsel %vm1276, 1, 0
        %v2301 = vsel %vm1277, 1, 0
        %v2302 = vsel %vm1278, 1, 0
        %v2303 = vsel %vm1279, 1, 0
        %v2304 = vsel %vm1280, 1, 0
        %v2305 = vsel %vm1281, 1, 0
        %v2306 = vsel %vm1282, 1, 0
        %v2307 = vsel %vm1283, 1, 0
        %v2308 = vsel %vm1284, 1, 0
        %v2309 = vsel %vm1285, 1, 0
        %v2310 = vsel %vm1286, 1, 0
        %v2311 = vsel %vm1287, 1, 0
        %v2312 = vsel %vm1288, 1, 0
        %v2313 = vsel %vm1289, 1, 0
        %v2314 = vsel %vm1290, 1, 0
        %v2315 = vsel %vm1291, 1, 0
        %v2316 = vsel %vm1292, 1, 0
        %v2317 = vsel %vm1293, 1, 0
        %v2318 = vsel %vm1294, 1, 0
        %v2319 = vsel %vm1295, 1, 0
        %v2320 = vsel %vm1296, 1, 0
        %v2321 = vsel %vm1297, 1, 0
        %v2322 = vsel %vm1298, 1, 0
        %v2323 = vsel %vm1299, 1, 0
        %v2324 = vsel %vm1300, 1, 0
        %v2325 = vsel %vm1301, 1, 0
        %v2326 = vsel %vm1302, 1, 0
        %v2327 = vsel %vm1303, 1, 0
        %v2328 = vsel %vm1304, 1, 0
        %v2329 = vsel %vm1305, 1, 0
        %v2330 = vsel %vm1306, 1, 0
        %v2331 = vsel %vm1307, 1, 0
        %v2332 = vsel %vm1308, 1, 0
        %v2333 = vsel %vm1309, 1, 0
        %v2334 = vsel %vm1310, 1, 0
        %v2335 = vsel %vm1311, 1, 0
        %v2336 = vsel %vm1312, 1, 0
        %v2337 = vsel %vm1313, 1, 0
        %v2338 = vsel %vm1314, 1, 0
        %v2339 = vsel %vm1315, 1, 0
        %v2340 = vsel %vm1316, 1, 0
        %v2341 = vsel %vm1317, 1, 0
        %v2342 = vsel %vm1318, 1, 0
        %v2343 = vsel %vm1319, 1, 0
        %v2344 = vsel %vm1320, 1, 0
        %v2345 = vsel %vm1321, 1, 0
        %v2346 = vsel %vm1322, 1, 0
        %v2347 = vsel %vm1323, 1, 0
        %v2348 = vsel %vm1324, 1, 0
        %v2349 = vsel %vm1325, 1, 0
        %v2350 = vsel %vm1326, 1, 0
        %v2351 = vsel %vm1327, 1, 0
        %v2352 = vsel %vm1328, 1, 0
        %v2353 = vsel %vm1329, 1, 0
        %v2354 = vsel %vm1330, 1, 0
        %v2355 = vsel %vm1331, 1, 0
        %v2356 = vsel %vm1332, 1, 0
        %v2357 = vsel %vm1333, 1, 0
        %v2358 = vsel %vm1334, 1, 0
        %v2359 = vsel %vm1335, 1, 0
        %v2360 = vsel %vm1336, 1, 0
        %v2361 = vsel %vm1337, 1, 0
        %v2362 = vsel %vm1338, 1, 0
        %v2363 = vsel %vm1339, 1, 0
        %v2364 = vsel %vm1340, 1, 0
        %v2365 = vsel %vm1341, 1, 0
        %v2366 = vsel %vm1342, 1, 0
        %v2367 = vsel %vm1343, 1, 0
        %v2368 = vsel %vm1344, 1, 0
        %v2369 = vsel %vm1345, 1, 0
        %v2370 = vsel %vm1346, 1, 0
        %v2371 = vsel %vm1347, 1, 0
        %v2372 = vsel %vm1348, 1, 0
        %v2373 = vsel %vm1349, 1, 0
        %v2374 = vsel %vm1350, 1, 0
        %v2375 = vsel %vm1351, 1, 0
        %v2376 = vsel %vm1352, 1, 0
        %v2377 = vsel %vm1353, 1, 0
        %v2378 = vsel %vm1354, 1, 0
        %v2379 = vsel %vm1355, 1, 0
        %v2380 = vsel %vm1356, 1, 0
        %v2381 = vsel %vm1357, 1, 0
        %v2382 = vsel %vm1358, 1, 0
        %v2383 = vsel %vm1359, 1, 0
        %v2384 = vsel %vm1360, 1, 0
        %v2385 = vsel %vm1361, 1, 0
        %v2386 = vsel %vm1362, 1, 0
        %v2387 = vsel %vm1363, 1, 0
        %v2388 = vsel %vm1364, 1, 0
        %v2389 = vsel %vm1365, 1, 0
        %v2390 = vsel %vm1366, 1, 0
        %v2391 = vsel %vm1367, 1, 0
        %v2392 = vsel %vm1368, 1, 0
        %v2393 = vsel %vm1369, 1, 0
        %v2394 = vsel %vm1370, 1, 0
        %v2395 = vsel %vm1371, 1, 0
        %v2396 = vsel %vm1372, 1, 0
        %v2397 = vsel %vm1373, 1, 0
        %v2398 = vsel %vm1374, 1, 0
        %v2399 = vsel %vm1375, 1, 0
        %v2400 = vsel %vm1376, 1, 0
        %v2401 = vsel %vm1377, 1, 0
        %v2402 = vsel %vm1378, 1, 0
        %v2403 = vsel %vm1379, 1, 0
        %v2404 = vsel %vm1380, 1, 0
        %v2405 = vsel %vm1381, 1, 0
        %v2406 = vsel %vm1382, 1, 0
        %v2407 = vsel %vm1383, 1, 0
        %v2408 = vsel %vm1384, 1, 0
        %v2409 = vsel %vm1385, 1, 0
        %v2410 = vsel %vm1386, 1, 0
        %v2411 = vsel %vm1387, 1, 0
        %v2412 = vsel %vm1388, 1, 0
        %v2413 = vsel %vm1389, 1, 0
        %v2414 = vsel %vm1390, 1, 0
        %v2415 = vsel %vm1391, 1, 0
        %v2416 = vsel %vm1392, 1, 0
        %v2417 = vsel %vm1393, 1, 0
        %v2418 = vsel %vm1394, 1, 0
        %v2419 = vsel %vm1395, 1, 0
        %v2420 = vsel %vm1396, 1, 0
        %v2421 = vsel %vm1397, 1, 0
        %v2422 = vsel %vm1398, 1, 0
        %v2423 = vsel %vm1399, 1, 0
        %v2424 = vsel %vm1400, 1, 0
        %v2425 = vsel %vm1401, 1, 0
        %v2426 = vsel %vm1402, 1, 0
        %v2427 = vsel %vm1403, 1, 0
        %v2428 = vsel %vm1404, 1, 0
        %v2429 = vsel %vm1405, 1, 0
        %v2430 = vsel %vm1406, 1, 0
        %v2431 = vsel %vm1407, 1, 0
        %v2432 = vsel %vm1408, 1, 0
        %v2433 = vsel %vm1409, 1, 0
        %v2434 = vsel %vm1410, 1, 0
        %v2435 = vsel %vm1411, 1, 0
        %v2436 = vsel %vm1412, 1, 0
        %v2437 = vsel %vm1413, 1, 0
        %v2438 = vsel %vm1414, 1, 0
        %v2439 = vsel %vm1415, 1, 0
        %v2440 = vsel %vm1416, 1, 0
        %v2441 = vsel %vm1417, 1, 0
        %v2442 = vsel %vm1418, 1, 0
        %v2443 = vsel %vm1419, 1, 0
        %v2444 = vsel %vm1420, 1, 0
        %v2445 = vsel %vm1421, 1, 0
        %v2446 = vsel %vm1422, 1, 0
        %v2447 = vsel %vm1423, 1, 0
        %v2448 = vsel %vm1424, 1, 0
        %v2449 = vsel %vm1425, 1, 0
        %v2450 = vsel %vm1426, 1, 0
        %v2451 = vsel %vm1427, 1, 0
        %v2452 = vsel %vm1428, 1, 0
        %v2453 = vsel %vm1429, 1, 0
        %v2454 = vsel %vm1430, 1, 0
        %v2455 = vsel %vm1431, 1, 0
        %v2456 = vsel %vm1432, 1, 0
        %v2457 = vsel %vm1433, 1, 0
        %v2458 = vsel %vm1434, 1, 0
        %v2459 = vsel %vm1435, 1, 0
        %v2460 = vsel %vm1436, 1, 0
        %v2461 = vsel %vm1437, 1, 0
        %v2462 = vsel %vm1438, 1, 0
        %v2463 = vsel %vm1439, 1, 0
        %v2464 = vsel %vm1440, 1, 0
        %v2465 = vsel %vm1441, 1, 0
        %v2466 = vsel %vm1442, 1, 0
        %v2467 = vsel %vm1443, 1, 0
        %v2468 = vsel %vm1444, 1, 0
        %v2469 = vsel %vm1445, 1, 0
        %v2470 = vsel %vm1446, 1, 0
        %v2471 = vsel %vm1447, 1, 0
        %v2472 = vsel %vm1448, 1, 0
        %v2473 = vsel %vm1449, 1, 0
        %v2474 = vsel %vm1450, 1, 0
        %v2475 = vsel %vm1451, 1, 0
        %v2476 = vsel %vm1452, 1, 0
        %v2477 = vsel %vm1453, 1, 0
        %v2478 = vsel %vm1454, 1, 0
        %v2479 = vsel %vm1455, 1, 0
        %v2480 = vsel %vm1456, 1, 0
        %v2481 = vsel %vm1457, 1, 0
        %v2482 = vsel %vm1458, 1, 0
        %v2483 = vsel %vm1459, 1, 0
        %v2484 = vsel %vm1460, 1, 0
        %v2485 = vsel %vm1461, 1, 0
        %v2486 = vsel %vm1462, 1, 0
        %v2487 = vsel %vm1463, 1, 0
        %v2488 = vsel %vm1464, 1, 0
        %v2489 = vsel %vm1465, 1, 0
        %v2490 = vsel %vm1466, 1, 0
        %v2491 = vsel %vm1467, 1, 0
        %v2492 = vsel %vm1468, 1, 0
        %v2493 = vsel %vm1469, 1, 0
        %v2494 = vsel %vm1470, 1, 0
        %v2495 = vsel %vm1471, 1, 0
        %v2496 = vsel %vm1472, 1, 0
        %v2497 = vsel %vm1473, 1, 0
        %v2498 = vsel %vm1474, 1, 0
        %v2499 = vsel %vm1475, 1, 0
        %v2500 = vsel %vm1476, 1, 0
        %v2501 = vsel %vm1477, 1, 0
        %v2502 = vsel %vm1478, 1, 0
        %v2503 = vsel %vm1479, 1, 0
        %v2504 = vsel %vm1480, 1, 0
        %v2505 = vsel %vm1481, 1, 0
        %v2506 = vsel %vm1482, 1, 0
        %v2507 = vsel %vm1483, 1, 0
        %v2508 = vsel %vm1484, 1, 0
        %v2509 = vsel %vm1485, 1, 0
        %v2510 = vsel %vm1486, 1, 0
        %v2511 = vsel %vm1487, 1, 0
        %v2512 = vsel %vm1488, 1, 0
        %v2513 = vsel %vm1489, 1, 0
        %v2514 = vsel %vm1490, 1, 0
        %v2515 = vsel %vm1491, 1, 0
        %v2516 = vsel %vm1492, 1, 0
        %v2517 = vsel %vm1493, 1, 0
        %v2518 = vsel %vm1494, 1, 0
        %v2519 = vsel %vm1495, 1, 0
        %v2520 = vsel %vm1496, 1, 0
        %v2521 = vsel %vm1497, 1, 0
        %v2522 = vsel %vm1498, 1, 0
        %v2523 = vsel %vm1499, 1, 0
        %v2524 = vsel %vm1500, 1, 0
        %v2525 = vsel %vm1501, 1, 0
        %v2526 = vsel %vm1502, 1, 0
        %v2527 = vsel %vm1503, 1, 0
        %v2528 = vsel %vm1504, 1, 0
        %v2529 = vsel %vm1505, 1, 0
        %v2530 = vsel %vm1506, 1, 0
        %v2531 = vsel %vm1507, 1, 0
        %v2532 = vsel %vm1508, 1, 0
        %v2533 = vsel %vm1509, 1, 0
        %v2534 = vsel %vm1510, 1, 0
        %v2535 = vsel %vm1511, 1, 0
        %v2536 = vsel %vm1512, 1, 0
        %v2537 = vsel %vm1513, 1, 0
        %v2538 = vsel %vm1514, 1, 0
        %v2539 = vsel %vm1515, 1, 0
        %v2540 = vsel %vm1516, 1, 0
        %v2541 = vsel %vm1517, 1, 0
        %v2542 = vsel %vm1518, 1, 0
        %v2543 = vsel %vm1519, 1, 0
        %v2544 = vsel %vm1520, 1, 0
        %v2545 = vsel %vm1521, 1, 0
        %v2546 = vsel %vm1522, 1, 0
        %v2547 = vsel %vm1523, 1, 0
        %v2548 = vsel %vm1524, 1, 0
        %v2549 = vsel %vm1525, 1, 0
        %v2550 = vsel %vm1526, 1, 0
        %v2551 = vsel %vm1527, 1, 0
        %v2552 = vsel %vm1528, 1, 0
        %v2553 = vsel %vm1529, 1, 0
        %v2554 = vsel %vm1530, 1, 0
        %v2555 = vsel %vm1531, 1, 0
        %v2556 = vsel %vm1532, 1, 0
        %v2557 = vsel %vm1533, 1, 0
        %v2558 = vsel %vm1534, 1, 0
        %v2559 = vsel %vm1535, 1, 0
        %v2560 = vsel %vm1536, 1, 0
        %v2561 = vsel %vm1537, 1, 0
        %v2562 = vsel %vm1538, 1, 0
        %v2563 = vsel %vm1539, 1, 0
        %v2564 = vsel %vm1540, 1, 0
        %v2565 = vsel %vm1541, 1, 0
        %v2566 = vsel %vm1542, 1, 0
        %v2567 = vsel %vm1543, 1, 0
        %v2568 = vsel %vm1544, 1, 0
        %v2569 = vsel %vm1545, 1, 0
        %v2570 = vsel %vm1546, 1, 0
        %v2571 = vsel %vm1547, 1, 0
        %v2572 = vsel %vm1548, 1, 0
        %v2573 = vsel %vm1549, 1, 0
        %v2574 = vsel %vm1550, 1, 0
        %v2575 = vsel %vm1551, 1, 0
        %v2576 = vsel %vm1552, 1, 0
        %v2577 = vsel %vm1553, 1, 0
        %v2578 = vsel %vm1554, 1, 0
        %v2579 = vsel %vm1555, 1, 0
        %v2580 = vsel %vm1556, 1, 0
        %v2581 = vsel %vm1557, 1, 0
        %v2582 = vsel %vm1558, 1, 0
        %v2583 = vsel %vm1559, 1, 0
        %v2584 = vsel %vm1560, 1, 0
        %v2585 = vsel %vm1561, 1, 0
        %v2586 = vsel %vm1562, 1, 0
        %v2587 = vsel %vm1563, 1, 0
        %v2588 = vsel %vm1564, 1, 0
        %v2589 = vsel %vm1565, 1, 0
        %v2590 = vsel %vm1566, 1, 0
        %v2591 = vsel %vm1567, 1, 0
        %v2592 = vsel %vm1568, 1, 0
        %v2593 = vsel %vm1569, 1, 0
        %v2594 = vsel %vm1570, 1, 0
        %v2595 = vsel %vm1571, 1, 0
        %v2596 = vsel %vm1572, 1, 0
        %v2597 = vsel %vm1573, 1, 0
        %v2598 = vsel %vm1574, 1, 0
        %v2599 = vsel %vm1575, 1, 0
        %v2600 = vsel %vm1576, 1, 0
        %v2601 = vsel %vm1577, 1, 0
        %v2602 = vsel %vm1578, 1, 0
        %v2603 = vsel %vm1579, 1, 0
        %v2604 = vsel %vm1580, 1, 0
        %v2605 = vsel %vm1581, 1, 0
        %v2606 = vsel %vm1582, 1, 0
        %v2607 = vsel %vm1583, 1, 0
        %v2608 = vsel %vm1584, 1, 0
        %v2609 = vsel %vm1585, 1, 0
        %v2610 = vsel %vm1586, 1, 0
        %v2611 = vsel %vm1587, 1, 0
        %v2612 = vsel %vm1588, 1, 0
        %v2613 = vsel %vm1589, 1, 0
        %v2614 = vsel %vm1590, 1, 0
        %v2615 = vsel %vm1591, 1, 0
        %v2616 = vsel %vm1592, 1, 0
        %v2617 = vsel %vm1593, 1, 0
        %v2618 = vsel %vm1594, 1, 0
        %v2619 = vsel %vm1595, 1, 0
        %v2620 = vsel %vm1596, 1, 0
        %v2621 = vsel %vm1597, 1, 0
        %v2622 = vsel %vm1598, 1, 0
        %v2623 = vsel %vm1599, 1, 0
        %v2624 = vsel %vm1600, 1, 0
        %v2625 = vsel %vm1601, 1, 0
        %v2626 = vsel %vm1602, 1, 0
        %v2627 = vsel %vm1603, 1, 0
        %v2628 = vsel %vm1604, 1, 0
        %v2629 = vsel %vm1605, 1, 0
        %v2630 = vsel %vm1606, 1, 0
        %v2631 = vsel %vm1607, 1, 0
        %v2632 = vsel %vm1608, 1, 0
        %v2633 = vsel %vm1609, 1, 0
        %v2634 = vsel %vm1610, 1, 0
        %v2635 = vsel %vm1611, 1, 0
        %v2636 = vsel %vm1612, 1, 0
        %v2637 = vsel %vm1613, 1, 0
        %v2638 = vsel %vm1614, 1, 0
        %v2639 = vsel %vm1615, 1, 0
        %v2640 = vsel %vm1616, 1, 0
        %v2641 = vsel %vm1617, 1, 0
        %v2642 = vsel %vm1618, 1, 0
        %v2643 = vsel %vm1619, 1, 0
        %v2644 = vsel %vm1620, 1, 0
        %v2645 = vsel %vm1621, 1, 0
        %v2646 = vsel %vm1622, 1, 0
        %v2647 = vsel %vm1623, 1, 0
        %v2648 = vsel %vm1624, 1, 0
        %v2649 = vsel %vm1625, 1, 0
        %v2650 = vsel %vm1626, 1, 0
        %v2651 = vsel %vm1627, 1, 0
        %v2652 = vsel %vm1628, 1, 0
        %v2653 = vsel %vm1629, 1, 0
        %v2654 = vsel %vm1630, 1, 0
        %v2655 = vsel %vm1631, 1, 0
        %v2656 = vsel %vm1632, 1, 0
        %v2657 = vsel %vm1633, 1, 0
        %v2658 = vsel %vm1634, 1, 0
        %v2659 = vsel %vm1635, 1, 0
        %v2660 = vsel %vm1636, 1, 0
        %v2661 = vsel %vm1637, 1, 0
        %v2662 = vsel %vm1638, 1, 0
        %v2663 = vsel %vm1639, 1, 0
        %v2664 = vsel %vm1640, 1, 0
        %v2665 = vsel %vm1641, 1, 0
        %v2666 = vsel %vm1642, 1, 0
        %v2667 = vsel %vm1643, 1, 0
        %v2668 = vsel %vm1644, 1, 0
        %v2669 = vsel %vm1645, 1, 0
        %v2670 = vsel %vm1646, 1, 0
        %v2671 = vsel %vm1647, 1, 0
        %v2672 = vsel %vm1648, 1, 0
        %v2673 = vsel %vm1649, 1, 0
        %v2674 = vsel %vm1650, 1, 0
        %v2675 = vsel %vm1651, 1, 0
        %v2676 = vsel %vm1652, 1, 0
        %v2677 = vsel %vm1653, 1, 0
        %v2678 = vsel %vm1654, 1, 0
        %v2679 = vsel %vm1655, 1, 0
        %v2680 = vsel %vm1656, 1, 0
        %v2681 = vsel %vm1657, 1, 0
        %v2682 = vsel %vm1658, 1, 0
        %v2683 = vsel %vm1659, 1, 0
        %v2684 = vsel %vm1660, 1, 0
        %v2685 = vsel %vm1661, 1, 0
        %v2686 = vsel %vm1662, 1, 0
        %v2687 = vsel %vm1663, 1, 0
        %v2688 = vsel %vm1664, 1, 0
        %v2689 = vsel %vm1665, 1, 0
        %v2690 = vsel %vm1666, 1, 0
        %v2691 = vsel %vm1667, 1, 0
        %v2692 = vsel %vm1668, 1, 0
        %v2693 = vsel %vm1669, 1, 0
        %v2694 = vsel %vm1670, 1, 0
        %v2695 = vsel %vm1671, 1, 0
        %v2696 = vsel %vm1672, 1, 0
        %v2697 = vsel %vm1673, 1, 0
        %v2698 = vsel %vm1674, 1, 0
        %v2699 = vsel %vm1675, 1, 0
        %v2700 = vsel %vm1676, 1, 0
        %v2701 = vsel %vm1677, 1, 0
        %v2702 = vsel %vm1678, 1, 0
        %v2703 = vsel %vm1679, 1, 0
        %v2704 = vsel %vm1680, 1, 0
        %v2705 = vsel %vm1681, 1, 0
        %v2706 = vsel %vm1682, 1, 0
        %v2707 = vsel %vm1683, 1, 0
        %v2708 = vsel %vm1684, 1, 0
        %v2709 = vsel %vm1685, 1, 0
        %v2710 = vsel %vm1686, 1, 0
        %v2711 = vsel %vm1687, 1, 0
        %v2712 = vsel %vm1688, 1, 0
        %v2713 = vsel %vm1689, 1, 0
        %v2714 = vsel %vm1690, 1, 0
        %v2715 = vsel %vm1691, 1, 0
        %v2716 = vsel %vm1692, 1, 0
        %v2717 = vsel %vm1693, 1, 0
        %v2718 = vsel %vm1694, 1, 0
        %v2719 = vsel %vm1695, 1, 0
        %v2720 = vsel %vm1696, 1, 0
        %v2721 = vsel %vm1697, 1, 0
        %v2722 = vsel %vm1698, 1, 0
        %v2723 = vsel %vm1699, 1, 0
        %v2724 = vsel %vm1700, 1, 0
        %v2725 = vsel %vm1701, 1, 0
        %v2726 = vsel %vm1702, 1, 0
        %v2727 = vsel %vm1703, 1, 0
        %v2728 = vsel %vm1704, 1, 0
        %v2729 = vsel %vm1705, 1, 0
        %v2730 = vsel %vm1706, 1, 0
        %v2731 = vsel %vm1707, 1, 0
        %v2732 = vsel %vm1708, 1, 0
        %v2733 = vsel %vm1709, 1, 0
        %v2734 = vsel %vm1710, 1, 0
        %v2735 = vsel %vm1711, 1, 0
        %v2736 = vsel %vm1712, 1, 0
        %v2737 = vsel %vm1713, 1, 0
        %v2738 = vsel %vm1714, 1, 0
        %v2739 = vsel %vm1715, 1, 0
        %v2740 = vsel %vm1716, 1, 0
        %v2741 = vsel %vm1717, 1, 0
        %v2742 = vsel %vm1718, 1, 0
        %v2743 = vsel %vm1719, 1, 0
        %v2744 = vsel %vm1720, 1, 0
        %v2745 = vsel %vm1721, 1, 0
        %v2746 = vsel %vm1722, 1, 0
        %v2747 = vsel %vm1723, 1, 0
        %v2748 = vsel %vm1724, 1, 0
        %v2749 = vsel %vm1725, 1, 0
        %v2750 = vsel %vm1726, 1, 0
        %v2751 = vsel %vm1727, 1, 0
        %v2752 = vsel %vm1728, 1, 0
        %v2753 = vsel %vm1729, 1, 0
        %v2754 = vsel %vm1730, 1, 0
        %v2755 = vsel %vm1731, 1, 0
        %v2756 = vsel %vm1732, 1, 0
        %v2757 = vsel %vm1733, 1, 0
        %v2758 = vsel %vm1734, 1, 0
        %v2759 = vsel %vm1735, 1, 0
        %v2760 = vsel %vm1736, 1, 0
        %v2761 = vsel %vm1737, 1, 0
        %v2762 = vsel %vm1738, 1, 0
        %v2763 = vsel %vm1739, 1, 0
        %v2764 = vsel %vm1740, 1, 0
        %v2765 = vsel %vm1741, 1, 0
        %v2766 = vsel %vm1742, 1, 0
        %v2767 = vsel %vm1743, 1, 0
        %v2768 = vsel %vm1744, 1, 0
        %v2769 = vsel %vm1745, 1, 0
        %v2770 = vsel %vm1746, 1, 0
        %v2771 = vsel %vm1747, 1, 0
        %v2772 = vsel %vm1748, 1, 0
        %v2773 = vsel %vm1749, 1, 0
        %v2774 = vsel %vm1750, 1, 0
        %v2775 = vsel %vm1751, 1, 0
        %v2776 = vsel %vm1752, 1, 0
        %v2777 = vsel %vm1753, 1, 0
        %v2778 = vsel %vm1754, 1, 0
        %v2779 = vsel %vm1755, 1, 0
        %v2780 = vsel %vm1756, 1, 0
        %v2781 = vsel %vm1757, 1, 0
        %v2782 = vsel %vm1758, 1, 0
        %v2783 = vsel %vm1759, 1, 0
        %v2784 = vsel %vm1760, 1, 0
        %v2785 = vsel %vm1761, 1, 0
        %v2786 = vsel %vm1762, 1, 0
        %v2787 = vsel %vm1763, 1, 0
        %v2788 = vsel %vm1764, 1, 0
        %v2789 = vsel %vm1765, 1, 0
        %v2790 = vsel %vm1766, 1, 0
        %v2791 = vsel %vm1767, 1, 0
        %v2792 = vsel %vm1768, 1, 0
        %v2793 = vsel %vm1769, 1, 0
        %v2794 = vsel %vm1770, 1, 0
        %v2795 = vsel %vm1771, 1, 0
        %v2796 = vsel %vm1772, 1, 0
        %v2797 = vsel %vm1773, 1, 0
        %v2798 = vsel %vm1774, 1, 0
        %v2799 = vsel %vm1775, 1, 0
        %v2800 = vsel %vm1776, 1, 0
        %v2801 = vsel %vm1777, 1, 0
        %v2802 = vsel %vm1778, 1, 0
        %v2803 = vsel %vm1779, 1, 0
        %v2804 = vsel %vm1780, 1, 0
        %v2805 = vsel %vm1781, 1, 0
        %v2806 = vsel %vm1782, 1, 0
        %v2807 = vsel %vm1783, 1, 0
        %v2808 = vsel %vm1784, 1, 0
        %v2809 = vsel %vm1785, 1, 0
        %v2810 = vsel %vm1786, 1, 0
        %v2811 = vsel %vm1787, 1, 0
        %v2812 = vsel %vm1788, 1, 0
        %v2813 = vsel %vm1789, 1, 0
        %v2814 = vsel %vm1790, 1, 0
        %v2815 = vsel %vm1791, 1, 0
        %v2816 = vsel %vm1792, 1, 0
        %v2817 = vsel %vm1793, 1, 0
        %v2818 = vsel %vm1794, 1, 0
        %v2819 = vsel %vm1795, 1, 0
        %v2820 = vsel %vm1796, 1, 0
        %v2821 = vsel %vm1797, 1, 0
        %v2822 = vsel %vm1798, 1, 0
        %v2823 = vsel %vm1799, 1, 0
        %v2824 = vsel %vm1800, 1, 0
        %v2825 = vsel %vm1801, 1, 0
        %v2826 = vsel %vm1802, 1, 0
        %v2827 = vsel %vm1803, 1, 0
        %v2828 = vsel %vm1804, 1, 0
        %v2829 = vsel %vm1805, 1, 0
        %v2830 = vsel %vm1806, 1, 0
        %v2831 = vsel %vm1807, 1, 0
        %v2832 = vsel %vm1808, 1, 0
        %v2833 = vsel %vm1809, 1, 0
        %v2834 = vsel %vm1810, 1, 0
        %v2835 = vsel %vm1811, 1, 0
        %v2836 = vsel %vm1812, 1, 0
        %v2837 = vsel %vm1813, 1, 0
        %v2838 = vsel %vm1814, 1, 0
        %v2839 = vsel %vm1815, 1, 0
        %v2840 = vsel %vm1816, 1, 0
        %v2841 = vsel %vm1817, 1, 0
        %v2842 = vsel %vm1818, 1, 0
        %v2843 = vsel %vm1819, 1, 0
        %v2844 = vsel %vm1820, 1, 0
        %v2845 = vsel %vm1821, 1, 0
        %v2846 = vsel %vm1822, 1, 0
        %v2847 = vsel %vm1823, 1, 0
        %v2848 = vsel %vm1824, 1, 0
        %v2849 = vsel %vm1825, 1, 0
        %v2850 = vsel %vm1826, 1, 0
        %v2851 = vsel %vm1827, 1, 0
        %v2852 = vsel %vm1828, 1, 0
        %v2853 = vsel %vm1829, 1, 0
        %v2854 = vsel %vm1830, 1, 0
        %v2855 = vsel %vm1831, 1, 0
        %v2856 = vsel %vm1832, 1, 0
        %v2857 = vsel %vm1833, 1, 0
        %v2858 = vsel %vm1834, 1, 0
        %v2859 = vsel %vm1835, 1, 0
        %v2860 = vsel %vm1836, 1, 0
        %v2861 = vsel %vm1837, 1, 0
        %v2862 = vsel %vm1838, 1, 0
        %v2863 = vsel %vm1839, 1, 0
        %v2864 = vsel %vm1840, 1, 0
        %v2865 = vsel %vm1841, 1, 0
        %v2866 = vsel %vm1842, 1, 0
        %v2867 = vsel %vm1843, 1, 0
        %v2868 = vsel %vm1844, 1, 0
        %v2869 = vsel %vm1845, 1, 0
        %v2870 = vsel %vm1846, 1, 0
        %v2871 = vsel %vm1847, 1, 0
        %v2872 = vsel %vm1848, 1, 0
        %v2873 = vsel %vm1849, 1, 0
        %v2874 = vsel %vm1850, 1, 0
        %v2875 = vsel %vm1851, 1, 0
        %v2876 = vsel %vm1852, 1, 0
        %v2877 = vsel %vm1853, 1, 0
        %v2878 = vsel %vm1854, 1, 0
        %v2879 = vsel %vm1855, 1, 0
        %v2880 = vsel %vm1856, 1, 0
        %v2881 = vsel %vm1857, 1, 0
        %v2882 = vsel %vm1858, 1, 0
        %v2883 = vsel %vm1859, 1, 0
        %v2884 = vsel %vm1860, 1, 0
        %v2885 = vsel %vm1861, 1, 0
        %v2886 = vsel %vm1862, 1, 0
        %v2887 = vsel %vm1863, 1, 0
        %v2888 = vsel %vm1864, 1, 0
        %v2889 = vsel %vm1865, 1, 0
        %v2890 = vsel %vm1866, 1, 0
        %v2891 = vsel %vm1867, 1, 0
        %v2892 = vsel %vm1868, 1, 0
        %v2893 = vsel %vm1869, 1, 0
        %v2894 = vsel %vm1870, 1, 0
        %v2895 = vsel %vm1871, 1, 0
        %v2896 = vsel %vm1872, 1, 0
        %v2897 = vsel %vm1873, 1, 0
        %v2898 = vsel %vm1874, 1, 0
        %v2899 = vsel %vm1875, 1, 0
        %v2900 = vsel %vm1876, 1, 0
        %v2901 = vsel %vm1877, 1, 0
        %v2902 = vsel %vm1878, 1, 0
        %v2903 = vsel %vm1879, 1, 0
        %v2904 = vsel %vm1880, 1, 0
        %v2905 = vsel %vm1881, 1, 0
        %v2906 = vsel %vm1882, 1, 0
        %v2907 = vsel %vm1883, 1, 0
        %v2908 = vsel %vm1884, 1, 0
        %v2909 = vsel %vm1885, 1, 0
        %v2910 = vsel %vm1886, 1, 0
        %v2911 = vsel %vm1887, 1, 0
        %v2912 = vsel %vm1888, 1, 0
        %v2913 = vsel %vm1889, 1, 0
        %v2914 = vsel %vm1890, 1, 0
        %v2915 = vsel %vm1891, 1, 0
        %v2916 = vsel %vm1892, 1, 0
        %v2917 = vsel %vm1893, 1, 0
        %v2918 = vsel %vm1894, 1, 0
        %v2919 = vsel %vm1895, 1, 0
        %v2920 = vsel %vm1896, 1, 0
        %v2921 = vsel %vm1897, 1, 0
        %v2922 = vsel %vm1898, 1, 0
        %v2923 = vsel %vm1899, 1, 0
        %v2924 = vsel %vm1900, 1, 0
        %v2925 = vsel %vm1901, 1, 0
        %v2926 = vsel %vm1902, 1, 0
        %v2927 = vsel %vm1903, 1, 0
        %v2928 = vsel %vm1904, 1, 0
        %v2929 = vsel %vm1905, 1, 0
        %v2930 = vsel %vm1906, 1, 0
        %v2931 = vsel %vm1907, 1, 0
        %v2932 = vsel %vm1908, 1, 0
        %v2933 = vsel %vm1909, 1, 0
        %v2934 = vsel %vm1910, 1, 0
        %v2935 = vsel %vm1911, 1, 0
        %v2936 = vsel %vm1912, 1, 0
        %v2937 = vsel %vm1913, 1, 0
        %v2938 = vsel %vm1914, 1, 0
        %v2939 = vsel %vm1915, 1, 0
        %v2940 = vsel %vm1916, 1, 0
        %v2941 = vsel %vm1917, 1, 0
        %v2942 = vsel %vm1918, 1, 0
        %v2943 = vsel %vm1919, 1, 0
        %v2944 = vsel %vm1920, 1, 0
        %v2945 = vsel %vm1921, 1, 0
        %v2946 = vsel %vm1922, 1, 0
        %v2947 = vsel %vm1923, 1, 0
        %v2948 = vsel %vm1924, 1, 0
        %v2949 = vsel %vm1925, 1, 0
        %v2950 = vsel %vm1926, 1, 0
        %v2951 = vsel %vm1927, 1, 0
        %v2952 = vsel %vm1928, 1, 0
        %v2953 = vsel %vm1929, 1, 0
        %v2954 = vsel %vm1930, 1, 0
        %v2955 = vsel %vm1931, 1, 0
        %v2956 = vsel %vm1932, 1, 0
        %v2957 = vsel %vm1933, 1, 0
        %v2958 = vsel %vm1934, 1, 0
        %v2959 = vsel %vm1935, 1, 0
        %v2960 = vsel %vm1936, 1, 0
        %v2961 = vsel %vm1937, 1, 0
        %v2962 = vsel %vm1938, 1, 0
        %v2963 = vsel %vm1939, 1, 0
        %v2964 = vsel %vm1940, 1, 0
        %v2965 = vsel %vm1941, 1, 0
        %v2966 = vsel %vm1942, 1, 0
        %v2967 = vsel %vm1943, 1, 0
        %v2968 = vsel %vm1944, 1, 0
        %v2969 = vsel %vm1945, 1, 0
        %v2970 = vsel %vm1946, 1, 0
        %v2971 = vsel %vm1947, 1, 0
        %v2972 = vsel %vm1948, 1, 0
        %v2973 = vsel %vm1949, 1, 0
        %v2974 = vsel %vm1950, 1, 0
        %v2975 = vsel %vm1951, 1, 0
        %v2976 = vsel %vm1952, 1, 0
        %v2977 = vsel %vm1953, 1, 0
        %v2978 = vsel %vm1954, 1, 0
        %v2979 = vsel %vm1955, 1, 0
        %v2980 = vsel %vm1956, 1, 0
        %v2981 = vsel %vm1957, 1, 0
        %v2982 = vsel %vm1958, 1, 0
        %v2983 = vsel %vm1959, 1, 0
        %v2984 = vsel %vm1960, 1, 0
        %v2985 = vsel %vm1961, 1, 0
        %v2986 = vsel %vm1962, 1, 0
        %v2987 = vsel %vm1963, 1, 0
        %v2988 = vsel %vm1964, 1, 0
        %v2989 = vsel %vm1965, 1, 0
        %v2990 = vsel %vm1966, 1, 0
        %v2991 = vsel %vm1967, 1, 0
        %v2992 = vsel %vm1968, 1, 0
        %v2993 = vsel %vm1969, 1, 0
        %v2994 = vsel %vm1970, 1, 0
        %v2995 = vsel %vm1971, 1, 0
        %v2996 = vsel %vm1972, 1, 0
        %v2997 = vsel %vm1973, 1, 0
        %v2998 = vsel %vm1974, 1, 0
        %v2999 = vsel %vm1975, 1, 0
        %v3000 = vsel %vm1976, 1, 0
        %v3001 = vsel %vm1977, 1, 0
        %v3002 = vsel %vm1978, 1, 0
        %v3003 = vsel %vm1979, 1, 0
        %v3004 = vsel %vm1980, 1, 0
        %v3005 = vsel %vm1981, 1, 0
        %v3006 = vsel %vm1982, 1, 0
        %v3007 = vsel %vm1983, 1, 0
        %v3008 = vsel %vm1984, 1, 0
        %v3009 = vsel %vm1985, 1, 0
        %v3010 = vsel %vm1986, 1, 0
        %v3011 = vsel %vm1987, 1, 0
        %v3012 = vsel %vm1988, 1, 0
        %v3013 = vsel %vm1989, 1, 0
        %v3014 = vsel %vm1990, 1, 0
        %v3015 = vsel %vm1991, 1, 0
        %v3016 = vsel %vm1992, 1, 0
        %v3017 = vsel %vm1993, 1, 0
        %v3018 = vsel %vm1994, 1, 0
        %v3019 = vsel %vm1995, 1, 0
        %v3020 = vsel %vm1996, 1, 0
        %v3021 = vsel %vm1997, 1, 0
        %v3022 = vsel %vm1998, 1, 0
        %v3023 = vsel %vm1999, 1, 0
        %v3024 = vsel %vm2000, 1, 0
        %v3025 = vsel %vm2001, 1, 0
        %v3026 = vsel %vm2002, 1, 0
        %v3027 = vsel %vm2003, 1, 0
        %v3028 = vsel %vm2004, 1, 0
        %v3029 = vsel %vm2005, 1, 0
        %v3030 = vsel %vm2006, 1, 0
        %v3031 = vsel %vm2007, 1, 0
        %v3032 = vsel %vm2008, 1, 0
        %v3033 = vsel %vm2009, 1, 0
        %v3034 = vsel %vm2010, 1, 0
        %v3035 = vsel %vm2011, 1, 0
        %v3036 = vsel %vm2012, 1, 0
        %v3037 = vsel %vm2013, 1, 0
        %v3038 = vsel %vm2014, 1, 0
        %v3039 = vsel %vm2015, 1, 0
        %v3040 = vsel %vm2016, 1, 0
        %v3041 = vsel %vm2017, 1, 0
        %v3042 = vsel %vm2018, 1, 0
        %v3043 = vsel %vm2019, 1, 0
        %v3044 = vsel %vm2020, 1, 0
        %v3045 = vsel %vm2021, 1, 0
        %v3046 = vsel %vm2022, 1, 0
        %v3047 = vsel %vm2023, 1, 0
        %v3048 = vsel %vm2024, 1, 0
        %v3049 = vsel %vm2025, 1, 0
        %v3050 = vsel %vm2026, 1, 0
        %v3051 = vsel %vm2027, 1, 0
        %v3052 = vsel %vm2028, 1, 0
        %v3053 = vsel %vm2029, 1, 0
        %v3054 = vsel %vm2030, 1, 0
        %v3055 = vsel %vm2031, 1, 0
        %v3056 = vsel %vm2032, 1, 0
        %v3057 = vsel %vm2033, 1, 0
        %v3058 = vsel %vm2034, 1, 0
        %v3059 = vsel %vm2035, 1, 0
        %v3060 = vsel %vm2036, 1, 0
        %v3061 = vsel %vm2037, 1, 0
        %v3062 = vsel %vm2038, 1, 0
        %v3063 = vsel %vm2039, 1, 0
        %v3064 = vsel %vm2040, 1, 0
        %v3065 = vsel %vm2041, 1, 0
        %v3066 = vsel %vm2042, 1, 0
        %v3067 = vsel %vm2043, 1, 0
        %v3068 = vsel %vm2044, 1, 0
        %v3069 = vsel %vm2045, 1, 0
        %v3070 = vsel %vm2046, 1, 0
        %v3071 = vsel %vm2047, 1, 0
        %v3072 = vsel %vm2048, 1, 0
        %v3073 = vsel %vm2049, 1, 0
        %v3074 = vsel %vm2050, 1, 0
        %v3075 = vsel %vm2051, 1, 0
        %v3076 = vsel %vm2052, 1, 0
        %v3077 = vsel %vm2053, 1, 0
        %v3078 = vsel %vm2054, 1, 0
        %v3079 = vsel %vm2055, 1, 0
        %v3080 = vsel %vm2056, 1, 0
        %v3081 = vsel %vm2057, 1, 0
        %v3082 = vsel %vm2058, 1, 0
        %v3083 = vsel %vm2059, 1, 0
        %v3084 = vsel %vm2060, 1, 0
        %v3085 = vsel %vm2061, 1, 0
        %v3086 = vsel %vm2062, 1, 0
        %v3087 = vsel %vm2063, 1, 0
        %v3088 = vsel %vm2064, 1, 0
        %v3089 = vsel %vm2065, 1, 0
        %v3090 = vsel %vm2066, 1, 0
        %v3091 = vsel %vm2067, 1, 0
        %v3092 = vsel %vm2068, 1, 0
        %v3093 = vsel %vm2069, 1, 0
        %v3094 = vsel %vm2070, 1, 0
        %v3095 = vsel %vm2071, 1, 0
        %v3096 = vsel %vm2072, 1, 0
        %v3097 = vsel %vm2073, 1, 0
        %v3098 = vsel %vm2074, 1, 0
        %v3099 = vsel %vm2075, 1, 0
        %v3100 = vsel %vm2076, 1, 0
        %v3101 = vsel %vm2077, 1, 0
        %v3102 = vsel %vm2078, 1, 0
        %v3103 = vsel %vm2079, 1, 0
        %v3104 = vsel %vm2080, 1, 0
        %v3105 = vsel %vm2081, 1, 0
        %v3106 = vsel %vm2082, 1, 0
        %v3107 = vsel %vm2083, 1, 0
        %v3108 = vsel %vm2084, 1, 0
        %v3109 = vsel %vm2085, 1, 0
        %v3110 = vsel %vm2086, 1, 0
        %v3111 = vsel %vm2087, 1, 0
        %v3112 = vsel %vm2088, 1, 0
        %v3113 = vsel %vm2089, 1, 0
        %v3114 = vsel %vm2090, 1, 0
        %v3115 = vsel %vm2091, 1, 0
        %v3116 = vsel %vm2092, 1, 0
        %v3117 = vsel %vm2093, 1, 0
        %v3118 = vsel %vm2094, 1, 0
        %v3119 = vsel %vm2095, 1, 0
        %v3120 = vsel %vm2096, 1, 0
        %v3121 = vsel %vm2097, 1, 0
        %v3122 = vsel %vm2098, 1, 0
        %v3123 = vsel %vm2099, 1, 0
        %v3124 = vsel %vm2100, 1, 0
        %v3125 = vsel %vm2101, 1, 0
        %v3126 = vsel %vm2102, 1, 0
        %v3127 = vsel %vm2103, 1, 0
        %v3128 = vsel %vm2104, 1, 0
        %v3129 = vsel %vm2105, 1, 0
        %v3130 = vsel %vm2106, 1, 0
        %v3131 = vsel %vm2107, 1, 0
        %v3132 = vsel %vm2108, 1, 0
        %v3133 = vsel %vm2109, 1, 0
        %v3134 = vsel %vm2110, 1, 0
        %v3135 = vsel %vm2111, 1, 0
        %v3136 = vsel %vm2112, 1, 0
        %v3137 = vsel %vm2113, 1, 0
        %v3138 = vsel %vm2114, 1, 0
        %v3139 = vsel %vm2115, 1, 0
        %v3140 = vsel %vm2116, 1, 0
        %v3141 = vsel %vm2117, 1, 0
        %v3142 = vsel %vm2118, 1, 0
        %v3143 = vsel %vm2119, 1, 0
        %v3144 = vsel %vm2120, 1, 0
        %v3145 = vsel %vm2121, 1, 0
        %v3146 = vsel %vm2122, 1, 0
        %v3147 = vsel %vm2123, 1, 0
        %v3148 = vsel %vm2124, 1, 0
        %v3149 = vsel %vm2125, 1, 0
        %v3150 = vsel %vm2126, 1, 0
        %v3151 = vsel %vm2127, 1, 0
        %v3152 = vsel %vm2128, 1, 0
        %v3153 = vsel %vm2129, 1, 0
        %v3154 = vsel %vm2130, 1, 0
        %v3155 = vsel %vm2131, 1, 0
        %v3156 = vsel %vm2132, 1, 0
        %v3157 = vsel %vm2133, 1, 0
        %v3158 = vsel %vm2134, 1, 0
        %v3159 = vsel %vm2135, 1, 0
        %v3160 = vsel %vm2136, 1, 0
        %v3161 = vsel %vm2137, 1, 0
        %v3162 = vsel %vm2138, 1, 0
        %v3163 = vsel %vm2139, 1, 0
        %v3164 = vsel %vm2140, 1, 0
        %v3165 = vsel %vm2141, 1, 0
        %v3166 = vsel %vm2142, 1, 0
        %v3167 = vsel %vm2143, 1, 0
        %v3168 = vsel %vm2144, 1, 0
        %v3169 = vsel %vm2145, 1, 0
        %v3170 = vsel %vm2146, 1, 0
        %v3171 = vsel %vm2147, 1, 0
        %v3172 = vsel %vm2148, 1, 0
        %v3173 = vsel %vm2149, 1, 0
        %v3174 = vsel %vm2150, 1, 0
        %v3175 = vsel %vm2151, 1, 0
        %v3176 = vsel %vm2152, 1, 0
        %v3177 = vsel %vm2153, 1, 0
        %v3178 = vsel %vm2154, 1, 0
        %v3179 = vsel %vm2155, 1, 0
        %v3180 = vsel %vm2156, 1, 0
        %v3181 = vsel %vm2157, 1, 0
        %v3182 = vsel %vm2158, 1, 0
        %v3183 = vsel %vm2159, 1, 0
        %v3184 = vsel %vm2160, 1, 0
        %v3185 = vsel %vm2161, 1, 0
        %v3186 = vsel %vm2162, 1, 0
        %v3187 = vsel %vm2163, 1, 0
        %v3188 = vsel %vm2164, 1, 0
        %v3189 = vsel %vm2165, 1, 0
        %v3190 = vsel %vm2166, 1, 0
        %v3191 = vsel %vm2167, 1, 0
        %v3192 = vsel %vm2168, 1, 0
        %v3193 = vsel %vm2169, 1, 0
        %v3194 = vsel %vm2170, 1, 0
        %v3195 = vsel %vm2171, 1, 0
        %v3196 = vsel %vm2172, 1, 0
        %v3197 = vsel %vm2173, 1, 0
        %v3198 = vsel %vm2174, 1, 0
        %v3199 = vsel %vm2175, 1, 0
        %v3200 = vsel %vm2176, 1, 0
        %v3201 = vsel %vm2177, 1, 0
        %v3202 = vsel %vm2178, 1, 0
        %v3203 = vsel %vm2179, 1, 0
        %v3204 = vsel %vm2180, 1, 0
        %v3205 = vsel %vm2181, 1, 0
        %v3206 = vsel %vm2182, 1, 0
        %v3207 = vsel %vm2183, 1, 0
        %v3208 = vsel %vm2184, 1, 0
        %v3209 = vsel %vm2185, 1, 0
        %v3210 = vcvt.s32.f32 %v2186
        %v3211 = vcvt.s32.f32 %v2187
        %v3212 = vcvt.s32.f32 %v2188
        %v3213 = vcvt.s32.f32 %v2189
        %v3214 = vcvt.s32.f32 %v2190
        %v3215 = vcvt.s32.f32 %v2191
        %v3216 = vcvt.s32.f32 %v2192
        %v3217 = vcvt.s32.f32 %v2193
        %v3218 = vcvt.s32.f32 %v2194
        %v3219 = vcvt.s32.f32 %v2195
        %v3220 = vcvt.s32.f32 %v2196
        %v3221 = vcvt.s32.f32 %v2197
        %v3222 = vcvt.s32.f32 %v2198
        %v3223 = vcvt.s32.f32 %v2199
        %v3224 = vcvt.s32.f32 %v2200
        %v3225 = vcvt.s32.f32 %v2201
        %v3226 = vcvt.s32.f32 %v2202
        %v3227 = vcvt.s32.f32 %v2203
        %v3228 = vcvt.s32.f32 %v2204
        %v3229 = vcvt.s32.f32 %v2205
        %v3230 = vcvt.s32.f32 %v2206
        %v3231 = vcvt.s32.f32 %v2207
        %v3232 = vcvt.s32.f32 %v2208
        %v3233 = vcvt.s32.f32 %v2209
        %v3234 = vcvt.s32.f32 %v2210
        %v3235 = vcvt.s32.f32 %v2211
        %v3236 = vcvt.s32.f32 %v2212
        %v3237 = vcvt.s32.f32 %v2213
        %v3238 = vcvt.s32.f32 %v2214
        %v3239 = vcvt.s32.f32 %v2215
        %v3240 = vcvt.s32.f32 %v2216
        %v3241 = vcvt.s32.f32 %v2217
        %v3242 = vcvt.s32.f32 %v2218
        %v3243 = vcvt.s32.f32 %v2219
        %v3244 = vcvt.s32.f32 %v2220
        %v3245 = vcvt.s32.f32 %v2221
        %v3246 = vcvt.s32.f32 %v2222
        %v3247 = vcvt.s32.f32 %v2223
        %v3248 = vcvt.s32.f32 %v2224
        %v3249 = vcvt.s32.f32 %v2225
        %v3250 = vcvt.s32.f32 %v2226
        %v3251 = vcvt.s32.f32 %v2227
        %v3252 = vcvt.s32.f32 %v2228
        %v3253 = vcvt.s32.f32 %v2229
        %v3254 = vcvt.s32.f32 %v2230
        %v3255 = vcvt.s32.f32 %v2231
        %v3256 = vcvt.s32.f32 %v2232
        %v3257 = vcvt.s32.f32 %v2233
        %v3258 = vcvt.s32.f32 %v2234
        %v3259 = vcvt.s32.f32 %v2235
        %v3260 = vcvt.s32.f32 %v2236
        %v3261 = vcvt.s32.f32 %v2237
        %v3262 = vcvt.s32.f32 %v2238
        %v3263 = vcvt.s32.f32 %v2239
        %v3264 = vcvt.s32.f32 %v2240
        %v3265 = vcvt.s32.f32 %v2241
        %v3266 = vcvt.s32.f32 %v2242
        %v3267 = vcvt.s32.f32 %v2243
        %v3268 = vcvt.s32.f32 %v2244
        %v3269 = vcvt.s32.f32 %v2245
        %v3270 = vcvt.s32.f32 %v2246
        %v3271 = vcvt.s32.f32 %v2247
        %v3272 = vcvt.s32.f32 %v2248
        %v3273 = vcvt.s32.f32 %v2249
        %v3274 = vcvt.s32.f32 %v2250
        %v3275 = vcvt.s32.f32 %v2251
        %v3276 = vcvt.s32.f32 %v2252
        %v3277 = vcvt.s32.f32 %v2253
        %v3278 = vcvt.s32.f32 %v2254
        %v3279 = vcvt.s32.f32 %v2255
        %v3280 = vcvt.s32.f32 %v2256
        %v3281 = vcvt.s32.f32 %v2257
        %v3282 = vcvt.s32.f32 %v2258
        %v3283 = vcvt.s32.f32 %v2259
        %v3284 = vcvt.s32.f32 %v2260
        %v3285 = vcvt.s32.f32 %v2261
        %v3286 = vcvt.s32.f32 %v2262
        %v3287 = vcvt.s32.f32 %v2263
        %v3288 = vcvt.s32.f32 %v2264
        %v3289 = vcvt.s32.f32 %v2265
        %v3290 = vcvt.s32.f32 %v2266
        %v3291 = vcvt.s32.f32 %v2267
        %v3292 = vcvt.s32.f32 %v2268
        %v3293 = vcvt.s32.f32 %v2269
        %v3294 = vcvt.s32.f32 %v2270
        %v3295 = vcvt.s32.f32 %v2271
        %v3296 = vcvt.s32.f32 %v2272
        %v3297 = vcvt.s32.f32 %v2273
        %v3298 = vcvt.s32.f32 %v2274
        %v3299 = vcvt.s32.f32 %v2275
        %v3300 = vcvt.s32.f32 %v2276
        %v3301 = vcvt.s32.f32 %v2277
        %v3302 = vcvt.s32.f32 %v2278
        %v3303 = vcvt.s32.f32 %v2279
        %v3304 = vcvt.s32.f32 %v2280
        %v3305 = vcvt.s32.f32 %v2281
        %v3306 = vcvt.s32.f32 %v2282
        %v3307 = vcvt.s32.f32 %v2283
        %v3308 = vcvt.s32.f32 %v2284
        %v3309 = vcvt.s32.f32 %v2285
        %v3310 = vcvt.s32.f32 %v2286
        %v3311 = vcvt.s32.f32 %v2287
        %v3312 = vcvt.s32.f32 %v2288
        %v3313 = vcvt.s32.f32 %v2289
        %v3314 = vcvt.s32.f32 %v2290
        %v3315 = vcvt.s32.f32 %v2291
        %v3316 = vcvt.s32.f32 %v2292
        %v3317 = vcvt.s32.f32 %v2293
        %v3318 = vcvt.s32.f32 %v2294
        %v3319 = vcvt.s32.f32 %v2295
        %v3320 = vcvt.s32.f32 %v2296
        %v3321 = vcvt.s32.f32 %v2297
        %v3322 = vcvt.s32.f32 %v2298
        %v3323 = vcvt.s32.f32 %v2299
        %v3324 = vcvt.s32.f32 %v2300
        %v3325 = vcvt.s32.f32 %v2301
        %v3326 = vcvt.s32.f32 %v2302
        %v3327 = vcvt.s32.f32 %v2303
        %v3328 = vcvt.s32.f32 %v2304
        %v3329 = vcvt.s32.f32 %v2305
        %v3330 = vcvt.s32.f32 %v2306
        %v3331 = vcvt.s32.f32 %v2307
        %v3332 = vcvt.s32.f32 %v2308
        %v3333 = vcvt.s32.f32 %v2309
        %v3334 = vcvt.s32.f32 %v2310
        %v3335 = vcvt.s32.f32 %v2311
        %v3336 = vcvt.s32.f32 %v2312
        %v3337 = vcvt.s32.f32 %v2313
        %v3338 = vcvt.s32.f32 %v2314
        %v3339 = vcvt.s32.f32 %v2315
        %v3340 = vcvt.s32.f32 %v2316
        %v3341 = vcvt.s32.f32 %v2317
        %v3342 = vcvt.s32.f32 %v2318
        %v3343 = vcvt.s32.f32 %v2319
        %v3344 = vcvt.s32.f32 %v2320
        %v3345 = vcvt.s32.f32 %v2321
        %v3346 = vcvt.s32.f32 %v2322
        %v3347 = vcvt.s32.f32 %v2323
        %v3348 = vcvt.s32.f32 %v2324
        %v3349 = vcvt.s32.f32 %v2325
        %v3350 = vcvt.s32.f32 %v2326
        %v3351 = vcvt.s32.f32 %v2327
        %v3352 = vcvt.s32.f32 %v2328
        %v3353 = vcvt.s32.f32 %v2329
        %v3354 = vcvt.s32.f32 %v2330
        %v3355 = vcvt.s32.f32 %v2331
        %v3356 = vcvt.s32.f32 %v2332
        %v3357 = vcvt.s32.f32 %v2333
        %v3358 = vcvt.s32.f32 %v2334
        %v3359 = vcvt.s32.f32 %v2335
        %v3360 = vcvt.s32.f32 %v2336
        %v3361 = vcvt.s32.f32 %v2337
        %v3362 = vcvt.s32.f32 %v2338
        %v3363 = vcvt.s32.f32 %v2339
        %v3364 = vcvt.s32.f32 %v2340
        %v3365 = vcvt.s32.f32 %v2341
        %v3366 = vcvt.s32.f32 %v2342
        %v3367 = vcvt.s32.f32 %v2343
        %v3368 = vcvt.s32.f32 %v2344
        %v3369 = vcvt.s32.f32 %v2345
        %v3370 = vcvt.s32.f32 %v2346
        %v3371 = vcvt.s32.f32 %v2347
        %v3372 = vcvt.s32.f32 %v2348
        %v3373 = vcvt.s32.f32 %v2349
        %v3374 = vcvt.s32.f32 %v2350
        %v3375 = vcvt.s32.f32 %v2351
        %v3376 = vcvt.s32.f32 %v2352
        %v3377 = vcvt.s32.f32 %v2353
        %v3378 = vcvt.s32.f32 %v2354
        %v3379 = vcvt.s32.f32 %v2355
        %v3380 = vcvt.s32.f32 %v2356
        %v3381 = vcvt.s32.f32 %v2357
        %v3382 = vcvt.s32.f32 %v2358
        %v3383 = vcvt.s32.f32 %v2359
        %v3384 = vcvt.s32.f32 %v2360
        %v3385 = vcvt.s32.f32 %v2361
        %v3386 = vcvt.s32.f32 %v2362
        %v3387 = vcvt.s32.f32 %v2363
        %v3388 = vcvt.s32.f32 %v2364
        %v3389 = vcvt.s32.f32 %v2365
        %v3390 = vcvt.s32.f32 %v2366
        %v3391 = vcvt.s32.f32 %v2367
        %v3392 = vcvt.s32.f32 %v2368
        %v3393 = vcvt.s32.f32 %v2369
        %v3394 = vcvt.s32.f32 %v2370
        %v3395 = vcvt.s32.f32 %v2371
        %v3396 = vcvt.s32.f32 %v2372
        %v3397 = vcvt.s32.f32 %v2373
        %v3398 = vcvt.s32.f32 %v2374
        %v3399 = vcvt.s32.f32 %v2375
        %v3400 = vcvt.s32.f32 %v2376
        %v3401 = vcvt.s32.f32 %v2377
        %v3402 = vcvt.s32.f32 %v2378
        %v3403 = vcvt.s32.f32 %v2379
        %v3404 = vcvt.s32.f32 %v2380
        %v3405 = vcvt.s32.f32 %v2381
        %v3406 = vcvt.s32.f32 %v2382
        %v3407 = vcvt.s32.f32 %v2383
        %v3408 = vcvt.s32.f32 %v2384
        %v3409 = vcvt.s32.f32 %v2385
        %v3410 = vcvt.s32.f32 %v2386
        %v3411 = vcvt.s32.f32 %v2387
        %v3412 = vcvt.s32.f32 %v2388
        %v3413 = vcvt.s32.f32 %v2389
        %v3414 = vcvt.s32.f32 %v2390
        %v3415 = vcvt.s32.f32 %v2391
        %v3416 = vcvt.s32.f32 %v2392
        %v3417 = vcvt.s32.f32 %v2393
        %v3418 = vcvt.s32.f32 %v2394
        %v3419 = vcvt.s32.f32 %v2395
        %v3420 = vcvt.s32.f32 %v2396
        %v3421 = vcvt.s32.f32 %v2397
        %v3422 = vcvt.s32.f32 %v2398
        %v3423 = vcvt.s32.f32 %v2399
        %v3424 = vcvt.s32.f32 %v2400
        %v3425 = vcvt.s32.f32 %v2401
        %v3426 = vcvt.s32.f32 %v2402
        %v3427 = vcvt.s32.f32 %v2403
        %v3428 = vcvt.s32.f32 %v2404
        %v3429 = vcvt.s32.f32 %v2405
        %v3430 = vcvt.s32.f32 %v2406
        %v3431 = vcvt.s32.f32 %v2407
        %v3432 = vcvt.s32.f32 %v2408
        %v3433 = vcvt.s32.f32 %v2409
        %v3434 = vcvt.s32.f32 %v2410
        %v3435 = vcvt.s32.f32 %v2411
        %v3436 = vcvt.s32.f32 %v2412
        %v3437 = vcvt.s32.f32 %v2413
        %v3438 = vcvt.s32.f32 %v2414
        %v3439 = vcvt.s32.f32 %v2415
        %v3440 = vcvt.s32.f32 %v2416
        %v3441 = vcvt.s32.f32 %v2417
        %v3442 = vcvt.s32.f32 %v2418
        %v3443 = vcvt.s32.f32 %v2419
        %v3444 = vcvt.s32.f32 %v2420
        %v3445 = vcvt.s32.f32 %v2421
        %v3446 = vcvt.s32.f32 %v2422
        %v3447 = vcvt.s32.f32 %v2423
        %v3448 = vcvt.s32.f32 %v2424
        %v3449 = vcvt.s32.f32 %v2425
        %v3450 = vcvt.s32.f32 %v2426
        %v3451 = vcvt.s32.f32 %v2427
        %v3452 = vcvt.s32.f32 %v2428
        %v3453 = vcvt.s32.f32 %v2429
        %v3454 = vcvt.s32.f32 %v2430
        %v3455 = vcvt.s32.f32 %v2431
        %v3456 = vcvt.s32.f32 %v2432
        %v3457 = vcvt.s32.f32 %v2433
        %v3458 = vcvt.s32.f32 %v2434
        %v3459 = vcvt.s32.f32 %v2435
        %v3460 = vcvt.s32.f32 %v2436
        %v3461 = vcvt.s32.f32 %v2437
        %v3462 = vcvt.s32.f32 %v2438
        %v3463 = vcvt.s32.f32 %v2439
        %v3464 = vcvt.s32.f32 %v2440
        %v3465 = vcvt.s32.f32 %v2441
        %v3466 = vcvt.s32.f32 %v2442
        %v3467 = vcvt.s32.f32 %v2443
        %v3468 = vcvt.s32.f32 %v2444
        %v3469 = vcvt.s32.f32 %v2445
        %v3470 = vcvt.s32.f32 %v2446
        %v3471 = vcvt.s32.f32 %v2447
        %v3472 = vcvt.s32.f32 %v2448
        %v3473 = vcvt.s32.f32 %v2449
        %v3474 = vcvt.s32.f32 %v2450
        %v3475 = vcvt.s32.f32 %v2451
        %v3476 = vcvt.s32.f32 %v2452
        %v3477 = vcvt.s32.f32 %v2453
        %v3478 = vcvt.s32.f32 %v2454
        %v3479 = vcvt.s32.f32 %v2455
        %v3480 = vcvt.s32.f32 %v2456
        %v3481 = vcvt.s32.f32 %v2457
        %v3482 = vcvt.s32.f32 %v2458
        %v3483 = vcvt.s32.f32 %v2459
        %v3484 = vcvt.s32.f32 %v2460
        %v3485 = vcvt.s32.f32 %v2461
        %v3486 = vcvt.s32.f32 %v2462
        %v3487 = vcvt.s32.f32 %v2463
        %v3488 = vcvt.s32.f32 %v2464
        %v3489 = vcvt.s32.f32 %v2465
        %v3490 = vcvt.s32.f32 %v2466
        %v3491 = vcvt.s32.f32 %v2467
        %v3492 = vcvt.s32.f32 %v2468
        %v3493 = vcvt.s32.f32 %v2469
        %v3494 = vcvt.s32.f32 %v2470
        %v3495 = vcvt.s32.f32 %v2471
        %v3496 = vcvt.s32.f32 %v2472
        %v3497 = vcvt.s32.f32 %v2473
        %v3498 = vcvt.s32.f32 %v2474
        %v3499 = vcvt.s32.f32 %v2475
        %v3500 = vcvt.s32.f32 %v2476
        %v3501 = vcvt.s32.f32 %v2477
        %v3502 = vcvt.s32.f32 %v2478
        %v3503 = vcvt.s32.f32 %v2479
        %v3504 = vcvt.s32.f32 %v2480
        %v3505 = vcvt.s32.f32 %v2481
        %v3506 = vcvt.s32.f32 %v2482
        %v3507 = vcvt.s32.f32 %v2483
        %v3508 = vcvt.s32.f32 %v2484
        %v3509 = vcvt.s32.f32 %v2485
        %v3510 = vcvt.s32.f32 %v2486
        %v3511 = vcvt.s32.f32 %v2487
        %v3512 = vcvt.s32.f32 %v2488
        %v3513 = vcvt.s32.f32 %v2489
        %v3514 = vcvt.s32.f32 %v2490
        %v3515 = vcvt.s32.f32 %v2491
        %v3516 = vcvt.s32.f32 %v2492
        %v3517 = vcvt.s32.f32 %v2493
        %v3518 = vcvt.s32.f32 %v2494
        %v3519 = vcvt.s32.f32 %v2495
        %v3520 = vcvt.s32.f32 %v2496
        %v3521 = vcvt.s32.f32 %v2497
        %v3522 = vcvt.s32.f32 %v2498
        %v3523 = vcvt.s32.f32 %v2499
        %v3524 = vcvt.s32.f32 %v2500
        %v3525 = vcvt.s32.f32 %v2501
        %v3526 = vcvt.s32.f32 %v2502
        %v3527 = vcvt.s32.f32 %v2503
        %v3528 = vcvt.s32.f32 %v2504
        %v3529 = vcvt.s32.f32 %v2505
        %v3530 = vcvt.s32.f32 %v2506
        %v3531 = vcvt.s32.f32 %v2507
        %v3532 = vcvt.s32.f32 %v2508
        %v3533 = vcvt.s32.f32 %v2509
        %v3534 = vcvt.s32.f32 %v2510
        %v3535 = vcvt.s32.f32 %v2511
        %v3536 = vcvt.s32.f32 %v2512
        %v3537 = vcvt.s32.f32 %v2513
        %v3538 = vcvt.s32.f32 %v2514
        %v3539 = vcvt.s32.f32 %v2515
        %v3540 = vcvt.s32.f32 %v2516
        %v3541 = vcvt.s32.f32 %v2517
        %v3542 = vcvt.s32.f32 %v2518
        %v3543 = vcvt.s32.f32 %v2519
        %v3544 = vcvt.s32.f32 %v2520
        %v3545 = vcvt.s32.f32 %v2521
        %v3546 = vcvt.s32.f32 %v2522
        %v3547 = vcvt.s32.f32 %v2523
        %v3548 = vcvt.s32.f32 %v2524
        %v3549 = vcvt.s32.f32 %v2525
        %v3550 = vcvt.s32.f32 %v2526
        %v3551 = vcvt.s32.f32 %v2527
        %v3552 = vcvt.s32.f32 %v2528
        %v3553 = vcvt.s32.f32 %v2529
        %v3554 = vcvt.s32.f32 %v2530
        %v3555 = vcvt.s32.f32 %v2531
        %v3556 = vcvt.s32.f32 %v2532
        %v3557 = vcvt.s32.f32 %v2533
        %v3558 = vcvt.s32.f32 %v2534
        %v3559 = vcvt.s32.f32 %v2535
        %v3560 = vcvt.s32.f32 %v2536
        %v3561 = vcvt.s32.f32 %v2537
        %v3562 = vcvt.s32.f32 %v2538
        %v3563 = vcvt.s32.f32 %v2539
        %v3564 = vcvt.s32.f32 %v2540
        %v3565 = vcvt.s32.f32 %v2541
        %v3566 = vcvt.s32.f32 %v2542
        %v3567 = vcvt.s32.f32 %v2543
        %v3568 = vcvt.s32.f32 %v2544
        %v3569 = vcvt.s32.f32 %v2545
        %v3570 = vcvt.s32.f32 %v2546
        %v3571 = vcvt.s32.f32 %v2547
        %v3572 = vcvt.s32.f32 %v2548
        %v3573 = vcvt.s32.f32 %v2549
        %v3574 = vcvt.s32.f32 %v2550
        %v3575 = vcvt.s32.f32 %v2551
        %v3576 = vcvt.s32.f32 %v2552
        %v3577 = vcvt.s32.f32 %v2553
        %v3578 = vcvt.s32.f32 %v2554
        %v3579 = vcvt.s32.f32 %v2555
        %v3580 = vcvt.s32.f32 %v2556
        %v3581 = vcvt.s32.f32 %v2557
        %v3582 = vcvt.s32.f32 %v2558
        %v3583 = vcvt.s32.f32 %v2559
        %v3584 = vcvt.s32.f32 %v2560
        %v3585 = vcvt.s32.f32 %v2561
        %v3586 = vcvt.s32.f32 %v2562
        %v3587 = vcvt.s32.f32 %v2563
        %v3588 = vcvt.s32.f32 %v2564
        %v3589 = vcvt.s32.f32 %v2565
        %v3590 = vcvt.s32.f32 %v2566
        %v3591 = vcvt.s32.f32 %v2567
        %v3592 = vcvt.s32.f32 %v2568
        %v3593 = vcvt.s32.f32 %v2569
        %v3594 = vcvt.s32.f32 %v2570
        %v3595 = vcvt.s32.f32 %v2571
        %v3596 = vcvt.s32.f32 %v2572
        %v3597 = vcvt.s32.f32 %v2573
        %v3598 = vcvt.s32.f32 %v2574
        %v3599 = vcvt.s32.f32 %v2575
        %v3600 = vcvt.s32.f32 %v2576
        %v3601 = vcvt.s32.f32 %v2577
        %v3602 = vcvt.s32.f32 %v2578
        %v3603 = vcvt.s32.f32 %v2579
        %v3604 = vcvt.s32.f32 %v2580
        %v3605 = vcvt.s32.f32 %v2581
        %v3606 = vcvt.s32.f32 %v2582
        %v3607 = vcvt.s32.f32 %v2583
        %v3608 = vcvt.s32.f32 %v2584
        %v3609 = vcvt.s32.f32 %v2585
        %v3610 = vcvt.s32.f32 %v2586
        %v3611 = vcvt.s32.f32 %v2587
        %v3612 = vcvt.s32.f32 %v2588
        %v3613 = vcvt.s32.f32 %v2589
        %v3614 = vcvt.s32.f32 %v2590
        %v3615 = vcvt.s32.f32 %v2591
        %v3616 = vcvt.s32.f32 %v2592
        %v3617 = vcvt.s32.f32 %v2593
        %v3618 = vcvt.s32.f32 %v2594
        %v3619 = vcvt.s32.f32 %v2595
        %v3620 = vcvt.s32.f32 %v2596
        %v3621 = vcvt.s32.f32 %v2597
        %v3622 = vcvt.s32.f32 %v2598
        %v3623 = vcvt.s32.f32 %v2599
        %v3624 = vcvt.s32.f32 %v2600
        %v3625 = vcvt.s32.f32 %v2601
        %v3626 = vcvt.s32.f32 %v2602
        %v3627 = vcvt.s32.f32 %v2603
        %v3628 = vcvt.s32.f32 %v2604
        %v3629 = vcvt.s32.f32 %v2605
        %v3630 = vcvt.s32.f32 %v2606
        %v3631 = vcvt.s32.f32 %v2607
        %v3632 = vcvt.s32.f32 %v2608
        %v3633 = vcvt.s32.f32 %v2609
        %v3634 = vcvt.s32.f32 %v2610
        %v3635 = vcvt.s32.f32 %v2611
        %v3636 = vcvt.s32.f32 %v2612
        %v3637 = vcvt.s32.f32 %v2613
        %v3638 = vcvt.s32.f32 %v2614
        %v3639 = vcvt.s32.f32 %v2615
        %v3640 = vcvt.s32.f32 %v2616
        %v3641 = vcvt.s32.f32 %v2617
        %v3642 = vcvt.s32.f32 %v2618
        %v3643 = vcvt.s32.f32 %v2619
        %v3644 = vcvt.s32.f32 %v2620
        %v3645 = vcvt.s32.f32 %v2621
        %v3646 = vcvt.s32.f32 %v2622
        %v3647 = vcvt.s32.f32 %v2623
        %v3648 = vcvt.s32.f32 %v2624
        %v3649 = vcvt.s32.f32 %v2625
        %v3650 = vcvt.s32.f32 %v2626
        %v3651 = vcvt.s32.f32 %v2627
        %v3652 = vcvt.s32.f32 %v2628
        %v3653 = vcvt.s32.f32 %v2629
        %v3654 = vcvt.s32.f32 %v2630
        %v3655 = vcvt.s32.f32 %v2631
        %v3656 = vcvt.s32.f32 %v2632
        %v3657 = vcvt.s32.f32 %v2633
        %v3658 = vcvt.s32.f32 %v2634
        %v3659 = vcvt.s32.f32 %v2635
        %v3660 = vcvt.s32.f32 %v2636
        %v3661 = vcvt.s32.f32 %v2637
        %v3662 = vcvt.s32.f32 %v2638
        %v3663 = vcvt.s32.f32 %v2639
        %v3664 = vcvt.s32.f32 %v2640
        %v3665 = vcvt.s32.f32 %v2641
        %v3666 = vcvt.s32.f32 %v2642
        %v3667 = vcvt.s32.f32 %v2643
        %v3668 = vcvt.s32.f32 %v2644
        %v3669 = vcvt.s32.f32 %v2645
        %v3670 = vcvt.s32.f32 %v2646
        %v3671 = vcvt.s32.f32 %v2647
        %v3672 = vcvt.s32.f32 %v2648
        %v3673 = vcvt.s32.f32 %v2649
        %v3674 = vcvt.s32.f32 %v2650
        %v3675 = vcvt.s32.f32 %v2651
        %v3676 = vcvt.s32.f32 %v2652
        %v3677 = vcvt.s32.f32 %v2653
        %v3678 = vcvt.s32.f32 %v2654
        %v3679 = vcvt.s32.f32 %v2655
        %v3680 = vcvt.s32.f32 %v2656
        %v3681 = vcvt.s32.f32 %v2657
        %v3682 = vcvt.s32.f32 %v2658
        %v3683 = vcvt.s32.f32 %v2659
        %v3684 = vcvt.s32.f32 %v2660
        %v3685 = vcvt.s32.f32 %v2661
        %v3686 = vcvt.s32.f32 %v2662
        %v3687 = vcvt.s32.f32 %v2663
        %v3688 = vcvt.s32.f32 %v2664
        %v3689 = vcvt.s32.f32 %v2665
        %v3690 = vcvt.s32.f32 %v2666
        %v3691 = vcvt.s32.f32 %v2667
        %v3692 = vcvt.s32.f32 %v2668
        %v3693 = vcvt.s32.f32 %v2669
        %v3694 = vcvt.s32.f32 %v2670
        %v3695 = vcvt.s32.f32 %v2671
        %v3696 = vcvt.s32.f32 %v2672
        %v3697 = vcvt.s32.f32 %v2673
        %v3698 = vcvt.s32.f32 %v2674
        %v3699 = vcvt.s32.f32 %v2675
        %v3700 = vcvt.s32.f32 %v2676
        %v3701 = vcvt.s32.f32 %v2677
        %v3702 = vcvt.s32.f32 %v2678
        %v3703 = vcvt.s32.f32 %v2679
        %v3704 = vcvt.s32.f32 %v2680
        %v3705 = vcvt.s32.f32 %v2681
        %v3706 = vcvt.s32.f32 %v2682
        %v3707 = vcvt.s32.f32 %v2683
        %v3708 = vcvt.s32.f32 %v2684
        %v3709 = vcvt.s32.f32 %v2685
        %v3710 = vcvt.s32.f32 %v2686
        %v3711 = vcvt.s32.f32 %v2687
        %v3712 = vcvt.s32.f32 %v2688
        %v3713 = vcvt.s32.f32 %v2689
        %v3714 = vcvt.s32.f32 %v2690
        %v3715 = vcvt.s32.f32 %v2691
        %v3716 = vcvt.s32.f32 %v2692
        %v3717 = vcvt.s32.f32 %v2693
        %v3718 = vcvt.s32.f32 %v2694
        %v3719 = vcvt.s32.f32 %v2695
        %v3720 = vcvt.s32.f32 %v2696
        %v3721 = vcvt.s32.f32 %v2697
        %v3722 = vcvt.s32.f32 %v2698
        %v3723 = vcvt.s32.f32 %v2699
        %v3724 = vcvt.s32.f32 %v2700
        %v3725 = vcvt.s32.f32 %v2701
        %v3726 = vcvt.s32.f32 %v2702
        %v3727 = vcvt.s32.f32 %v2703
        %v3728 = vcvt.s32.f32 %v2704
        %v3729 = vcvt.s32.f32 %v2705
        %v3730 = vcvt.s32.f32 %v2706
        %v3731 = vcvt.s32.f32 %v2707
        %v3732 = vcvt.s32.f32 %v2708
        %v3733 = vcvt.s32.f32 %v2709
        %v3734 = vcvt.s32.f32 %v2710
        %v3735 = vcvt.s32.f32 %v2711
        %v3736 = vcvt.s32.f32 %v2712
        %v3737 = vcvt.s32.f32 %v2713
        %v3738 = vcvt.s32.f32 %v2714
        %v3739 = vcvt.s32.f32 %v2715
        %v3740 = vcvt.s32.f32 %v2716
        %v3741 = vcvt.s32.f32 %v2717
        %v3742 = vcvt.s32.f32 %v2718
        %v3743 = vcvt.s32.f32 %v2719
        %v3744 = vcvt.s32.f32 %v2720
        %v3745 = vcvt.s32.f32 %v2721
        %v3746 = vcvt.s32.f32 %v2722
        %v3747 = vcvt.s32.f32 %v2723
        %v3748 = vcvt.s32.f32 %v2724
        %v3749 = vcvt.s32.f32 %v2725
        %v3750 = vcvt.s32.f32 %v2726
        %v3751 = vcvt.s32.f32 %v2727
        %v3752 = vcvt.s32.f32 %v2728
        %v3753 = vcvt.s32.f32 %v2729
        %v3754 = vcvt.s32.f32 %v2730
        %v3755 = vcvt.s32.f32 %v2731
        %v3756 = vcvt.s32.f32 %v2732
        %v3757 = vcvt.s32.f32 %v2733
        %v3758 = vcvt.s32.f32 %v2734
        %v3759 = vcvt.s32.f32 %v2735
        %v3760 = vcvt.s32.f32 %v2736
        %v3761 = vcvt.s32.f32 %v2737
        %v3762 = vcvt.s32.f32 %v2738
        %v3763 = vcvt.s32.f32 %v2739
        %v3764 = vcvt.s32.f32 %v2740
        %v3765 = vcvt.s32.f32 %v2741
        %v3766 = vcvt.s32.f32 %v2742
        %v3767 = vcvt.s32.f32 %v2743
        %v3768 = vcvt.s32.f32 %v2744
        %v3769 = vcvt.s32.f32 %v2745
        %v3770 = vcvt.s32.f32 %v2746
        %v3771 = vcvt.s32.f32 %v2747
        %v3772 = vcvt.s32.f32 %v2748
        %v3773 = vcvt.s32.f32 %v2749
        %v3774 = vcvt.s32.f32 %v2750
        %v3775 = vcvt.s32.f32 %v2751
        %v3776 = vcvt.s32.f32 %v2752
        %v3777 = vcvt.s32.f32 %v2753
        %v3778 = vcvt.s32.f32 %v2754
        %v3779 = vcvt.s32.f32 %v2755
        %v3780 = vcvt.s32.f32 %v2756
        %v3781 = vcvt.s32.f32 %v2757
        %v3782 = vcvt.s32.f32 %v2758
        %v3783 = vcvt.s32.f32 %v2759
        %v3784 = vcvt.s32.f32 %v2760
        %v3785 = vcvt.s32.f32 %v2761
        %v3786 = vcvt.s32.f32 %v2762
        %v3787 = vcvt.s32.f32 %v2763
        %v3788 = vcvt.s32.f32 %v2764
        %v3789 = vcvt.s32.f32 %v2765
        %v3790 = vcvt.s32.f32 %v2766
        %v3791 = vcvt.s32.f32 %v2767
        %v3792 = vcvt.s32.f32 %v2768
        %v3793 = vcvt.s32.f32 %v2769
        %v3794 = vcvt.s32.f32 %v2770
        %v3795 = vcvt.s32.f32 %v2771
        %v3796 = vcvt.s32.f32 %v2772
        %v3797 = vcvt.s32.f32 %v2773
        %v3798 = vcvt.s32.f32 %v2774
        %v3799 = vcvt.s32.f32 %v2775
        %v3800 = vcvt.s32.f32 %v2776
        %v3801 = vcvt.s32.f32 %v2777
        %v3802 = vcvt.s32.f32 %v2778
        %v3803 = vcvt.s32.f32 %v2779
        %v3804 = vcvt.s32.f32 %v2780
        %v3805 = vcvt.s32.f32 %v2781
        %v3806 = vcvt.s32.f32 %v2782
        %v3807 = vcvt.s32.f32 %v2783
        %v3808 = vcvt.s32.f32 %v2784
        %v3809 = vcvt.s32.f32 %v2785
        %v3810 = vcvt.s32.f32 %v2786
        %v3811 = vcvt.s32.f32 %v2787
        %v3812 = vcvt.s32.f32 %v2788
        %v3813 = vcvt.s32.f32 %v2789
        %v3814 = vcvt.s32.f32 %v2790
        %v3815 = vcvt.s32.f32 %v2791
        %v3816 = vcvt.s32.f32 %v2792
        %v3817 = vcvt.s32.f32 %v2793
        %v3818 = vcvt.s32.f32 %v2794
        %v3819 = vcvt.s32.f32 %v2795
        %v3820 = vcvt.s32.f32 %v2796
        %v3821 = vcvt.s32.f32 %v2797
        %v3822 = vcvt.s32.f32 %v2798
        %v3823 = vcvt.s32.f32 %v2799
        %v3824 = vcvt.s32.f32 %v2800
        %v3825 = vcvt.s32.f32 %v2801
        %v3826 = vcvt.s32.f32 %v2802
        %v3827 = vcvt.s32.f32 %v2803
        %v3828 = vcvt.s32.f32 %v2804
        %v3829 = vcvt.s32.f32 %v2805
        %v3830 = vcvt.s32.f32 %v2806
        %v3831 = vcvt.s32.f32 %v2807
        %v3832 = vcvt.s32.f32 %v2808
        %v3833 = vcvt.s32.f32 %v2809
        %v3834 = vcvt.s32.f32 %v2810
        %v3835 = vcvt.s32.f32 %v2811
        %v3836 = vcvt.s32.f32 %v2812
        %v3837 = vcvt.s32.f32 %v2813
        %v3838 = vcvt.s32.f32 %v2814
        %v3839 = vcvt.s32.f32 %v2815
        %v3840 = vcvt.s32.f32 %v2816
        %v3841 = vcvt.s32.f32 %v2817
        %v3842 = vcvt.s32.f32 %v2818
        %v3843 = vcvt.s32.f32 %v2819
        %v3844 = vcvt.s32.f32 %v2820
        %v3845 = vcvt.s32.f32 %v2821
        %v3846 = vcvt.s32.f32 %v2822
        %v3847 = vcvt.s32.f32 %v2823
        %v3848 = vcvt.s32.f32 %v2824
        %v3849 = vcvt.s32.f32 %v2825
        %v3850 = vcvt.s32.f32 %v2826
        %v3851 = vcvt.s32.f32 %v2827
        %v3852 = vcvt.s32.f32 %v2828
        %v3853 = vcvt.s32.f32 %v2829
        %v3854 = vcvt.s32.f32 %v2830
        %v3855 = vcvt.s32.f32 %v2831
        %v3856 = vcvt.s32.f32 %v2832
        %v3857 = vcvt.s32.f32 %v2833
        %v3858 = vcvt.s32.f32 %v2834
        %v3859 = vcvt.s32.f32 %v2835
        %v3860 = vcvt.s32.f32 %v2836
        %v3861 = vcvt.s32.f32 %v2837
        %v3862 = vcvt.s32.f32 %v2838
        %v3863 = vcvt.s32.f32 %v2839
        %v3864 = vcvt.s32.f32 %v2840
        %v3865 = vcvt.s32.f32 %v2841
        %v3866 = vcvt.s32.f32 %v2842
        %v3867 = vcvt.s32.f32 %v2843
        %v3868 = vcvt.s32.f32 %v2844
        %v3869 = vcvt.s32.f32 %v2845
        %v3870 = vcvt.s32.f32 %v2846
        %v3871 = vcvt.s32.f32 %v2847
        %v3872 = vcvt.s32.f32 %v2848
        %v3873 = vcvt.s32.f32 %v2849
        %v3874 = vcvt.s32.f32 %v2850
        %v3875 = vcvt.s32.f32 %v2851
        %v3876 = vcvt.s32.f32 %v2852
        %v3877 = vcvt.s32.f32 %v2853
        %v3878 = vcvt.s32.f32 %v2854
        %v3879 = vcvt.s32.f32 %v2855
        %v3880 = vcvt.s32.f32 %v2856
        %v3881 = vcvt.s32.f32 %v2857
        %v3882 = vcvt.s32.f32 %v2858
        %v3883 = vcvt.s32.f32 %v2859
        %v3884 = vcvt.s32.f32 %v2860
        %v3885 = vcvt.s32.f32 %v2861
        %v3886 = vcvt.s32.f32 %v2862
        %v3887 = vcvt.s32.f32 %v2863
        %v3888 = vcvt.s32.f32 %v2864
        %v3889 = vcvt.s32.f32 %v2865
        %v3890 = vcvt.s32.f32 %v2866
        %v3891 = vcvt.s32.f32 %v2867
        %v3892 = vcvt.s32.f32 %v2868
        %v3893 = vcvt.s32.f32 %v2869
        %v3894 = vcvt.s32.f32 %v2870
        %v3895 = vcvt.s32.f32 %v2871
        %v3896 = vcvt.s32.f32 %v2872
        %v3897 = vcvt.s32.f32 %v2873
        %v3898 = vcvt.s32.f32 %v2874
        %v3899 = vcvt.s32.f32 %v2875
        %v3900 = vcvt.s32.f32 %v2876
        %v3901 = vcvt.s32.f32 %v2877
        %v3902 = vcvt.s32.f32 %v2878
        %v3903 = vcvt.s32.f32 %v2879
        %v3904 = vcvt.s32.f32 %v2880
        %v3905 = vcvt.s32.f32 %v2881
        %v3906 = vcvt.s32.f32 %v2882
        %v3907 = vcvt.s32.f32 %v2883
        %v3908 = vcvt.s32.f32 %v2884
        %v3909 = vcvt.s32.f32 %v2885
        %v3910 = vcvt.s32.f32 %v2886
        %v3911 = vcvt.s32.f32 %v2887
        %v3912 = vcvt.s32.f32 %v2888
        %v3913 = vcvt.s32.f32 %v2889
        %v3914 = vcvt.s32.f32 %v2890
        %v3915 = vcvt.s32.f32 %v2891
        %v3916 = vcvt.s32.f32 %v2892
        %v3917 = vcvt.s32.f32 %v2893
        %v3918 = vcvt.s32.f32 %v2894
        %v3919 = vcvt.s32.f32 %v2895
        %v3920 = vcvt.s32.f32 %v2896
        %v3921 = vcvt.s32.f32 %v2897
        %v3922 = vcvt.s32.f32 %v2898
        %v3923 = vcvt.s32.f32 %v2899
        %v3924 = vcvt.s32.f32 %v2900
        %v3925 = vcvt.s32.f32 %v2901
        %v3926 = vcvt.s32.f32 %v2902
        %v3927 = vcvt.s32.f32 %v2903
        %v3928 = vcvt.s32.f32 %v2904
        %v3929 = vcvt.s32.f32 %v2905
        %v3930 = vcvt.s32.f32 %v2906
        %v3931 = vcvt.s32.f32 %v2907
        %v3932 = vcvt.s32.f32 %v2908
        %v3933 = vcvt.s32.f32 %v2909
        %v3934 = vcvt.s32.f32 %v2910
        %v3935 = vcvt.s32.f32 %v2911
        %v3936 = vcvt.s32.f32 %v2912
        %v3937 = vcvt.s32.f32 %v2913
        %v3938 = vcvt.s32.f32 %v2914
        %v3939 = vcvt.s32.f32 %v2915
        %v3940 = vcvt.s32.f32 %v2916
        %v3941 = vcvt.s32.f32 %v2917
        %v3942 = vcvt.s32.f32 %v2918
        %v3943 = vcvt.s32.f32 %v2919
        %v3944 = vcvt.s32.f32 %v2920
        %v3945 = vcvt.s32.f32 %v2921
        %v3946 = vcvt.s32.f32 %v2922
        %v3947 = vcvt.s32.f32 %v2923
        %v3948 = vcvt.s32.f32 %v2924
        %v3949 = vcvt.s32.f32 %v2925
        %v3950 = vcvt.s32.f32 %v2926
        %v3951 = vcvt.s32.f32 %v2927
        %v3952 = vcvt.s32.f32 %v2928
        %v3953 = vcvt.s32.f32 %v2929
        %v3954 = vcvt.s32.f32 %v2930
        %v3955 = vcvt.s32.f32 %v2931
        %v3956 = vcvt.s32.f32 %v2932
        %v3957 = vcvt.s32.f32 %v2933
        %v3958 = vcvt.s32.f32 %v2934
        %v3959 = vcvt.s32.f32 %v2935
        %v3960 = vcvt.s32.f32 %v2936
        %v3961 = vcvt.s32.f32 %v2937
        %v3962 = vcvt.s32.f32 %v2938
        %v3963 = vcvt.s32.f32 %v2939
        %v3964 = vcvt.s32.f32 %v2940
        %v3965 = vcvt.s32.f32 %v2941
        %v3966 = vcvt.s32.f32 %v2942
        %v3967 = vcvt.s32.f32 %v2943
        %v3968 = vcvt.s32.f32 %v2944
        %v3969 = vcvt.s32.f32 %v2945
        %v3970 = vcvt.s32.f32 %v2946
        %v3971 = vcvt.s32.f32 %v2947
        %v3972 = vcvt.s32.f32 %v2948
        %v3973 = vcvt.s32.f32 %v2949
        %v3974 = vcvt.s32.f32 %v2950
        %v3975 = vcvt.s32.f32 %v2951
        %v3976 = vcvt.s32.f32 %v2952
        %v3977 = vcvt.s32.f32 %v2953
        %v3978 = vcvt.s32.f32 %v2954
        %v3979 = vcvt.s32.f32 %v2955
        %v3980 = vcvt.s32.f32 %v2956
        %v3981 = vcvt.s32.f32 %v2957
        %v3982 = vcvt.s32.f32 %v2958
        %v3983 = vcvt.s32.f32 %v2959
        %v3984 = vcvt.s32.f32 %v2960
        %v3985 = vcvt.s32.f32 %v2961
        %v3986 = vcvt.s32.f32 %v2962
        %v3987 = vcvt.s32.f32 %v2963
        %v3988 = vcvt.s32.f32 %v2964
        %v3989 = vcvt.s32.f32 %v2965
        %v3990 = vcvt.s32.f32 %v2966
        %v3991 = vcvt.s32.f32 %v2967
        %v3992 = vcvt.s32.f32 %v2968
        %v3993 = vcvt.s32.f32 %v2969
        %v3994 = vcvt.s32.f32 %v2970
        %v3995 = vcvt.s32.f32 %v2971
        %v3996 = vcvt.s32.f32 %v2972
        %v3997 = vcvt.s32.f32 %v2973
        %v3998 = vcvt.s32.f32 %v2974
        %v3999 = vcvt.s32.f32 %v2975
        %v4000 = vcvt.s32.f32 %v2976
        %v4001 = vcvt.s32.f32 %v2977
        %v4002 = vcvt.s32.f32 %v2978
        %v4003 = vcvt.s32.f32 %v2979
        %v4004 = vcvt.s32.f32 %v2980
        %v4005 = vcvt.s32.f32 %v2981
        %v4006 = vcvt.s32.f32 %v2982
        %v4007 = vcvt.s32.f32 %v2983
        %v4008 = vcvt.s32.f32 %v2984
        %v4009 = vcvt.s32.f32 %v2985
        %v4010 = vcvt.s32.f32 %v2986
        %v4011 = vcvt.s32.f32 %v2987
        %v4012 = vcvt.s32.f32 %v2988
        %v4013 = vcvt.s32.f32 %v2989
        %v4014 = vcvt.s32.f32 %v2990
        %v4015 = vcvt.s32.f32 %v2991
        %v4016 = vcvt.s32.f32 %v2992
        %v4017 = vcvt.s32.f32 %v2993
        %v4018 = vcvt.s32.f32 %v2994
        %v4019 = vcvt.s32.f32 %v2995
        %v4020 = vcvt.s32.f32 %v2996
        %v4021 = vcvt.s32.f32 %v2997
        %v4022 = vcvt.s32.f32 %v2998
        %v4023 = vcvt.s32.f32 %v2999
        %v4024 = vcvt.s32.f32 %v3000
        %v4025 = vcvt.s32.f32 %v3001
        %v4026 = vcvt.s32.f32 %v3002
        %v4027 = vcvt.s32.f32 %v3003
        %v4028 = vcvt.s32.f32 %v3004
        %v4029 = vcvt.s32.f32 %v3005
        %v4030 = vcvt.s32.f32 %v3006
        %v4031 = vcvt.s32.f32 %v3007
        %v4032 = vcvt.s32.f32 %v3008
        %v4033 = vcvt.s32.f32 %v3009
        %v4034 = vcvt.s32.f32 %v3010
        %v4035 = vcvt.s32.f32 %v3011
        %v4036 = vcvt.s32.f32 %v3012
        %v4037 = vcvt.s32.f32 %v3013
        %v4038 = vcvt.s32.f32 %v3014
        %v4039 = vcvt.s32.f32 %v3015
        %v4040 = vcvt.s32.f32 %v3016
        %v4041 = vcvt.s32.f32 %v3017
        %v4042 = vcvt.s32.f32 %v3018
        %v4043 = vcvt.s32.f32 %v3019
        %v4044 = vcvt.s32.f32 %v3020
        %v4045 = vcvt.s32.f32 %v3021
        %v4046 = vcvt.s32.f32 %v3022
        %v4047 = vcvt.s32.f32 %v3023
        %v4048 = vcvt.s32.f32 %v3024
        %v4049 = vcvt.s32.f32 %v3025
        %v4050 = vcvt.s32.f32 %v3026
        %v4051 = vcvt.s32.f32 %v3027
        %v4052 = vcvt.s32.f32 %v3028
        %v4053 = vcvt.s32.f32 %v3029
        %v4054 = vcvt.s32.f32 %v3030
        %v4055 = vcvt.s32.f32 %v3031
        %v4056 = vcvt.s32.f32 %v3032
        %v4057 = vcvt.s32.f32 %v3033
        %v4058 = vcvt.s32.f32 %v3034
        %v4059 = vcvt.s32.f32 %v3035
        %v4060 = vcvt.s32.f32 %v3036
        %v4061 = vcvt.s32.f32 %v3037
        %v4062 = vcvt.s32.f32 %v3038
        %v4063 = vcvt.s32.f32 %v3039
        %v4064 = vcvt.s32.f32 %v3040
        %v4065 = vcvt.s32.f32 %v3041
        %v4066 = vcvt.s32.f32 %v3042
        %v4067 = vcvt.s32.f32 %v3043
        %v4068 = vcvt.s32.f32 %v3044
        %v4069 = vcvt.s32.f32 %v3045
        %v4070 = vcvt.s32.f32 %v3046
        %v4071 = vcvt.s32.f32 %v3047
        %v4072 = vcvt.s32.f32 %v3048
        %v4073 = vcvt.s32.f32 %v3049
        %v4074 = vcvt.s32.f32 %v3050
        %v4075 = vcvt.s32.f32 %v3051
        %v4076 = vcvt.s32.f32 %v3052
        %v4077 = vcvt.s32.f32 %v3053
        %v4078 = vcvt.s32.f32 %v3054
        %v4079 = vcvt.s32.f32 %v3055
        %v4080 = vcvt.s32.f32 %v3056
        %v4081 = vcvt.s32.f32 %v3057
        %v4082 = vcvt.s32.f32 %v3058
        %v4083 = vcvt.s32.f32 %v3059
        %v4084 = vcvt.s32.f32 %v3060
        %v4085 = vcvt.s32.f32 %v3061
        %v4086 = vcvt.s32.f32 %v3062
        %v4087 = vcvt.s32.f32 %v3063
        %v4088 = vcvt.s32.f32 %v3064
        %v4089 = vcvt.s32.f32 %v3065
        %v4090 = vcvt.s32.f32 %v3066
        %v4091 = vcvt.s32.f32 %v3067
        %v4092 = vcvt.s32.f32 %v3068
        %v4093 = vcvt.s32.f32 %v3069
        %v4094 = vcvt.s32.f32 %v3070
        %v4095 = vcvt.s32.f32 %v3071
        %v4096 = vcvt.s32.f32 %v3072
        %v4097 = vcvt.s32.f32 %v3073
        %v4098 = vcvt.s32.f32 %v3074
        %v4099 = vcvt.s32.f32 %v3075
        %v4100 = vcvt.s32.f32 %v3076
        %v4101 = vcvt.s32.f32 %v3077
        %v4102 = vcvt.s32.f32 %v3078
        %v4103 = vcvt.s32.f32 %v3079
        %v4104 = vcvt.s32.f32 %v3080
        %v4105 = vcvt.s32.f32 %v3081
        %v4106 = vcvt.s32.f32 %v3082
        %v4107 = vcvt.s32.f32 %v3083
        %v4108 = vcvt.s32.f32 %v3084
        %v4109 = vcvt.s32.f32 %v3085
        %v4110 = vcvt.s32.f32 %v3086
        %v4111 = vcvt.s32.f32 %v3087
        %v4112 = vcvt.s32.f32 %v3088
        %v4113 = vcvt.s32.f32 %v3089
        %v4114 = vcvt.s32.f32 %v3090
        %v4115 = vcvt.s32.f32 %v3091
        %v4116 = vcvt.s32.f32 %v3092
        %v4117 = vcvt.s32.f32 %v3093
        %v4118 = vcvt.s32.f32 %v3094
        %v4119 = vcvt.s32.f32 %v3095
        %v4120 = vcvt.s32.f32 %v3096
        %v4121 = vcvt.s32.f32 %v3097
        %v4122 = vcvt.s32.f32 %v3098
        %v4123 = vcvt.s32.f32 %v3099
        %v4124 = vcvt.s32.f32 %v3100
        %v4125 = vcvt.s32.f32 %v3101
        %v4126 = vcvt.s32.f32 %v3102
        %v4127 = vcvt.s32.f32 %v3103
        %v4128 = vcvt.s32.f32 %v3104
        %v4129 = vcvt.s32.f32 %v3105
        %v4130 = vcvt.s32.f32 %v3106
        %v4131 = vcvt.s32.f32 %v3107
        %v4132 = vcvt.s32.f32 %v3108
        %v4133 = vcvt.s32.f32 %v3109
        %v4134 = vcvt.s32.f32 %v3110
        %v4135 = vcvt.s32.f32 %v3111
        %v4136 = vcvt.s32.f32 %v3112
        %v4137 = vcvt.s32.f32 %v3113
        %v4138 = vcvt.s32.f32 %v3114
        %v4139 = vcvt.s32.f32 %v3115
        %v4140 = vcvt.s32.f32 %v3116
        %v4141 = vcvt.s32.f32 %v3117
        %v4142 = vcvt.s32.f32 %v3118
        %v4143 = vcvt.s32.f32 %v3119
        %v4144 = vcvt.s32.f32 %v3120
        %v4145 = vcvt.s32.f32 %v3121
        %v4146 = vcvt.s32.f32 %v3122
        %v4147 = vcvt.s32.f32 %v3123
        %v4148 = vcvt.s32.f32 %v3124
        %v4149 = vcvt.s32.f32 %v3125
        %v4150 = vcvt.s32.f32 %v3126
        %v4151 = vcvt.s32.f32 %v3127
        %v4152 = vcvt.s32.f32 %v3128
        %v4153 = vcvt.s32.f32 %v3129
        %v4154 = vcvt.s32.f32 %v3130
        %v4155 = vcvt.s32.f32 %v3131
        %v4156 = vcvt.s32.f32 %v3132
        %v4157 = vcvt.s32.f32 %v3133
        %v4158 = vcvt.s32.f32 %v3134
        %v4159 = vcvt.s32.f32 %v3135
        %v4160 = vcvt.s32.f32 %v3136
        %v4161 = vcvt.s32.f32 %v3137
        %v4162 = vcvt.s32.f32 %v3138
        %v4163 = vcvt.s32.f32 %v3139
        %v4164 = vcvt.s32.f32 %v3140
        %v4165 = vcvt.s32.f32 %v3141
        %v4166 = vcvt.s32.f32 %v3142
        %v4167 = vcvt.s32.f32 %v3143
        %v4168 = vcvt.s32.f32 %v3144
        %v4169 = vcvt.s32.f32 %v3145
        %v4170 = vcvt.s32.f32 %v3146
        %v4171 = vcvt.s32.f32 %v3147
        %v4172 = vcvt.s32.f32 %v3148
        %v4173 = vcvt.s32.f32 %v3149
        %v4174 = vcvt.s32.f32 %v3150
        %v4175 = vcvt.s32.f32 %v3151
        %v4176 = vcvt.s32.f32 %v3152
        %v4177 = vcvt.s32.f32 %v3153
        %v4178 = vcvt.s32.f32 %v3154
        %v4179 = vcvt.s32.f32 %v3155
        %v4180 = vcvt.s32.f32 %v3156
        %v4181 = vcvt.s32.f32 %v3157
        %v4182 = vcvt.s32.f32 %v3158
        %v4183 = vcvt.s32.f32 %v3159
        %v4184 = vcvt.s32.f32 %v3160
        %v4185 = vcvt.s32.f32 %v3161
        %v4186 = vcvt.s32.f32 %v3162
        %v4187 = vcvt.s32.f32 %v3163
        %v4188 = vcvt.s32.f32 %v3164
        %v4189 = vcvt.s32.f32 %v3165
        %v4190 = vcvt.s32.f32 %v3166
        %v4191 = vcvt.s32.f32 %v3167
        %v4192 = vcvt.s32.f32 %v3168
        %v4193 = vcvt.s32.f32 %v3169
        %v4194 = vcvt.s32.f32 %v3170
        %v4195 = vcvt.s32.f32 %v3171
        %v4196 = vcvt.s32.f32 %v3172
        %v4197 = vcvt.s32.f32 %v3173
        %v4198 = vcvt.s32.f32 %v3174
        %v4199 = vcvt.s32.f32 %v3175
        %v4200 = vcvt.s32.f32 %v3176
        %v4201 = vcvt.s32.f32 %v3177
        %v4202 = vcvt.s32.f32 %v3178
        %v4203 = vcvt.s32.f32 %v3179
        %v4204 = vcvt.s32.f32 %v3180
        %v4205 = vcvt.s32.f32 %v3181
        %v4206 = vcvt.s32.f32 %v3182
        %v4207 = vcvt.s32.f32 %v3183
        %v4208 = vcvt.s32.f32 %v3184
        %v4209 = vcvt.s32.f32 %v3185
        %v4210 = vcvt.s32.f32 %v3186
        %v4211 = vcvt.s32.f32 %v3187
        %v4212 = vcvt.s32.f32 %v3188
        %v4213 = vcvt.s32.f32 %v3189
        %v4214 = vcvt.s32.f32 %v3190
        %v4215 = vcvt.s32.f32 %v3191
        %v4216 = vcvt.s32.f32 %v3192
        %v4217 = vcvt.s32.f32 %v3193
        %v4218 = vcvt.s32.f32 %v3194
        %v4219 = vcvt.s32.f32 %v3195
        %v4220 = vcvt.s32.f32 %v3196
        %v4221 = vcvt.s32.f32 %v3197
        %v4222 = vcvt.s32.f32 %v3198
        %v4223 = vcvt.s32.f32 %v3199
        %v4224 = vcvt.s32.f32 %v3200
        %v4225 = vcvt.s32.f32 %v3201
        %v4226 = vcvt.s32.f32 %v3202
        %v4227 = vcvt.s32.f32 %v3203
        %v4228 = vcvt.s32.f32 %v3204
        %v4229 = vcvt.s32.f32 %v3205
        %v4230 = vcvt.s32.f32 %v3206
        %v4231 = vcvt.s32.f32 %v3207
        %v4232 = vcvt.s32.f32 %v3208
        %v4233 = vcvt.s32.f32 %v3209
        %4234 = vst [vmem:[%s135] sm:$0xff] %v3210
        %4235 = vst [vmem:[%s135 + $0x8] sm:$0xff] %v3211
        %4236 = vst [vmem:[%s135 + $0x10] sm:$0xff] %v3212
        %4237 = vst [vmem:[%s135 + $0x18] sm:$0xff] %v3213
        %4238 = vst [vmem:[%s135 + $0x20] sm:$0xff] %v3214
        %4239 = vst [vmem:[%s135 + $0x28] sm:$0xff] %v3215
        %4240 = vst [vmem:[%s135 + $0x30] sm:$0xff] %v3216
        %4241 = vst [vmem:[%s135 + $0x38] sm:$0xff] %v3217
        %4242 = vst [vmem:[%s135 + $0x40] sm:$0xff] %v3218
        %4243 = vst [vmem:[%s135 + $0x48] sm:$0xff] %v3219
        %4244 = vst [vmem:[%s135 + $0x50] sm:$0xff] %v3220
        %4245 = vst [vmem:[%s135 + $0x58] sm:$0xff] %v3221
        %4246 = vst [vmem:[%s135 + $0x60] sm:$0xff] %v3222
        %4247 = vst [vmem:[%s135 + $0x68] sm:$0xff] %v3223
        %4248 = vst [vmem:[%s135 + $0x70] sm:$0xff] %v3224
        %4249 = vst [vmem:[%s135 + $0x78] sm:$0xff] %v3225
        %4250 = vst [vmem:[%s135 + $0x80] sm:$0xff] %v3226
        %4251 = vst [vmem:[%s135 + $0x88] sm:$0xff] %v3227
        %4252 = vst [vmem:[%s135 + $0x90] sm:$0xff] %v3228
        %4253 = vst [vmem:[%s135 + $0x98] sm:$0xff] %v3229
        %4254 = vst [vmem:[%s135 + $0xa0] sm:$0xff] %v3230
        %4255 = vst [vmem:[%s135 + $0xa8] sm:$0xff] %v3231
        %4256 = vst [vmem:[%s135 + $0xb0] sm:$0xff] %v3232
        %4257 = vst [vmem:[%s135 + $0xb8] sm:$0xff] %v3233
        %4258 = vst [vmem:[%s135 + $0xc0] sm:$0xff] %v3234
        %4259 = vst [vmem:[%s135 + $0xc8] sm:$0xff] %v3235
        %4260 = vst [vmem:[%s135 + $0xd0] sm:$0xff] %v3236
        %4261 = vst [vmem:[%s135 + $0xd8] sm:$0xff] %v3237
        %4262 = vst [vmem:[%s135 + $0xe0] sm:$0xff] %v3238
        %4263 = vst [vmem:[%s135 + $0xe8] sm:$0xff] %v3239
        %4264 = vst [vmem:[%s135 + $0xf0] sm:$0xff] %v3240
        %4265 = vst [vmem:[%s135 + $0xf8] sm:$0xff] %v3241
        %4266 = vst [vmem:[%s135 + $0x100] sm:$0xff] %v3242
        %4267 = vst [vmem:[%s135 + $0x108] sm:$0xff] %v3243
        %4268 = vst [vmem:[%s135 + $0x110] sm:$0xff] %v3244
        %4269 = vst [vmem:[%s135 + $0x118] sm:$0xff] %v3245
        %4270 = vst [vmem:[%s135 + $0x120] sm:$0xff] %v3246
        %4271 = vst [vmem:[%s135 + $0x128] sm:$0xff] %v3247
        %4272 = vst [vmem:[%s135 + $0x130] sm:$0xff] %v3248
        %4273 = vst [vmem:[%s135 + $0x138] sm:$0xff] %v3249
        %4274 = vst [vmem:[%s135 + $0x140] sm:$0xff] %v3250
        %4275 = vst [vmem:[%s135 + $0x148] sm:$0xff] %v3251
        %4276 = vst [vmem:[%s135 + $0x150] sm:$0xff] %v3252
        %4277 = vst [vmem:[%s135 + $0x158] sm:$0xff] %v3253
        %4278 = vst [vmem:[%s135 + $0x160] sm:$0xff] %v3254
        %4279 = vst [vmem:[%s135 + $0x168] sm:$0xff] %v3255
        %4280 = vst [vmem:[%s135 + $0x170] sm:$0xff] %v3256
        %4281 = vst [vmem:[%s135 + $0x178] sm:$0xff] %v3257
        %4282 = vst [vmem:[%s135 + $0x180] sm:$0xff] %v3258
        %4283 = vst [vmem:[%s135 + $0x188] sm:$0xff] %v3259
        %4284 = vst [vmem:[%s135 + $0x190] sm:$0xff] %v3260
        %4285 = vst [vmem:[%s135 + $0x198] sm:$0xff] %v3261
        %4286 = vst [vmem:[%s135 + $0x1a0] sm:$0xff] %v3262
        %4287 = vst [vmem:[%s135 + $0x1a8] sm:$0xff] %v3263
        %4288 = vst [vmem:[%s135 + $0x1b0] sm:$0xff] %v3264
        %4289 = vst [vmem:[%s135 + $0x1b8] sm:$0xff] %v3265
        %4290 = vst [vmem:[%s135 + $0x1c0] sm:$0xff] %v3266
        %4291 = vst [vmem:[%s135 + $0x1c8] sm:$0xff] %v3267
        %4292 = vst [vmem:[%s135 + $0x1d0] sm:$0xff] %v3268
        %4293 = vst [vmem:[%s135 + $0x1d8] sm:$0xff] %v3269
        %4294 = vst [vmem:[%s135 + $0x1e0] sm:$0xff] %v3270
        %4295 = vst [vmem:[%s135 + $0x1e8] sm:$0xff] %v3271
        %4296 = vst [vmem:[%s135 + $0x1f0] sm:$0xff] %v3272
        %4297 = vst [vmem:[%s135 + $0x1f8] sm:$0xff] %v3273
        %4298 = vst [vmem:[%s135 + $0x200] sm:$0xff] %v3274
        %4299 = vst [vmem:[%s135 + $0x208] sm:$0xff] %v3275
        %4300 = vst [vmem:[%s135 + $0x210] sm:$0xff] %v3276
        %4301 = vst [vmem:[%s135 + $0x218] sm:$0xff] %v3277
        %4302 = vst [vmem:[%s135 + $0x220] sm:$0xff] %v3278
        %4303 = vst [vmem:[%s135 + $0x228] sm:$0xff] %v3279
        %4304 = vst [vmem:[%s135 + $0x230] sm:$0xff] %v3280
        %4305 = vst [vmem:[%s135 + $0x238] sm:$0xff] %v3281
        %4306 = vst [vmem:[%s135 + $0x240] sm:$0xff] %v3282
        %4307 = vst [vmem:[%s135 + $0x248] sm:$0xff] %v3283
        %4308 = vst [vmem:[%s135 + $0x250] sm:$0xff] %v3284
        %4309 = vst [vmem:[%s135 + $0x258] sm:$0xff] %v3285
        %4310 = vst [vmem:[%s135 + $0x260] sm:$0xff] %v3286
        %4311 = vst [vmem:[%s135 + $0x268] sm:$0xff] %v3287
        %4312 = vst [vmem:[%s135 + $0x270] sm:$0xff] %v3288
        %4313 = vst [vmem:[%s135 + $0x278] sm:$0xff] %v3289
        %4314 = vst [vmem:[%s135 + $0x280] sm:$0xff] %v3290
        %4315 = vst [vmem:[%s135 + $0x288] sm:$0xff] %v3291
        %4316 = vst [vmem:[%s135 + $0x290] sm:$0xff] %v3292
        %4317 = vst [vmem:[%s135 + $0x298] sm:$0xff] %v3293
        %4318 = vst [vmem:[%s135 + $0x2a0] sm:$0xff] %v3294
        %4319 = vst [vmem:[%s135 + $0x2a8] sm:$0xff] %v3295
        %4320 = vst [vmem:[%s135 + $0x2b0] sm:$0xff] %v3296
        %4321 = vst [vmem:[%s135 + $0x2b8] sm:$0xff] %v3297
        %4322 = vst [vmem:[%s135 + $0x2c0] sm:$0xff] %v3298
        %4323 = vst [vmem:[%s135 + $0x2c8] sm:$0xff] %v3299
        %4324 = vst [vmem:[%s135 + $0x2d0] sm:$0xff] %v3300
        %4325 = vst [vmem:[%s135 + $0x2d8] sm:$0xff] %v3301
        %4326 = vst [vmem:[%s135 + $0x2e0] sm:$0xff] %v3302
        %4327 = vst [vmem:[%s135 + $0x2e8] sm:$0xff] %v3303
        %4328 = vst [vmem:[%s135 + $0x2f0] sm:$0xff] %v3304
        %4329 = vst [vmem:[%s135 + $0x2f8] sm:$0xff] %v3305
        %4330 = vst [vmem:[%s135 + $0x300] sm:$0xff] %v3306
        %4331 = vst [vmem:[%s135 + $0x308] sm:$0xff] %v3307
        %4332 = vst [vmem:[%s135 + $0x310] sm:$0xff] %v3308
        %4333 = vst [vmem:[%s135 + $0x318] sm:$0xff] %v3309
        %4334 = vst [vmem:[%s135 + $0x320] sm:$0xff] %v3310
        %4335 = vst [vmem:[%s135 + $0x328] sm:$0xff] %v3311
        %4336 = vst [vmem:[%s135 + $0x330] sm:$0xff] %v3312
        %4337 = vst [vmem:[%s135 + $0x338] sm:$0xff] %v3313
        %4338 = vst [vmem:[%s135 + $0x340] sm:$0xff] %v3314
        %4339 = vst [vmem:[%s135 + $0x348] sm:$0xff] %v3315
        %4340 = vst [vmem:[%s135 + $0x350] sm:$0xff] %v3316
        %4341 = vst [vmem:[%s135 + $0x358] sm:$0xff] %v3317
        %4342 = vst [vmem:[%s135 + $0x360] sm:$0xff] %v3318
        %4343 = vst [vmem:[%s135 + $0x368] sm:$0xff] %v3319
        %4344 = vst [vmem:[%s135 + $0x370] sm:$0xff] %v3320
        %4345 = vst [vmem:[%s135 + $0x378] sm:$0xff] %v3321
        %4346 = vst [vmem:[%s135 + $0x380] sm:$0xff] %v3322
        %4347 = vst [vmem:[%s135 + $0x388] sm:$0xff] %v3323
        %4348 = vst [vmem:[%s135 + $0x390] sm:$0xff] %v3324
        %4349 = vst [vmem:[%s135 + $0x398] sm:$0xff] %v3325
        %4350 = vst [vmem:[%s135 + $0x3a0] sm:$0xff] %v3326
        %4351 = vst [vmem:[%s135 + $0x3a8] sm:$0xff] %v3327
        %4352 = vst [vmem:[%s135 + $0x3b0] sm:$0xff] %v3328
        %4353 = vst [vmem:[%s135 + $0x3b8] sm:$0xff] %v3329
        %4354 = vst [vmem:[%s135 + $0x3c0] sm:$0xff] %v3330
        %4355 = vst [vmem:[%s135 + $0x3c8] sm:$0xff] %v3331
        %4356 = vst [vmem:[%s135 + $0x3d0] sm:$0xff] %v3332
        %4357 = vst [vmem:[%s135 + $0x3d8] sm:$0xff] %v3333
        %4358 = vst [vmem:[%s135 + $0x3e0] sm:$0xff] %v3334
        %4359 = vst [vmem:[%s135 + $0x3e8] sm:$0xff] %v3335
        %4360 = vst [vmem:[%s135 + $0x3f0] sm:$0xff] %v3336
        %4361 = vst [vmem:[%s135 + $0x3f8] sm:$0xff] %v3337
        %4362 = vst [vmem:[%s135 + $0x400] sm:$0xff] %v3338
        %4363 = vst [vmem:[%s135 + $0x408] sm:$0xff] %v3339
        %4364 = vst [vmem:[%s135 + $0x410] sm:$0xff] %v3340
        %4365 = vst [vmem:[%s135 + $0x418] sm:$0xff] %v3341
        %4366 = vst [vmem:[%s135 + $0x420] sm:$0xff] %v3342
        %4367 = vst [vmem:[%s135 + $0x428] sm:$0xff] %v3343
        %4368 = vst [vmem:[%s135 + $0x430] sm:$0xff] %v3344
        %4369 = vst [vmem:[%s135 + $0x438] sm:$0xff] %v3345
        %4370 = vst [vmem:[%s135 + $0x440] sm:$0xff] %v3346
        %4371 = vst [vmem:[%s135 + $0x448] sm:$0xff] %v3347
        %4372 = vst [vmem:[%s135 + $0x450] sm:$0xff] %v3348
        %4373 = vst [vmem:[%s135 + $0x458] sm:$0xff] %v3349
        %4374 = vst [vmem:[%s135 + $0x460] sm:$0xff] %v3350
        %4375 = vst [vmem:[%s135 + $0x468] sm:$0xff] %v3351
        %4376 = vst [vmem:[%s135 + $0x470] sm:$0xff] %v3352
        %4377 = vst [vmem:[%s135 + $0x478] sm:$0xff] %v3353
        %4378 = vst [vmem:[%s135 + $0x480] sm:$0xff] %v3354
        %4379 = vst [vmem:[%s135 + $0x488] sm:$0xff] %v3355
        %4380 = vst [vmem:[%s135 + $0x490] sm:$0xff] %v3356
        %4381 = vst [vmem:[%s135 + $0x498] sm:$0xff] %v3357
        %4382 = vst [vmem:[%s135 + $0x4a0] sm:$0xff] %v3358
        %4383 = vst [vmem:[%s135 + $0x4a8] sm:$0xff] %v3359
        %4384 = vst [vmem:[%s135 + $0x4b0] sm:$0xff] %v3360
        %4385 = vst [vmem:[%s135 + $0x4b8] sm:$0xff] %v3361
        %4386 = vst [vmem:[%s135 + $0x4c0] sm:$0xff] %v3362
        %4387 = vst [vmem:[%s135 + $0x4c8] sm:$0xff] %v3363
        %4388 = vst [vmem:[%s135 + $0x4d0] sm:$0xff] %v3364
        %4389 = vst [vmem:[%s135 + $0x4d8] sm:$0xff] %v3365
        %4390 = vst [vmem:[%s135 + $0x4e0] sm:$0xff] %v3366
        %4391 = vst [vmem:[%s135 + $0x4e8] sm:$0xff] %v3367
        %4392 = vst [vmem:[%s135 + $0x4f0] sm:$0xff] %v3368
        %4393 = vst [vmem:[%s135 + $0x4f8] sm:$0xff] %v3369
        %4394 = vst [vmem:[%s135 + $0x500] sm:$0xff] %v3370
        %4395 = vst [vmem:[%s135 + $0x508] sm:$0xff] %v3371
        %4396 = vst [vmem:[%s135 + $0x510] sm:$0xff] %v3372
        %4397 = vst [vmem:[%s135 + $0x518] sm:$0xff] %v3373
        %4398 = vst [vmem:[%s135 + $0x520] sm:$0xff] %v3374
        %4399 = vst [vmem:[%s135 + $0x528] sm:$0xff] %v3375
        %4400 = vst [vmem:[%s135 + $0x530] sm:$0xff] %v3376
        %4401 = vst [vmem:[%s135 + $0x538] sm:$0xff] %v3377
        %4402 = vst [vmem:[%s135 + $0x540] sm:$0xff] %v3378
        %4403 = vst [vmem:[%s135 + $0x548] sm:$0xff] %v3379
        %4404 = vst [vmem:[%s135 + $0x550] sm:$0xff] %v3380
        %4405 = vst [vmem:[%s135 + $0x558] sm:$0xff] %v3381
        %4406 = vst [vmem:[%s135 + $0x560] sm:$0xff] %v3382
        %4407 = vst [vmem:[%s135 + $0x568] sm:$0xff] %v3383
        %4408 = vst [vmem:[%s135 + $0x570] sm:$0xff] %v3384
        %4409 = vst [vmem:[%s135 + $0x578] sm:$0xff] %v3385
        %4410 = vst [vmem:[%s135 + $0x580] sm:$0xff] %v3386
        %4411 = vst [vmem:[%s135 + $0x588] sm:$0xff] %v3387
        %4412 = vst [vmem:[%s135 + $0x590] sm:$0xff] %v3388
        %4413 = vst [vmem:[%s135 + $0x598] sm:$0xff] %v3389
        %4414 = vst [vmem:[%s135 + $0x5a0] sm:$0xff] %v3390
        %4415 = vst [vmem:[%s135 + $0x5a8] sm:$0xff] %v3391
        %4416 = vst [vmem:[%s135 + $0x5b0] sm:$0xff] %v3392
        %4417 = vst [vmem:[%s135 + $0x5b8] sm:$0xff] %v3393
        %4418 = vst [vmem:[%s135 + $0x5c0] sm:$0xff] %v3394
        %4419 = vst [vmem:[%s135 + $0x5c8] sm:$0xff] %v3395
        %4420 = vst [vmem:[%s135 + $0x5d0] sm:$0xff] %v3396
        %4421 = vst [vmem:[%s135 + $0x5d8] sm:$0xff] %v3397
        %4422 = vst [vmem:[%s135 + $0x5e0] sm:$0xff] %v3398
        %4423 = vst [vmem:[%s135 + $0x5e8] sm:$0xff] %v3399
        %4424 = vst [vmem:[%s135 + $0x5f0] sm:$0xff] %v3400
        %4425 = vst [vmem:[%s135 + $0x5f8] sm:$0xff] %v3401
        %4426 = vst [vmem:[%s135 + $0x600] sm:$0xff] %v3402
        %4427 = vst [vmem:[%s135 + $0x608] sm:$0xff] %v3403
        %4428 = vst [vmem:[%s135 + $0x610] sm:$0xff] %v3404
        %4429 = vst [vmem:[%s135 + $0x618] sm:$0xff] %v3405
        %4430 = vst [vmem:[%s135 + $0x620] sm:$0xff] %v3406
        %4431 = vst [vmem:[%s135 + $0x628] sm:$0xff] %v3407
        %4432 = vst [vmem:[%s135 + $0x630] sm:$0xff] %v3408
        %4433 = vst [vmem:[%s135 + $0x638] sm:$0xff] %v3409
        %4434 = vst [vmem:[%s135 + $0x640] sm:$0xff] %v3410
        %4435 = vst [vmem:[%s135 + $0x648] sm:$0xff] %v3411
        %4436 = vst [vmem:[%s135 + $0x650] sm:$0xff] %v3412
        %4437 = vst [vmem:[%s135 + $0x658] sm:$0xff] %v3413
        %4438 = vst [vmem:[%s135 + $0x660] sm:$0xff] %v3414
        %4439 = vst [vmem:[%s135 + $0x668] sm:$0xff] %v3415
        %4440 = vst [vmem:[%s135 + $0x670] sm:$0xff] %v3416
        %4441 = vst [vmem:[%s135 + $0x678] sm:$0xff] %v3417
        %4442 = vst [vmem:[%s135 + $0x680] sm:$0xff] %v3418
        %4443 = vst [vmem:[%s135 + $0x688] sm:$0xff] %v3419
        %4444 = vst [vmem:[%s135 + $0x690] sm:$0xff] %v3420
        %4445 = vst [vmem:[%s135 + $0x698] sm:$0xff] %v3421
        %4446 = vst [vmem:[%s135 + $0x6a0] sm:$0xff] %v3422
        %4447 = vst [vmem:[%s135 + $0x6a8] sm:$0xff] %v3423
        %4448 = vst [vmem:[%s135 + $0x6b0] sm:$0xff] %v3424
        %4449 = vst [vmem:[%s135 + $0x6b8] sm:$0xff] %v3425
        %4450 = vst [vmem:[%s135 + $0x6c0] sm:$0xff] %v3426
        %4451 = vst [vmem:[%s135 + $0x6c8] sm:$0xff] %v3427
        %4452 = vst [vmem:[%s135 + $0x6d0] sm:$0xff] %v3428
        %4453 = vst [vmem:[%s135 + $0x6d8] sm:$0xff] %v3429
        %4454 = vst [vmem:[%s135 + $0x6e0] sm:$0xff] %v3430
        %4455 = vst [vmem:[%s135 + $0x6e8] sm:$0xff] %v3431
        %4456 = vst [vmem:[%s135 + $0x6f0] sm:$0xff] %v3432
        %4457 = vst [vmem:[%s135 + $0x6f8] sm:$0xff] %v3433
        %4458 = vst [vmem:[%s135 + $0x700] sm:$0xff] %v3434
        %4459 = vst [vmem:[%s135 + $0x708] sm:$0xff] %v3435
        %4460 = vst [vmem:[%s135 + $0x710] sm:$0xff] %v3436
        %4461 = vst [vmem:[%s135 + $0x718] sm:$0xff] %v3437
        %4462 = vst [vmem:[%s135 + $0x720] sm:$0xff] %v3438
        %4463 = vst [vmem:[%s135 + $0x728] sm:$0xff] %v3439
        %4464 = vst [vmem:[%s135 + $0x730] sm:$0xff] %v3440
        %4465 = vst [vmem:[%s135 + $0x738] sm:$0xff] %v3441
        %4466 = vst [vmem:[%s135 + $0x740] sm:$0xff] %v3442
        %4467 = vst [vmem:[%s135 + $0x748] sm:$0xff] %v3443
        %4468 = vst [vmem:[%s135 + $0x750] sm:$0xff] %v3444
        %4469 = vst [vmem:[%s135 + $0x758] sm:$0xff] %v3445
        %4470 = vst [vmem:[%s135 + $0x760] sm:$0xff] %v3446
        %4471 = vst [vmem:[%s135 + $0x768] sm:$0xff] %v3447
        %4472 = vst [vmem:[%s135 + $0x770] sm:$0xff] %v3448
        %4473 = vst [vmem:[%s135 + $0x778] sm:$0xff] %v3449
        %4474 = vst [vmem:[%s135 + $0x780] sm:$0xff] %v3450
        %4475 = vst [vmem:[%s135 + $0x788] sm:$0xff] %v3451
        %4476 = vst [vmem:[%s135 + $0x790] sm:$0xff] %v3452
        %4477 = vst [vmem:[%s135 + $0x798] sm:$0xff] %v3453
        %4478 = vst [vmem:[%s135 + $0x7a0] sm:$0xff] %v3454
        %4479 = vst [vmem:[%s135 + $0x7a8] sm:$0xff] %v3455
        %4480 = vst [vmem:[%s135 + $0x7b0] sm:$0xff] %v3456
        %4481 = vst [vmem:[%s135 + $0x7b8] sm:$0xff] %v3457
        %4482 = vst [vmem:[%s135 + $0x7c0] sm:$0xff] %v3458
        %4483 = vst [vmem:[%s135 + $0x7c8] sm:$0xff] %v3459
        %4484 = vst [vmem:[%s135 + $0x7d0] sm:$0xff] %v3460
        %4485 = vst [vmem:[%s135 + $0x7d8] sm:$0xff] %v3461
        %4486 = vst [vmem:[%s135 + $0x7e0] sm:$0xff] %v3462
        %4487 = vst [vmem:[%s135 + $0x7e8] sm:$0xff] %v3463
        %4488 = vst [vmem:[%s135 + $0x7f0] sm:$0xff] %v3464
        %4489 = vst [vmem:[%s135 + $0x7f8] sm:$0xff] %v3465
        %4490 = vst [vmem:[%s135 + $0x800] sm:$0xff] %v3466
        %4491 = vst [vmem:[%s135 + $0x808] sm:$0xff] %v3467
        %4492 = vst [vmem:[%s135 + $0x810] sm:$0xff] %v3468
        %4493 = vst [vmem:[%s135 + $0x818] sm:$0xff] %v3469
        %4494 = vst [vmem:[%s135 + $0x820] sm:$0xff] %v3470
        %4495 = vst [vmem:[%s135 + $0x828] sm:$0xff] %v3471
        %4496 = vst [vmem:[%s135 + $0x830] sm:$0xff] %v3472
        %4497 = vst [vmem:[%s135 + $0x838] sm:$0xff] %v3473
        %4498 = vst [vmem:[%s135 + $0x840] sm:$0xff] %v3474
        %4499 = vst [vmem:[%s135 + $0x848] sm:$0xff] %v3475
        %4500 = vst [vmem:[%s135 + $0x850] sm:$0xff] %v3476
        %4501 = vst [vmem:[%s135 + $0x858] sm:$0xff] %v3477
        %4502 = vst [vmem:[%s135 + $0x860] sm:$0xff] %v3478
        %4503 = vst [vmem:[%s135 + $0x868] sm:$0xff] %v3479
        %4504 = vst [vmem:[%s135 + $0x870] sm:$0xff] %v3480
        %4505 = vst [vmem:[%s135 + $0x878] sm:$0xff] %v3481
        %4506 = vst [vmem:[%s135 + $0x880] sm:$0xff] %v3482
        %4507 = vst [vmem:[%s135 + $0x888] sm:$0xff] %v3483
        %4508 = vst [vmem:[%s135 + $0x890] sm:$0xff] %v3484
        %4509 = vst [vmem:[%s135 + $0x898] sm:$0xff] %v3485
        %4510 = vst [vmem:[%s135 + $0x8a0] sm:$0xff] %v3486
        %4511 = vst [vmem:[%s135 + $0x8a8] sm:$0xff] %v3487
        %4512 = vst [vmem:[%s135 + $0x8b0] sm:$0xff] %v3488
        %4513 = vst [vmem:[%s135 + $0x8b8] sm:$0xff] %v3489
        %4514 = vst [vmem:[%s135 + $0x8c0] sm:$0xff] %v3490
        %4515 = vst [vmem:[%s135 + $0x8c8] sm:$0xff] %v3491
        %4516 = vst [vmem:[%s135 + $0x8d0] sm:$0xff] %v3492
        %4517 = vst [vmem:[%s135 + $0x8d8] sm:$0xff] %v3493
        %4518 = vst [vmem:[%s135 + $0x8e0] sm:$0xff] %v3494
        %4519 = vst [vmem:[%s135 + $0x8e8] sm:$0xff] %v3495
        %4520 = vst [vmem:[%s135 + $0x8f0] sm:$0xff] %v3496
        %4521 = vst [vmem:[%s135 + $0x8f8] sm:$0xff] %v3497
        %4522 = vst [vmem:[%s135 + $0x900] sm:$0xff] %v3498
        %4523 = vst [vmem:[%s135 + $0x908] sm:$0xff] %v3499
        %4524 = vst [vmem:[%s135 + $0x910] sm:$0xff] %v3500
        %4525 = vst [vmem:[%s135 + $0x918] sm:$0xff] %v3501
        %4526 = vst [vmem:[%s135 + $0x920] sm:$0xff] %v3502
        %4527 = vst [vmem:[%s135 + $0x928] sm:$0xff] %v3503
        %4528 = vst [vmem:[%s135 + $0x930] sm:$0xff] %v3504
        %4529 = vst [vmem:[%s135 + $0x938] sm:$0xff] %v3505
        %4530 = vst [vmem:[%s135 + $0x940] sm:$0xff] %v3506
        %4531 = vst [vmem:[%s135 + $0x948] sm:$0xff] %v3507
        %4532 = vst [vmem:[%s135 + $0x950] sm:$0xff] %v3508
        %4533 = vst [vmem:[%s135 + $0x958] sm:$0xff] %v3509
        %4534 = vst [vmem:[%s135 + $0x960] sm:$0xff] %v3510
        %4535 = vst [vmem:[%s135 + $0x968] sm:$0xff] %v3511
        %4536 = vst [vmem:[%s135 + $0x970] sm:$0xff] %v3512
        %4537 = vst [vmem:[%s135 + $0x978] sm:$0xff] %v3513
        %4538 = vst [vmem:[%s135 + $0x980] sm:$0xff] %v3514
        %4539 = vst [vmem:[%s135 + $0x988] sm:$0xff] %v3515
        %4540 = vst [vmem:[%s135 + $0x990] sm:$0xff] %v3516
        %4541 = vst [vmem:[%s135 + $0x998] sm:$0xff] %v3517
        %4542 = vst [vmem:[%s135 + $0x9a0] sm:$0xff] %v3518
        %4543 = vst [vmem:[%s135 + $0x9a8] sm:$0xff] %v3519
        %4544 = vst [vmem:[%s135 + $0x9b0] sm:$0xff] %v3520
        %4545 = vst [vmem:[%s135 + $0x9b8] sm:$0xff] %v3521
        %4546 = vst [vmem:[%s135 + $0x9c0] sm:$0xff] %v3522
        %4547 = vst [vmem:[%s135 + $0x9c8] sm:$0xff] %v3523
        %4548 = vst [vmem:[%s135 + $0x9d0] sm:$0xff] %v3524
        %4549 = vst [vmem:[%s135 + $0x9d8] sm:$0xff] %v3525
        %4550 = vst [vmem:[%s135 + $0x9e0] sm:$0xff] %v3526
        %4551 = vst [vmem:[%s135 + $0x9e8] sm:$0xff] %v3527
        %4552 = vst [vmem:[%s135 + $0x9f0] sm:$0xff] %v3528
        %4553 = vst [vmem:[%s135 + $0x9f8] sm:$0xff] %v3529
        %4554 = vst [vmem:[%s135 + $0xa00] sm:$0xff] %v3530
        %4555 = vst [vmem:[%s135 + $0xa08] sm:$0xff] %v3531
        %4556 = vst [vmem:[%s135 + $0xa10] sm:$0xff] %v3532
        %4557 = vst [vmem:[%s135 + $0xa18] sm:$0xff] %v3533
        %4558 = vst [vmem:[%s135 + $0xa20] sm:$0xff] %v3534
        %4559 = vst [vmem:[%s135 + $0xa28] sm:$0xff] %v3535
        %4560 = vst [vmem:[%s135 + $0xa30] sm:$0xff] %v3536
        %4561 = vst [vmem:[%s135 + $0xa38] sm:$0xff] %v3537
        %4562 = vst [vmem:[%s135 + $0xa40] sm:$0xff] %v3538
        %4563 = vst [vmem:[%s135 + $0xa48] sm:$0xff] %v3539
        %4564 = vst [vmem:[%s135 + $0xa50] sm:$0xff] %v3540
        %4565 = vst [vmem:[%s135 + $0xa58] sm:$0xff] %v3541
        %4566 = vst [vmem:[%s135 + $0xa60] sm:$0xff] %v3542
        %4567 = vst [vmem:[%s135 + $0xa68] sm:$0xff] %v3543
        %4568 = vst [vmem:[%s135 + $0xa70] sm:$0xff] %v3544
        %4569 = vst [vmem:[%s135 + $0xa78] sm:$0xff] %v3545
        %4570 = vst [vmem:[%s135 + $0xa80] sm:$0xff] %v3546
        %4571 = vst [vmem:[%s135 + $0xa88] sm:$0xff] %v3547
        %4572 = vst [vmem:[%s135 + $0xa90] sm:$0xff] %v3548
        %4573 = vst [vmem:[%s135 + $0xa98] sm:$0xff] %v3549
        %4574 = vst [vmem:[%s135 + $0xaa0] sm:$0xff] %v3550
        %4575 = vst [vmem:[%s135 + $0xaa8] sm:$0xff] %v3551
        %4576 = vst [vmem:[%s135 + $0xab0] sm:$0xff] %v3552
        %4577 = vst [vmem:[%s135 + $0xab8] sm:$0xff] %v3553
        %4578 = vst [vmem:[%s135 + $0xac0] sm:$0xff] %v3554
        %4579 = vst [vmem:[%s135 + $0xac8] sm:$0xff] %v3555
        %4580 = vst [vmem:[%s135 + $0xad0] sm:$0xff] %v3556
        %4581 = vst [vmem:[%s135 + $0xad8] sm:$0xff] %v3557
        %4582 = vst [vmem:[%s135 + $0xae0] sm:$0xff] %v3558
        %4583 = vst [vmem:[%s135 + $0xae8] sm:$0xff] %v3559
        %4584 = vst [vmem:[%s135 + $0xaf0] sm:$0xff] %v3560
        %4585 = vst [vmem:[%s135 + $0xaf8] sm:$0xff] %v3561
        %4586 = vst [vmem:[%s135 + $0xb00] sm:$0xff] %v3562
        %4587 = vst [vmem:[%s135 + $0xb08] sm:$0xff] %v3563
        %4588 = vst [vmem:[%s135 + $0xb10] sm:$0xff] %v3564
        %4589 = vst [vmem:[%s135 + $0xb18] sm:$0xff] %v3565
        %4590 = vst [vmem:[%s135 + $0xb20] sm:$0xff] %v3566
        %4591 = vst [vmem:[%s135 + $0xb28] sm:$0xff] %v3567
        %4592 = vst [vmem:[%s135 + $0xb30] sm:$0xff] %v3568
        %4593 = vst [vmem:[%s135 + $0xb38] sm:$0xff] %v3569
        %4594 = vst [vmem:[%s135 + $0xb40] sm:$0xff] %v3570
        %4595 = vst [vmem:[%s135 + $0xb48] sm:$0xff] %v3571
        %4596 = vst [vmem:[%s135 + $0xb50] sm:$0xff] %v3572
        %4597 = vst [vmem:[%s135 + $0xb58] sm:$0xff] %v3573
        %4598 = vst [vmem:[%s135 + $0xb60] sm:$0xff] %v3574
        %4599 = vst [vmem:[%s135 + $0xb68] sm:$0xff] %v3575
        %4600 = vst [vmem:[%s135 + $0xb70] sm:$0xff] %v3576
        %4601 = vst [vmem:[%s135 + $0xb78] sm:$0xff] %v3577
        %4602 = vst [vmem:[%s135 + $0xb80] sm:$0xff] %v3578
        %4603 = vst [vmem:[%s135 + $0xb88] sm:$0xff] %v3579
        %4604 = vst [vmem:[%s135 + $0xb90] sm:$0xff] %v3580
        %4605 = vst [vmem:[%s135 + $0xb98] sm:$0xff] %v3581
        %4606 = vst [vmem:[%s135 + $0xba0] sm:$0xff] %v3582
        %4607 = vst [vmem:[%s135 + $0xba8] sm:$0xff] %v3583
        %4608 = vst [vmem:[%s135 + $0xbb0] sm:$0xff] %v3584
        %4609 = vst [vmem:[%s135 + $0xbb8] sm:$0xff] %v3585
        %4610 = vst [vmem:[%s135 + $0xbc0] sm:$0xff] %v3586
        %4611 = vst [vmem:[%s135 + $0xbc8] sm:$0xff] %v3587
        %4612 = vst [vmem:[%s135 + $0xbd0] sm:$0xff] %v3588
        %4613 = vst [vmem:[%s135 + $0xbd8] sm:$0xff] %v3589
        %4614 = vst [vmem:[%s135 + $0xbe0] sm:$0xff] %v3590
        %4615 = vst [vmem:[%s135 + $0xbe8] sm:$0xff] %v3591
        %4616 = vst [vmem:[%s135 + $0xbf0] sm:$0xff] %v3592
        %4617 = vst [vmem:[%s135 + $0xbf8] sm:$0xff] %v3593
        %4618 = vst [vmem:[%s135 + $0xc00] sm:$0xff] %v3594
        %4619 = vst [vmem:[%s135 + $0xc08] sm:$0xff] %v3595
        %4620 = vst [vmem:[%s135 + $0xc10] sm:$0xff] %v3596
        %4621 = vst [vmem:[%s135 + $0xc18] sm:$0xff] %v3597
        %4622 = vst [vmem:[%s135 + $0xc20] sm:$0xff] %v3598
        %4623 = vst [vmem:[%s135 + $0xc28] sm:$0xff] %v3599
        %4624 = vst [vmem:[%s135 + $0xc30] sm:$0xff] %v3600
        %4625 = vst [vmem:[%s135 + $0xc38] sm:$0xff] %v3601
        %4626 = vst [vmem:[%s135 + $0xc40] sm:$0xff] %v3602
        %4627 = vst [vmem:[%s135 + $0xc48] sm:$0xff] %v3603
        %4628 = vst [vmem:[%s135 + $0xc50] sm:$0xff] %v3604
        %4629 = vst [vmem:[%s135 + $0xc58] sm:$0xff] %v3605
        %4630 = vst [vmem:[%s135 + $0xc60] sm:$0xff] %v3606
        %4631 = vst [vmem:[%s135 + $0xc68] sm:$0xff] %v3607
        %4632 = vst [vmem:[%s135 + $0xc70] sm:$0xff] %v3608
        %4633 = vst [vmem:[%s135 + $0xc78] sm:$0xff] %v3609
        %4634 = vst [vmem:[%s135 + $0xc80] sm:$0xff] %v3610
        %4635 = vst [vmem:[%s135 + $0xc88] sm:$0xff] %v3611
        %4636 = vst [vmem:[%s135 + $0xc90] sm:$0xff] %v3612
        %4637 = vst [vmem:[%s135 + $0xc98] sm:$0xff] %v3613
        %4638 = vst [vmem:[%s135 + $0xca0] sm:$0xff] %v3614
        %4639 = vst [vmem:[%s135 + $0xca8] sm:$0xff] %v3615
        %4640 = vst [vmem:[%s135 + $0xcb0] sm:$0xff] %v3616
        %4641 = vst [vmem:[%s135 + $0xcb8] sm:$0xff] %v3617
        %4642 = vst [vmem:[%s135 + $0xcc0] sm:$0xff] %v3618
        %4643 = vst [vmem:[%s135 + $0xcc8] sm:$0xff] %v3619
        %4644 = vst [vmem:[%s135 + $0xcd0] sm:$0xff] %v3620
        %4645 = vst [vmem:[%s135 + $0xcd8] sm:$0xff] %v3621
        %4646 = vst [vmem:[%s135 + $0xce0] sm:$0xff] %v3622
        %4647 = vst [vmem:[%s135 + $0xce8] sm:$0xff] %v3623
        %4648 = vst [vmem:[%s135 + $0xcf0] sm:$0xff] %v3624
        %4649 = vst [vmem:[%s135 + $0xcf8] sm:$0xff] %v3625
        %4650 = vst [vmem:[%s135 + $0xd00] sm:$0xff] %v3626
        %4651 = vst [vmem:[%s135 + $0xd08] sm:$0xff] %v3627
        %4652 = vst [vmem:[%s135 + $0xd10] sm:$0xff] %v3628
        %4653 = vst [vmem:[%s135 + $0xd18] sm:$0xff] %v3629
        %4654 = vst [vmem:[%s135 + $0xd20] sm:$0xff] %v3630
        %4655 = vst [vmem:[%s135 + $0xd28] sm:$0xff] %v3631
        %4656 = vst [vmem:[%s135 + $0xd30] sm:$0xff] %v3632
        %4657 = vst [vmem:[%s135 + $0xd38] sm:$0xff] %v3633
        %4658 = vst [vmem:[%s135 + $0xd40] sm:$0xff] %v3634
        %4659 = vst [vmem:[%s135 + $0xd48] sm:$0xff] %v3635
        %4660 = vst [vmem:[%s135 + $0xd50] sm:$0xff] %v3636
        %4661 = vst [vmem:[%s135 + $0xd58] sm:$0xff] %v3637
        %4662 = vst [vmem:[%s135 + $0xd60] sm:$0xff] %v3638
        %4663 = vst [vmem:[%s135 + $0xd68] sm:$0xff] %v3639
        %4664 = vst [vmem:[%s135 + $0xd70] sm:$0xff] %v3640
        %4665 = vst [vmem:[%s135 + $0xd78] sm:$0xff] %v3641
        %4666 = vst [vmem:[%s135 + $0xd80] sm:$0xff] %v3642
        %4667 = vst [vmem:[%s135 + $0xd88] sm:$0xff] %v3643
        %4668 = vst [vmem:[%s135 + $0xd90] sm:$0xff] %v3644
        %4669 = vst [vmem:[%s135 + $0xd98] sm:$0xff] %v3645
        %4670 = vst [vmem:[%s135 + $0xda0] sm:$0xff] %v3646
        %4671 = vst [vmem:[%s135 + $0xda8] sm:$0xff] %v3647
        %4672 = vst [vmem:[%s135 + $0xdb0] sm:$0xff] %v3648
        %4673 = vst [vmem:[%s135 + $0xdb8] sm:$0xff] %v3649
        %4674 = vst [vmem:[%s135 + $0xdc0] sm:$0xff] %v3650
        %4675 = vst [vmem:[%s135 + $0xdc8] sm:$0xff] %v3651
        %4676 = vst [vmem:[%s135 + $0xdd0] sm:$0xff] %v3652
        %4677 = vst [vmem:[%s135 + $0xdd8] sm:$0xff] %v3653
        %4678 = vst [vmem:[%s135 + $0xde0] sm:$0xff] %v3654
        %4679 = vst [vmem:[%s135 + $0xde8] sm:$0xff] %v3655
        %4680 = vst [vmem:[%s135 + $0xdf0] sm:$0xff] %v3656
        %4681 = vst [vmem:[%s135 + $0xdf8] sm:$0xff] %v3657
        %4682 = vst [vmem:[%s135 + $0xe00] sm:$0xff] %v3658
        %4683 = vst [vmem:[%s135 + $0xe08] sm:$0xff] %v3659
        %4684 = vst [vmem:[%s135 + $0xe10] sm:$0xff] %v3660
        %4685 = vst [vmem:[%s135 + $0xe18] sm:$0xff] %v3661
        %4686 = vst [vmem:[%s135 + $0xe20] sm:$0xff] %v3662
        %4687 = vst [vmem:[%s135 + $0xe28] sm:$0xff] %v3663
        %4688 = vst [vmem:[%s135 + $0xe30] sm:$0xff] %v3664
        %4689 = vst [vmem:[%s135 + $0xe38] sm:$0xff] %v3665
        %4690 = vst [vmem:[%s135 + $0xe40] sm:$0xff] %v3666
        %4691 = vst [vmem:[%s135 + $0xe48] sm:$0xff] %v3667
        %4692 = vst [vmem:[%s135 + $0xe50] sm:$0xff] %v3668
        %4693 = vst [vmem:[%s135 + $0xe58] sm:$0xff] %v3669
        %4694 = vst [vmem:[%s135 + $0xe60] sm:$0xff] %v3670
        %4695 = vst [vmem:[%s135 + $0xe68] sm:$0xff] %v3671
        %4696 = vst [vmem:[%s135 + $0xe70] sm:$0xff] %v3672
        %4697 = vst [vmem:[%s135 + $0xe78] sm:$0xff] %v3673
        %4698 = vst [vmem:[%s135 + $0xe80] sm:$0xff] %v3674
        %4699 = vst [vmem:[%s135 + $0xe88] sm:$0xff] %v3675
        %4700 = vst [vmem:[%s135 + $0xe90] sm:$0xff] %v3676
        %4701 = vst [vmem:[%s135 + $0xe98] sm:$0xff] %v3677
        %4702 = vst [vmem:[%s135 + $0xea0] sm:$0xff] %v3678
        %4703 = vst [vmem:[%s135 + $0xea8] sm:$0xff] %v3679
        %4704 = vst [vmem:[%s135 + $0xeb0] sm:$0xff] %v3680
        %4705 = vst [vmem:[%s135 + $0xeb8] sm:$0xff] %v3681
        %4706 = vst [vmem:[%s135 + $0xec0] sm:$0xff] %v3682
        %4707 = vst [vmem:[%s135 + $0xec8] sm:$0xff] %v3683
        %4708 = vst [vmem:[%s135 + $0xed0] sm:$0xff] %v3684
        %4709 = vst [vmem:[%s135 + $0xed8] sm:$0xff] %v3685
        %4710 = vst [vmem:[%s135 + $0xee0] sm:$0xff] %v3686
        %4711 = vst [vmem:[%s135 + $0xee8] sm:$0xff] %v3687
        %4712 = vst [vmem:[%s135 + $0xef0] sm:$0xff] %v3688
        %4713 = vst [vmem:[%s135 + $0xef8] sm:$0xff] %v3689
        %4714 = vst [vmem:[%s135 + $0xf00] sm:$0xff] %v3690
        %4715 = vst [vmem:[%s135 + $0xf08] sm:$0xff] %v3691
        %4716 = vst [vmem:[%s135 + $0xf10] sm:$0xff] %v3692
        %4717 = vst [vmem:[%s135 + $0xf18] sm:$0xff] %v3693
        %4718 = vst [vmem:[%s135 + $0xf20] sm:$0xff] %v3694
        %4719 = vst [vmem:[%s135 + $0xf28] sm:$0xff] %v3695
        %4720 = vst [vmem:[%s135 + $0xf30] sm:$0xff] %v3696
        %4721 = vst [vmem:[%s135 + $0xf38] sm:$0xff] %v3697
        %4722 = vst [vmem:[%s135 + $0xf40] sm:$0xff] %v3698
        %4723 = vst [vmem:[%s135 + $0xf48] sm:$0xff] %v3699
        %4724 = vst [vmem:[%s135 + $0xf50] sm:$0xff] %v3700
        %4725 = vst [vmem:[%s135 + $0xf58] sm:$0xff] %v3701
        %4726 = vst [vmem:[%s135 + $0xf60] sm:$0xff] %v3702
        %4727 = vst [vmem:[%s135 + $0xf68] sm:$0xff] %v3703
        %4728 = vst [vmem:[%s135 + $0xf70] sm:$0xff] %v3704
        %4729 = vst [vmem:[%s135 + $0xf78] sm:$0xff] %v3705
        %4730 = vst [vmem:[%s135 + $0xf80] sm:$0xff] %v3706
        %4731 = vst [vmem:[%s135 + $0xf88] sm:$0xff] %v3707
        %4732 = vst [vmem:[%s135 + $0xf90] sm:$0xff] %v3708
        %4733 = vst [vmem:[%s135 + $0xf98] sm:$0xff] %v3709
        %4734 = vst [vmem:[%s135 + $0xfa0] sm:$0xff] %v3710
        %4735 = vst [vmem:[%s135 + $0xfa8] sm:$0xff] %v3711
        %4736 = vst [vmem:[%s135 + $0xfb0] sm:$0xff] %v3712
        %4737 = vst [vmem:[%s135 + $0xfb8] sm:$0xff] %v3713
        %4738 = vst [vmem:[%s135 + $0xfc0] sm:$0xff] %v3714
        %4739 = vst [vmem:[%s135 + $0xfc8] sm:$0xff] %v3715
        %4740 = vst [vmem:[%s135 + $0xfd0] sm:$0xff] %v3716
        %4741 = vst [vmem:[%s135 + $0xfd8] sm:$0xff] %v3717
        %4742 = vst [vmem:[%s135 + $0xfe0] sm:$0xff] %v3718
        %4743 = vst [vmem:[%s135 + $0xfe8] sm:$0xff] %v3719
        %4744 = vst [vmem:[%s135 + $0xff0] sm:$0xff] %v3720
        %4745 = vst [vmem:[%s135 + $0xff8] sm:$0xff] %v3721
        %4746 = vst [vmem:[%s135 + $0x1000] sm:$0xff] %v3722
        %4747 = vst [vmem:[%s135 + $0x1008] sm:$0xff] %v3723
        %4748 = vst [vmem:[%s135 + $0x1010] sm:$0xff] %v3724
        %4749 = vst [vmem:[%s135 + $0x1018] sm:$0xff] %v3725
        %4750 = vst [vmem:[%s135 + $0x1020] sm:$0xff] %v3726
        %4751 = vst [vmem:[%s135 + $0x1028] sm:$0xff] %v3727
        %4752 = vst [vmem:[%s135 + $0x1030] sm:$0xff] %v3728
        %4753 = vst [vmem:[%s135 + $0x1038] sm:$0xff] %v3729
        %4754 = vst [vmem:[%s135 + $0x1040] sm:$0xff] %v3730
        %4755 = vst [vmem:[%s135 + $0x1048] sm:$0xff] %v3731
        %4756 = vst [vmem:[%s135 + $0x1050] sm:$0xff] %v3732
        %4757 = vst [vmem:[%s135 + $0x1058] sm:$0xff] %v3733
        %4758 = vst [vmem:[%s135 + $0x1060] sm:$0xff] %v3734
        %4759 = vst [vmem:[%s135 + $0x1068] sm:$0xff] %v3735
        %4760 = vst [vmem:[%s135 + $0x1070] sm:$0xff] %v3736
        %4761 = vst [vmem:[%s135 + $0x1078] sm:$0xff] %v3737
        %4762 = vst [vmem:[%s135 + $0x1080] sm:$0xff] %v3738
        %4763 = vst [vmem:[%s135 + $0x1088] sm:$0xff] %v3739
        %4764 = vst [vmem:[%s135 + $0x1090] sm:$0xff] %v3740
        %4765 = vst [vmem:[%s135 + $0x1098] sm:$0xff] %v3741
        %4766 = vst [vmem:[%s135 + $0x10a0] sm:$0xff] %v3742
        %4767 = vst [vmem:[%s135 + $0x10a8] sm:$0xff] %v3743
        %4768 = vst [vmem:[%s135 + $0x10b0] sm:$0xff] %v3744
        %4769 = vst [vmem:[%s135 + $0x10b8] sm:$0xff] %v3745
        %4770 = vst [vmem:[%s135 + $0x10c0] sm:$0xff] %v3746
        %4771 = vst [vmem:[%s135 + $0x10c8] sm:$0xff] %v3747
        %4772 = vst [vmem:[%s135 + $0x10d0] sm:$0xff] %v3748
        %4773 = vst [vmem:[%s135 + $0x10d8] sm:$0xff] %v3749
        %4774 = vst [vmem:[%s135 + $0x10e0] sm:$0xff] %v3750
        %4775 = vst [vmem:[%s135 + $0x10e8] sm:$0xff] %v3751
        %4776 = vst [vmem:[%s135 + $0x10f0] sm:$0xff] %v3752
        %4777 = vst [vmem:[%s135 + $0x10f8] sm:$0xff] %v3753
        %4778 = vst [vmem:[%s135 + $0x1100] sm:$0xff] %v3754
        %4779 = vst [vmem:[%s135 + $0x1108] sm:$0xff] %v3755
        %4780 = vst [vmem:[%s135 + $0x1110] sm:$0xff] %v3756
        %4781 = vst [vmem:[%s135 + $0x1118] sm:$0xff] %v3757
        %4782 = vst [vmem:[%s135 + $0x1120] sm:$0xff] %v3758
        %4783 = vst [vmem:[%s135 + $0x1128] sm:$0xff] %v3759
        %4784 = vst [vmem:[%s135 + $0x1130] sm:$0xff] %v3760
        %4785 = vst [vmem:[%s135 + $0x1138] sm:$0xff] %v3761
        %4786 = vst [vmem:[%s135 + $0x1140] sm:$0xff] %v3762
        %4787 = vst [vmem:[%s135 + $0x1148] sm:$0xff] %v3763
        %4788 = vst [vmem:[%s135 + $0x1150] sm:$0xff] %v3764
        %4789 = vst [vmem:[%s135 + $0x1158] sm:$0xff] %v3765
        %4790 = vst [vmem:[%s135 + $0x1160] sm:$0xff] %v3766
        %4791 = vst [vmem:[%s135 + $0x1168] sm:$0xff] %v3767
        %4792 = vst [vmem:[%s135 + $0x1170] sm:$0xff] %v3768
        %4793 = vst [vmem:[%s135 + $0x1178] sm:$0xff] %v3769
        %4794 = vst [vmem:[%s135 + $0x1180] sm:$0xff] %v3770
        %4795 = vst [vmem:[%s135 + $0x1188] sm:$0xff] %v3771
        %4796 = vst [vmem:[%s135 + $0x1190] sm:$0xff] %v3772
        %4797 = vst [vmem:[%s135 + $0x1198] sm:$0xff] %v3773
        %4798 = vst [vmem:[%s135 + $0x11a0] sm:$0xff] %v3774
        %4799 = vst [vmem:[%s135 + $0x11a8] sm:$0xff] %v3775
        %4800 = vst [vmem:[%s135 + $0x11b0] sm:$0xff] %v3776
        %4801 = vst [vmem:[%s135 + $0x11b8] sm:$0xff] %v3777
        %4802 = vst [vmem:[%s135 + $0x11c0] sm:$0xff] %v3778
        %4803 = vst [vmem:[%s135 + $0x11c8] sm:$0xff] %v3779
        %4804 = vst [vmem:[%s135 + $0x11d0] sm:$0xff] %v3780
        %4805 = vst [vmem:[%s135 + $0x11d8] sm:$0xff] %v3781
        %4806 = vst [vmem:[%s135 + $0x11e0] sm:$0xff] %v3782
        %4807 = vst [vmem:[%s135 + $0x11e8] sm:$0xff] %v3783
        %4808 = vst [vmem:[%s135 + $0x11f0] sm:$0xff] %v3784
        %4809 = vst [vmem:[%s135 + $0x11f8] sm:$0xff] %v3785
        %4810 = vst [vmem:[%s135 + $0x1200] sm:$0xff] %v3786
        %4811 = vst [vmem:[%s135 + $0x1208] sm:$0xff] %v3787
        %4812 = vst [vmem:[%s135 + $0x1210] sm:$0xff] %v3788
        %4813 = vst [vmem:[%s135 + $0x1218] sm:$0xff] %v3789
        %4814 = vst [vmem:[%s135 + $0x1220] sm:$0xff] %v3790
        %4815 = vst [vmem:[%s135 + $0x1228] sm:$0xff] %v3791
        %4816 = vst [vmem:[%s135 + $0x1230] sm:$0xff] %v3792
        %4817 = vst [vmem:[%s135 + $0x1238] sm:$0xff] %v3793
        %4818 = vst [vmem:[%s135 + $0x1240] sm:$0xff] %v3794
        %4819 = vst [vmem:[%s135 + $0x1248] sm:$0xff] %v3795
        %4820 = vst [vmem:[%s135 + $0x1250] sm:$0xff] %v3796
        %4821 = vst [vmem:[%s135 + $0x1258] sm:$0xff] %v3797
        %4822 = vst [vmem:[%s135 + $0x1260] sm:$0xff] %v3798
        %4823 = vst [vmem:[%s135 + $0x1268] sm:$0xff] %v3799
        %4824 = vst [vmem:[%s135 + $0x1270] sm:$0xff] %v3800
        %4825 = vst [vmem:[%s135 + $0x1278] sm:$0xff] %v3801
        %4826 = vst [vmem:[%s135 + $0x1280] sm:$0xff] %v3802
        %4827 = vst [vmem:[%s135 + $0x1288] sm:$0xff] %v3803
        %4828 = vst [vmem:[%s135 + $0x1290] sm:$0xff] %v3804
        %4829 = vst [vmem:[%s135 + $0x1298] sm:$0xff] %v3805
        %4830 = vst [vmem:[%s135 + $0x12a0] sm:$0xff] %v3806
        %4831 = vst [vmem:[%s135 + $0x12a8] sm:$0xff] %v3807
        %4832 = vst [vmem:[%s135 + $0x12b0] sm:$0xff] %v3808
        %4833 = vst [vmem:[%s135 + $0x12b8] sm:$0xff] %v3809
        %4834 = vst [vmem:[%s135 + $0x12c0] sm:$0xff] %v3810
        %4835 = vst [vmem:[%s135 + $0x12c8] sm:$0xff] %v3811
        %4836 = vst [vmem:[%s135 + $0x12d0] sm:$0xff] %v3812
        %4837 = vst [vmem:[%s135 + $0x12d8] sm:$0xff] %v3813
        %4838 = vst [vmem:[%s135 + $0x12e0] sm:$0xff] %v3814
        %4839 = vst [vmem:[%s135 + $0x12e8] sm:$0xff] %v3815
        %4840 = vst [vmem:[%s135 + $0x12f0] sm:$0xff] %v3816
        %4841 = vst [vmem:[%s135 + $0x12f8] sm:$0xff] %v3817
        %4842 = vst [vmem:[%s135 + $0x1300] sm:$0xff] %v3818
        %4843 = vst [vmem:[%s135 + $0x1308] sm:$0xff] %v3819
        %4844 = vst [vmem:[%s135 + $0x1310] sm:$0xff] %v3820
        %4845 = vst [vmem:[%s135 + $0x1318] sm:$0xff] %v3821
        %4846 = vst [vmem:[%s135 + $0x1320] sm:$0xff] %v3822
        %4847 = vst [vmem:[%s135 + $0x1328] sm:$0xff] %v3823
        %4848 = vst [vmem:[%s135 + $0x1330] sm:$0xff] %v3824
        %4849 = vst [vmem:[%s135 + $0x1338] sm:$0xff] %v3825
        %4850 = vst [vmem:[%s135 + $0x1340] sm:$0xff] %v3826
        %4851 = vst [vmem:[%s135 + $0x1348] sm:$0xff] %v3827
        %4852 = vst [vmem:[%s135 + $0x1350] sm:$0xff] %v3828
        %4853 = vst [vmem:[%s135 + $0x1358] sm:$0xff] %v3829
        %4854 = vst [vmem:[%s135 + $0x1360] sm:$0xff] %v3830
        %4855 = vst [vmem:[%s135 + $0x1368] sm:$0xff] %v3831
        %4856 = vst [vmem:[%s135 + $0x1370] sm:$0xff] %v3832
        %4857 = vst [vmem:[%s135 + $0x1378] sm:$0xff] %v3833
        %4858 = vst [vmem:[%s135 + $0x1380] sm:$0xff] %v3834
        %4859 = vst [vmem:[%s135 + $0x1388] sm:$0xff] %v3835
        %4860 = vst [vmem:[%s135 + $0x1390] sm:$0xff] %v3836
        %4861 = vst [vmem:[%s135 + $0x1398] sm:$0xff] %v3837
        %4862 = vst [vmem:[%s135 + $0x13a0] sm:$0xff] %v3838
        %4863 = vst [vmem:[%s135 + $0x13a8] sm:$0xff] %v3839
        %4864 = vst [vmem:[%s135 + $0x13b0] sm:$0xff] %v3840
        %4865 = vst [vmem:[%s135 + $0x13b8] sm:$0xff] %v3841
        %4866 = vst [vmem:[%s135 + $0x13c0] sm:$0xff] %v3842
        %4867 = vst [vmem:[%s135 + $0x13c8] sm:$0xff] %v3843
        %4868 = vst [vmem:[%s135 + $0x13d0] sm:$0xff] %v3844
        %4869 = vst [vmem:[%s135 + $0x13d8] sm:$0xff] %v3845
        %4870 = vst [vmem:[%s135 + $0x13e0] sm:$0xff] %v3846
        %4871 = vst [vmem:[%s135 + $0x13e8] sm:$0xff] %v3847
        %4872 = vst [vmem:[%s135 + $0x13f0] sm:$0xff] %v3848
        %4873 = vst [vmem:[%s135 + $0x13f8] sm:$0xff] %v3849
        %4874 = vst [vmem:[%s135 + $0x1400] sm:$0xff] %v3850
        %4875 = vst [vmem:[%s135 + $0x1408] sm:$0xff] %v3851
        %4876 = vst [vmem:[%s135 + $0x1410] sm:$0xff] %v3852
        %4877 = vst [vmem:[%s135 + $0x1418] sm:$0xff] %v3853
        %4878 = vst [vmem:[%s135 + $0x1420] sm:$0xff] %v3854
        %4879 = vst [vmem:[%s135 + $0x1428] sm:$0xff] %v3855
        %4880 = vst [vmem:[%s135 + $0x1430] sm:$0xff] %v3856
        %4881 = vst [vmem:[%s135 + $0x1438] sm:$0xff] %v3857
        %4882 = vst [vmem:[%s135 + $0x1440] sm:$0xff] %v3858
        %4883 = vst [vmem:[%s135 + $0x1448] sm:$0xff] %v3859
        %4884 = vst [vmem:[%s135 + $0x1450] sm:$0xff] %v3860
        %4885 = vst [vmem:[%s135 + $0x1458] sm:$0xff] %v3861
        %4886 = vst [vmem:[%s135 + $0x1460] sm:$0xff] %v3862
        %4887 = vst [vmem:[%s135 + $0x1468] sm:$0xff] %v3863
        %4888 = vst [vmem:[%s135 + $0x1470] sm:$0xff] %v3864
        %4889 = vst [vmem:[%s135 + $0x1478] sm:$0xff] %v3865
        %4890 = vst [vmem:[%s135 + $0x1480] sm:$0xff] %v3866
        %4891 = vst [vmem:[%s135 + $0x1488] sm:$0xff] %v3867
        %4892 = vst [vmem:[%s135 + $0x1490] sm:$0xff] %v3868
        %4893 = vst [vmem:[%s135 + $0x1498] sm:$0xff] %v3869
        %4894 = vst [vmem:[%s135 + $0x14a0] sm:$0xff] %v3870
        %4895 = vst [vmem:[%s135 + $0x14a8] sm:$0xff] %v3871
        %4896 = vst [vmem:[%s135 + $0x14b0] sm:$0xff] %v3872
        %4897 = vst [vmem:[%s135 + $0x14b8] sm:$0xff] %v3873
        %4898 = vst [vmem:[%s135 + $0x14c0] sm:$0xff] %v3874
        %4899 = vst [vmem:[%s135 + $0x14c8] sm:$0xff] %v3875
        %4900 = vst [vmem:[%s135 + $0x14d0] sm:$0xff] %v3876
        %4901 = vst [vmem:[%s135 + $0x14d8] sm:$0xff] %v3877
        %4902 = vst [vmem:[%s135 + $0x14e0] sm:$0xff] %v3878
        %4903 = vst [vmem:[%s135 + $0x14e8] sm:$0xff] %v3879
        %4904 = vst [vmem:[%s135 + $0x14f0] sm:$0xff] %v3880
        %4905 = vst [vmem:[%s135 + $0x14f8] sm:$0xff] %v3881
        %4906 = vst [vmem:[%s135 + $0x1500] sm:$0xff] %v3882
        %4907 = vst [vmem:[%s135 + $0x1508] sm:$0xff] %v3883
        %4908 = vst [vmem:[%s135 + $0x1510] sm:$0xff] %v3884
        %4909 = vst [vmem:[%s135 + $0x1518] sm:$0xff] %v3885
        %4910 = vst [vmem:[%s135 + $0x1520] sm:$0xff] %v3886
        %4911 = vst [vmem:[%s135 + $0x1528] sm:$0xff] %v3887
        %4912 = vst [vmem:[%s135 + $0x1530] sm:$0xff] %v3888
        %4913 = vst [vmem:[%s135 + $0x1538] sm:$0xff] %v3889
        %4914 = vst [vmem:[%s135 + $0x1540] sm:$0xff] %v3890
        %4915 = vst [vmem:[%s135 + $0x1548] sm:$0xff] %v3891
        %4916 = vst [vmem:[%s135 + $0x1550] sm:$0xff] %v3892
        %4917 = vst [vmem:[%s135 + $0x1558] sm:$0xff] %v3893
        %4918 = vst [vmem:[%s135 + $0x1560] sm:$0xff] %v3894
        %4919 = vst [vmem:[%s135 + $0x1568] sm:$0xff] %v3895
        %4920 = vst [vmem:[%s135 + $0x1570] sm:$0xff] %v3896
        %4921 = vst [vmem:[%s135 + $0x1578] sm:$0xff] %v3897
        %4922 = vst [vmem:[%s135 + $0x1580] sm:$0xff] %v3898
        %4923 = vst [vmem:[%s135 + $0x1588] sm:$0xff] %v3899
        %4924 = vst [vmem:[%s135 + $0x1590] sm:$0xff] %v3900
        %4925 = vst [vmem:[%s135 + $0x1598] sm:$0xff] %v3901
        %4926 = vst [vmem:[%s135 + $0x15a0] sm:$0xff] %v3902
        %4927 = vst [vmem:[%s135 + $0x15a8] sm:$0xff] %v3903
        %4928 = vst [vmem:[%s135 + $0x15b0] sm:$0xff] %v3904
        %4929 = vst [vmem:[%s135 + $0x15b8] sm:$0xff] %v3905
        %4930 = vst [vmem:[%s135 + $0x15c0] sm:$0xff] %v3906
        %4931 = vst [vmem:[%s135 + $0x15c8] sm:$0xff] %v3907
        %4932 = vst [vmem:[%s135 + $0x15d0] sm:$0xff] %v3908
        %4933 = vst [vmem:[%s135 + $0x15d8] sm:$0xff] %v3909
        %4934 = vst [vmem:[%s135 + $0x15e0] sm:$0xff] %v3910
        %4935 = vst [vmem:[%s135 + $0x15e8] sm:$0xff] %v3911
        %4936 = vst [vmem:[%s135 + $0x15f0] sm:$0xff] %v3912
        %4937 = vst [vmem:[%s135 + $0x15f8] sm:$0xff] %v3913
        %4938 = vst [vmem:[%s135 + $0x1600] sm:$0xff] %v3914
        %4939 = vst [vmem:[%s135 + $0x1608] sm:$0xff] %v3915
        %4940 = vst [vmem:[%s135 + $0x1610] sm:$0xff] %v3916
        %4941 = vst [vmem:[%s135 + $0x1618] sm:$0xff] %v3917
        %4942 = vst [vmem:[%s135 + $0x1620] sm:$0xff] %v3918
        %4943 = vst [vmem:[%s135 + $0x1628] sm:$0xff] %v3919
        %4944 = vst [vmem:[%s135 + $0x1630] sm:$0xff] %v3920
        %4945 = vst [vmem:[%s135 + $0x1638] sm:$0xff] %v3921
        %4946 = vst [vmem:[%s135 + $0x1640] sm:$0xff] %v3922
        %4947 = vst [vmem:[%s135 + $0x1648] sm:$0xff] %v3923
        %4948 = vst [vmem:[%s135 + $0x1650] sm:$0xff] %v3924
        %4949 = vst [vmem:[%s135 + $0x1658] sm:$0xff] %v3925
        %4950 = vst [vmem:[%s135 + $0x1660] sm:$0xff] %v3926
        %4951 = vst [vmem:[%s135 + $0x1668] sm:$0xff] %v3927
        %4952 = vst [vmem:[%s135 + $0x1670] sm:$0xff] %v3928
        %4953 = vst [vmem:[%s135 + $0x1678] sm:$0xff] %v3929
        %4954 = vst [vmem:[%s135 + $0x1680] sm:$0xff] %v3930
        %4955 = vst [vmem:[%s135 + $0x1688] sm:$0xff] %v3931
        %4956 = vst [vmem:[%s135 + $0x1690] sm:$0xff] %v3932
        %4957 = vst [vmem:[%s135 + $0x1698] sm:$0xff] %v3933
        %4958 = vst [vmem:[%s135 + $0x16a0] sm:$0xff] %v3934
        %4959 = vst [vmem:[%s135 + $0x16a8] sm:$0xff] %v3935
        %4960 = vst [vmem:[%s135 + $0x16b0] sm:$0xff] %v3936
        %4961 = vst [vmem:[%s135 + $0x16b8] sm:$0xff] %v3937
        %4962 = vst [vmem:[%s135 + $0x16c0] sm:$0xff] %v3938
        %4963 = vst [vmem:[%s135 + $0x16c8] sm:$0xff] %v3939
        %4964 = vst [vmem:[%s135 + $0x16d0] sm:$0xff] %v3940
        %4965 = vst [vmem:[%s135 + $0x16d8] sm:$0xff] %v3941
        %4966 = vst [vmem:[%s135 + $0x16e0] sm:$0xff] %v3942
        %4967 = vst [vmem:[%s135 + $0x16e8] sm:$0xff] %v3943
        %4968 = vst [vmem:[%s135 + $0x16f0] sm:$0xff] %v3944
        %4969 = vst [vmem:[%s135 + $0x16f8] sm:$0xff] %v3945
        %4970 = vst [vmem:[%s135 + $0x1700] sm:$0xff] %v3946
        %4971 = vst [vmem:[%s135 + $0x1708] sm:$0xff] %v3947
        %4972 = vst [vmem:[%s135 + $0x1710] sm:$0xff] %v3948
        %4973 = vst [vmem:[%s135 + $0x1718] sm:$0xff] %v3949
        %4974 = vst [vmem:[%s135 + $0x1720] sm:$0xff] %v3950
        %4975 = vst [vmem:[%s135 + $0x1728] sm:$0xff] %v3951
        %4976 = vst [vmem:[%s135 + $0x1730] sm:$0xff] %v3952
        %4977 = vst [vmem:[%s135 + $0x1738] sm:$0xff] %v3953
        %4978 = vst [vmem:[%s135 + $0x1740] sm:$0xff] %v3954
        %4979 = vst [vmem:[%s135 + $0x1748] sm:$0xff] %v3955
        %4980 = vst [vmem:[%s135 + $0x1750] sm:$0xff] %v3956
        %4981 = vst [vmem:[%s135 + $0x1758] sm:$0xff] %v3957
        %4982 = vst [vmem:[%s135 + $0x1760] sm:$0xff] %v3958
        %4983 = vst [vmem:[%s135 + $0x1768] sm:$0xff] %v3959
        %4984 = vst [vmem:[%s135 + $0x1770] sm:$0xff] %v3960
        %4985 = vst [vmem:[%s135 + $0x1778] sm:$0xff] %v3961
        %4986 = vst [vmem:[%s135 + $0x1780] sm:$0xff] %v3962
        %4987 = vst [vmem:[%s135 + $0x1788] sm:$0xff] %v3963
        %4988 = vst [vmem:[%s135 + $0x1790] sm:$0xff] %v3964
        %4989 = vst [vmem:[%s135 + $0x1798] sm:$0xff] %v3965
        %4990 = vst [vmem:[%s135 + $0x17a0] sm:$0xff] %v3966
        %4991 = vst [vmem:[%s135 + $0x17a8] sm:$0xff] %v3967
        %4992 = vst [vmem:[%s135 + $0x17b0] sm:$0xff] %v3968
        %4993 = vst [vmem:[%s135 + $0x17b8] sm:$0xff] %v3969
        %4994 = vst [vmem:[%s135 + $0x17c0] sm:$0xff] %v3970
        %4995 = vst [vmem:[%s135 + $0x17c8] sm:$0xff] %v3971
        %4996 = vst [vmem:[%s135 + $0x17d0] sm:$0xff] %v3972
        %4997 = vst [vmem:[%s135 + $0x17d8] sm:$0xff] %v3973
        %4998 = vst [vmem:[%s135 + $0x17e0] sm:$0xff] %v3974
        %4999 = vst [vmem:[%s135 + $0x17e8] sm:$0xff] %v3975
        %5000 = vst [vmem:[%s135 + $0x17f0] sm:$0xff] %v3976
        %5001 = vst [vmem:[%s135 + $0x17f8] sm:$0xff] %v3977
        %5002 = vst [vmem:[%s135 + $0x1800] sm:$0xff] %v3978
        %5003 = vst [vmem:[%s135 + $0x1808] sm:$0xff] %v3979
        %5004 = vst [vmem:[%s135 + $0x1810] sm:$0xff] %v3980
        %5005 = vst [vmem:[%s135 + $0x1818] sm:$0xff] %v3981
        %5006 = vst [vmem:[%s135 + $0x1820] sm:$0xff] %v3982
        %5007 = vst [vmem:[%s135 + $0x1828] sm:$0xff] %v3983
        %5008 = vst [vmem:[%s135 + $0x1830] sm:$0xff] %v3984
        %5009 = vst [vmem:[%s135 + $0x1838] sm:$0xff] %v3985
        %5010 = vst [vmem:[%s135 + $0x1840] sm:$0xff] %v3986
        %5011 = vst [vmem:[%s135 + $0x1848] sm:$0xff] %v3987
        %5012 = vst [vmem:[%s135 + $0x1850] sm:$0xff] %v3988
        %5013 = vst [vmem:[%s135 + $0x1858] sm:$0xff] %v3989
        %5014 = vst [vmem:[%s135 + $0x1860] sm:$0xff] %v3990
        %5015 = vst [vmem:[%s135 + $0x1868] sm:$0xff] %v3991
        %5016 = vst [vmem:[%s135 + $0x1870] sm:$0xff] %v3992
        %5017 = vst [vmem:[%s135 + $0x1878] sm:$0xff] %v3993
        %5018 = vst [vmem:[%s135 + $0x1880] sm:$0xff] %v3994
        %5019 = vst [vmem:[%s135 + $0x1888] sm:$0xff] %v3995
        %5020 = vst [vmem:[%s135 + $0x1890] sm:$0xff] %v3996
        %5021 = vst [vmem:[%s135 + $0x1898] sm:$0xff] %v3997
        %5022 = vst [vmem:[%s135 + $0x18a0] sm:$0xff] %v3998
        %5023 = vst [vmem:[%s135 + $0x18a8] sm:$0xff] %v3999
        %5024 = vst [vmem:[%s135 + $0x18b0] sm:$0xff] %v4000
        %5025 = vst [vmem:[%s135 + $0x18b8] sm:$0xff] %v4001
        %5026 = vst [vmem:[%s135 + $0x18c0] sm:$0xff] %v4002
        %5027 = vst [vmem:[%s135 + $0x18c8] sm:$0xff] %v4003
        %5028 = vst [vmem:[%s135 + $0x18d0] sm:$0xff] %v4004
        %5029 = vst [vmem:[%s135 + $0x18d8] sm:$0xff] %v4005
        %5030 = vst [vmem:[%s135 + $0x18e0] sm:$0xff] %v4006
        %5031 = vst [vmem:[%s135 + $0x18e8] sm:$0xff] %v4007
        %5032 = vst [vmem:[%s135 + $0x18f0] sm:$0xff] %v4008
        %5033 = vst [vmem:[%s135 + $0x18f8] sm:$0xff] %v4009
        %5034 = vst [vmem:[%s135 + $0x1900] sm:$0xff] %v4010
        %5035 = vst [vmem:[%s135 + $0x1908] sm:$0xff] %v4011
        %5036 = vst [vmem:[%s135 + $0x1910] sm:$0xff] %v4012
        %5037 = vst [vmem:[%s135 + $0x1918] sm:$0xff] %v4013
        %5038 = vst [vmem:[%s135 + $0x1920] sm:$0xff] %v4014
        %5039 = vst [vmem:[%s135 + $0x1928] sm:$0xff] %v4015
        %5040 = vst [vmem:[%s135 + $0x1930] sm:$0xff] %v4016
        %5041 = vst [vmem:[%s135 + $0x1938] sm:$0xff] %v4017
        %5042 = vst [vmem:[%s135 + $0x1940] sm:$0xff] %v4018
        %5043 = vst [vmem:[%s135 + $0x1948] sm:$0xff] %v4019
        %5044 = vst [vmem:[%s135 + $0x1950] sm:$0xff] %v4020
        %5045 = vst [vmem:[%s135 + $0x1958] sm:$0xff] %v4021
        %5046 = vst [vmem:[%s135 + $0x1960] sm:$0xff] %v4022
        %5047 = vst [vmem:[%s135 + $0x1968] sm:$0xff] %v4023
        %5048 = vst [vmem:[%s135 + $0x1970] sm:$0xff] %v4024
        %5049 = vst [vmem:[%s135 + $0x1978] sm:$0xff] %v4025
        %5050 = vst [vmem:[%s135 + $0x1980] sm:$0xff] %v4026
        %5051 = vst [vmem:[%s135 + $0x1988] sm:$0xff] %v4027
        %5052 = vst [vmem:[%s135 + $0x1990] sm:$0xff] %v4028
        %5053 = vst [vmem:[%s135 + $0x1998] sm:$0xff] %v4029
        %5054 = vst [vmem:[%s135 + $0x19a0] sm:$0xff] %v4030
        %5055 = vst [vmem:[%s135 + $0x19a8] sm:$0xff] %v4031
        %5056 = vst [vmem:[%s135 + $0x19b0] sm:$0xff] %v4032
        %5057 = vst [vmem:[%s135 + $0x19b8] sm:$0xff] %v4033
        %5058 = vst [vmem:[%s135 + $0x19c0] sm:$0xff] %v4034
        %5059 = vst [vmem:[%s135 + $0x19c8] sm:$0xff] %v4035
        %5060 = vst [vmem:[%s135 + $0x19d0] sm:$0xff] %v4036
        %5061 = vst [vmem:[%s135 + $0x19d8] sm:$0xff] %v4037
        %5062 = vst [vmem:[%s135 + $0x19e0] sm:$0xff] %v4038
        %5063 = vst [vmem:[%s135 + $0x19e8] sm:$0xff] %v4039
        %5064 = vst [vmem:[%s135 + $0x19f0] sm:$0xff] %v4040
        %5065 = vst [vmem:[%s135 + $0x19f8] sm:$0xff] %v4041
        %5066 = vst [vmem:[%s135 + $0x1a00] sm:$0xff] %v4042
        %5067 = vst [vmem:[%s135 + $0x1a08] sm:$0xff] %v4043
        %5068 = vst [vmem:[%s135 + $0x1a10] sm:$0xff] %v4044
        %5069 = vst [vmem:[%s135 + $0x1a18] sm:$0xff] %v4045
        %5070 = vst [vmem:[%s135 + $0x1a20] sm:$0xff] %v4046
        %5071 = vst [vmem:[%s135 + $0x1a28] sm:$0xff] %v4047
        %5072 = vst [vmem:[%s135 + $0x1a30] sm:$0xff] %v4048
        %5073 = vst [vmem:[%s135 + $0x1a38] sm:$0xff] %v4049
        %5074 = vst [vmem:[%s135 + $0x1a40] sm:$0xff] %v4050
        %5075 = vst [vmem:[%s135 + $0x1a48] sm:$0xff] %v4051
        %5076 = vst [vmem:[%s135 + $0x1a50] sm:$0xff] %v4052
        %5077 = vst [vmem:[%s135 + $0x1a58] sm:$0xff] %v4053
        %5078 = vst [vmem:[%s135 + $0x1a60] sm:$0xff] %v4054
        %5079 = vst [vmem:[%s135 + $0x1a68] sm:$0xff] %v4055
        %5080 = vst [vmem:[%s135 + $0x1a70] sm:$0xff] %v4056
        %5081 = vst [vmem:[%s135 + $0x1a78] sm:$0xff] %v4057
        %5082 = vst [vmem:[%s135 + $0x1a80] sm:$0xff] %v4058
        %5083 = vst [vmem:[%s135 + $0x1a88] sm:$0xff] %v4059
        %5084 = vst [vmem:[%s135 + $0x1a90] sm:$0xff] %v4060
        %5085 = vst [vmem:[%s135 + $0x1a98] sm:$0xff] %v4061
        %5086 = vst [vmem:[%s135 + $0x1aa0] sm:$0xff] %v4062
        %5087 = vst [vmem:[%s135 + $0x1aa8] sm:$0xff] %v4063
        %5088 = vst [vmem:[%s135 + $0x1ab0] sm:$0xff] %v4064
        %5089 = vst [vmem:[%s135 + $0x1ab8] sm:$0xff] %v4065
        %5090 = vst [vmem:[%s135 + $0x1ac0] sm:$0xff] %v4066
        %5091 = vst [vmem:[%s135 + $0x1ac8] sm:$0xff] %v4067
        %5092 = vst [vmem:[%s135 + $0x1ad0] sm:$0xff] %v4068
        %5093 = vst [vmem:[%s135 + $0x1ad8] sm:$0xff] %v4069
        %5094 = vst [vmem:[%s135 + $0x1ae0] sm:$0xff] %v4070
        %5095 = vst [vmem:[%s135 + $0x1ae8] sm:$0xff] %v4071
        %5096 = vst [vmem:[%s135 + $0x1af0] sm:$0xff] %v4072
        %5097 = vst [vmem:[%s135 + $0x1af8] sm:$0xff] %v4073
        %5098 = vst [vmem:[%s135 + $0x1b00] sm:$0xff] %v4074
        %5099 = vst [vmem:[%s135 + $0x1b08] sm:$0xff] %v4075
        %5100 = vst [vmem:[%s135 + $0x1b10] sm:$0xff] %v4076
        %5101 = vst [vmem:[%s135 + $0x1b18] sm:$0xff] %v4077
        %5102 = vst [vmem:[%s135 + $0x1b20] sm:$0xff] %v4078
        %5103 = vst [vmem:[%s135 + $0x1b28] sm:$0xff] %v4079
        %5104 = vst [vmem:[%s135 + $0x1b30] sm:$0xff] %v4080
        %5105 = vst [vmem:[%s135 + $0x1b38] sm:$0xff] %v4081
        %5106 = vst [vmem:[%s135 + $0x1b40] sm:$0xff] %v4082
        %5107 = vst [vmem:[%s135 + $0x1b48] sm:$0xff] %v4083
        %5108 = vst [vmem:[%s135 + $0x1b50] sm:$0xff] %v4084
        %5109 = vst [vmem:[%s135 + $0x1b58] sm:$0xff] %v4085
        %5110 = vst [vmem:[%s135 + $0x1b60] sm:$0xff] %v4086
        %5111 = vst [vmem:[%s135 + $0x1b68] sm:$0xff] %v4087
        %5112 = vst [vmem:[%s135 + $0x1b70] sm:$0xff] %v4088
        %5113 = vst [vmem:[%s135 + $0x1b78] sm:$0xff] %v4089
        %5114 = vst [vmem:[%s135 + $0x1b80] sm:$0xff] %v4090
        %5115 = vst [vmem:[%s135 + $0x1b88] sm:$0xff] %v4091
        %5116 = vst [vmem:[%s135 + $0x1b90] sm:$0xff] %v4092
        %5117 = vst [vmem:[%s135 + $0x1b98] sm:$0xff] %v4093
        %5118 = vst [vmem:[%s135 + $0x1ba0] sm:$0xff] %v4094
        %5119 = vst [vmem:[%s135 + $0x1ba8] sm:$0xff] %v4095
        %5120 = vst [vmem:[%s135 + $0x1bb0] sm:$0xff] %v4096
        %5121 = vst [vmem:[%s135 + $0x1bb8] sm:$0xff] %v4097
        %5122 = vst [vmem:[%s135 + $0x1bc0] sm:$0xff] %v4098
        %5123 = vst [vmem:[%s135 + $0x1bc8] sm:$0xff] %v4099
        %5124 = vst [vmem:[%s135 + $0x1bd0] sm:$0xff] %v4100
        %5125 = vst [vmem:[%s135 + $0x1bd8] sm:$0xff] %v4101
        %5126 = vst [vmem:[%s135 + $0x1be0] sm:$0xff] %v4102
        %5127 = vst [vmem:[%s135 + $0x1be8] sm:$0xff] %v4103
        %5128 = vst [vmem:[%s135 + $0x1bf0] sm:$0xff] %v4104
        %5129 = vst [vmem:[%s135 + $0x1bf8] sm:$0xff] %v4105
        %5130 = vst [vmem:[%s135 + $0x1c00] sm:$0xff] %v4106
        %5131 = vst [vmem:[%s135 + $0x1c08] sm:$0xff] %v4107
        %5132 = vst [vmem:[%s135 + $0x1c10] sm:$0xff] %v4108
        %5133 = vst [vmem:[%s135 + $0x1c18] sm:$0xff] %v4109
        %5134 = vst [vmem:[%s135 + $0x1c20] sm:$0xff] %v4110
        %5135 = vst [vmem:[%s135 + $0x1c28] sm:$0xff] %v4111
        %5136 = vst [vmem:[%s135 + $0x1c30] sm:$0xff] %v4112
        %5137 = vst [vmem:[%s135 + $0x1c38] sm:$0xff] %v4113
        %5138 = vst [vmem:[%s135 + $0x1c40] sm:$0xff] %v4114
        %5139 = vst [vmem:[%s135 + $0x1c48] sm:$0xff] %v4115
        %5140 = vst [vmem:[%s135 + $0x1c50] sm:$0xff] %v4116
        %5141 = vst [vmem:[%s135 + $0x1c58] sm:$0xff] %v4117
        %5142 = vst [vmem:[%s135 + $0x1c60] sm:$0xff] %v4118
        %5143 = vst [vmem:[%s135 + $0x1c68] sm:$0xff] %v4119
        %5144 = vst [vmem:[%s135 + $0x1c70] sm:$0xff] %v4120
        %5145 = vst [vmem:[%s135 + $0x1c78] sm:$0xff] %v4121
        %5146 = vst [vmem:[%s135 + $0x1c80] sm:$0xff] %v4122
        %5147 = vst [vmem:[%s135 + $0x1c88] sm:$0xff] %v4123
        %5148 = vst [vmem:[%s135 + $0x1c90] sm:$0xff] %v4124
        %5149 = vst [vmem:[%s135 + $0x1c98] sm:$0xff] %v4125
        %5150 = vst [vmem:[%s135 + $0x1ca0] sm:$0xff] %v4126
        %5151 = vst [vmem:[%s135 + $0x1ca8] sm:$0xff] %v4127
        %5152 = vst [vmem:[%s135 + $0x1cb0] sm:$0xff] %v4128
        %5153 = vst [vmem:[%s135 + $0x1cb8] sm:$0xff] %v4129
        %5154 = vst [vmem:[%s135 + $0x1cc0] sm:$0xff] %v4130
        %5155 = vst [vmem:[%s135 + $0x1cc8] sm:$0xff] %v4131
        %5156 = vst [vmem:[%s135 + $0x1cd0] sm:$0xff] %v4132
        %5157 = vst [vmem:[%s135 + $0x1cd8] sm:$0xff] %v4133
        %5158 = vst [vmem:[%s135 + $0x1ce0] sm:$0xff] %v4134
        %5159 = vst [vmem:[%s135 + $0x1ce8] sm:$0xff] %v4135
        %5160 = vst [vmem:[%s135 + $0x1cf0] sm:$0xff] %v4136
        %5161 = vst [vmem:[%s135 + $0x1cf8] sm:$0xff] %v4137
        %5162 = vst [vmem:[%s135 + $0x1d00] sm:$0xff] %v4138
        %5163 = vst [vmem:[%s135 + $0x1d08] sm:$0xff] %v4139
        %5164 = vst [vmem:[%s135 + $0x1d10] sm:$0xff] %v4140
        %5165 = vst [vmem:[%s135 + $0x1d18] sm:$0xff] %v4141
        %5166 = vst [vmem:[%s135 + $0x1d20] sm:$0xff] %v4142
        %5167 = vst [vmem:[%s135 + $0x1d28] sm:$0xff] %v4143
        %5168 = vst [vmem:[%s135 + $0x1d30] sm:$0xff] %v4144
        %5169 = vst [vmem:[%s135 + $0x1d38] sm:$0xff] %v4145
        %5170 = vst [vmem:[%s135 + $0x1d40] sm:$0xff] %v4146
        %5171 = vst [vmem:[%s135 + $0x1d48] sm:$0xff] %v4147
        %5172 = vst [vmem:[%s135 + $0x1d50] sm:$0xff] %v4148
        %5173 = vst [vmem:[%s135 + $0x1d58] sm:$0xff] %v4149
        %5174 = vst [vmem:[%s135 + $0x1d60] sm:$0xff] %v4150
        %5175 = vst [vmem:[%s135 + $0x1d68] sm:$0xff] %v4151
        %5176 = vst [vmem:[%s135 + $0x1d70] sm:$0xff] %v4152
        %5177 = vst [vmem:[%s135 + $0x1d78] sm:$0xff] %v4153
        %5178 = vst [vmem:[%s135 + $0x1d80] sm:$0xff] %v4154
        %5179 = vst [vmem:[%s135 + $0x1d88] sm:$0xff] %v4155
        %5180 = vst [vmem:[%s135 + $0x1d90] sm:$0xff] %v4156
        %5181 = vst [vmem:[%s135 + $0x1d98] sm:$0xff] %v4157
        %5182 = vst [vmem:[%s135 + $0x1da0] sm:$0xff] %v4158
        %5183 = vst [vmem:[%s135 + $0x1da8] sm:$0xff] %v4159
        %5184 = vst [vmem:[%s135 + $0x1db0] sm:$0xff] %v4160
        %5185 = vst [vmem:[%s135 + $0x1db8] sm:$0xff] %v4161
        %5186 = vst [vmem:[%s135 + $0x1dc0] sm:$0xff] %v4162
        %5187 = vst [vmem:[%s135 + $0x1dc8] sm:$0xff] %v4163
        %5188 = vst [vmem:[%s135 + $0x1dd0] sm:$0xff] %v4164
        %5189 = vst [vmem:[%s135 + $0x1dd8] sm:$0xff] %v4165
        %5190 = vst [vmem:[%s135 + $0x1de0] sm:$0xff] %v4166
        %5191 = vst [vmem:[%s135 + $0x1de8] sm:$0xff] %v4167
        %5192 = vst [vmem:[%s135 + $0x1df0] sm:$0xff] %v4168
        %5193 = vst [vmem:[%s135 + $0x1df8] sm:$0xff] %v4169
        %5194 = vst [vmem:[%s135 + $0x1e00] sm:$0xff] %v4170
        %5195 = vst [vmem:[%s135 + $0x1e08] sm:$0xff] %v4171
        %5196 = vst [vmem:[%s135 + $0x1e10] sm:$0xff] %v4172
        %5197 = vst [vmem:[%s135 + $0x1e18] sm:$0xff] %v4173
        %5198 = vst [vmem:[%s135 + $0x1e20] sm:$0xff] %v4174
        %5199 = vst [vmem:[%s135 + $0x1e28] sm:$0xff] %v4175
        %5200 = vst [vmem:[%s135 + $0x1e30] sm:$0xff] %v4176
        %5201 = vst [vmem:[%s135 + $0x1e38] sm:$0xff] %v4177
        %5202 = vst [vmem:[%s135 + $0x1e40] sm:$0xff] %v4178
        %5203 = vst [vmem:[%s135 + $0x1e48] sm:$0xff] %v4179
        %5204 = vst [vmem:[%s135 + $0x1e50] sm:$0xff] %v4180
        %5205 = vst [vmem:[%s135 + $0x1e58] sm:$0xff] %v4181
        %5206 = vst [vmem:[%s135 + $0x1e60] sm:$0xff] %v4182
        %5207 = vst [vmem:[%s135 + $0x1e68] sm:$0xff] %v4183
        %5208 = vst [vmem:[%s135 + $0x1e70] sm:$0xff] %v4184
        %5209 = vst [vmem:[%s135 + $0x1e78] sm:$0xff] %v4185
        %5210 = vst [vmem:[%s135 + $0x1e80] sm:$0xff] %v4186
        %5211 = vst [vmem:[%s135 + $0x1e88] sm:$0xff] %v4187
        %5212 = vst [vmem:[%s135 + $0x1e90] sm:$0xff] %v4188
        %5213 = vst [vmem:[%s135 + $0x1e98] sm:$0xff] %v4189
        %5214 = vst [vmem:[%s135 + $0x1ea0] sm:$0xff] %v4190
        %5215 = vst [vmem:[%s135 + $0x1ea8] sm:$0xff] %v4191
        %5216 = vst [vmem:[%s135 + $0x1eb0] sm:$0xff] %v4192
        %5217 = vst [vmem:[%s135 + $0x1eb8] sm:$0xff] %v4193
        %5218 = vst [vmem:[%s135 + $0x1ec0] sm:$0xff] %v4194
        %5219 = vst [vmem:[%s135 + $0x1ec8] sm:$0xff] %v4195
        %5220 = vst [vmem:[%s135 + $0x1ed0] sm:$0xff] %v4196
        %5221 = vst [vmem:[%s135 + $0x1ed8] sm:$0xff] %v4197
        %5222 = vst [vmem:[%s135 + $0x1ee0] sm:$0xff] %v4198
        %5223 = vst [vmem:[%s135 + $0x1ee8] sm:$0xff] %v4199
        %5224 = vst [vmem:[%s135 + $0x1ef0] sm:$0xff] %v4200
        %5225 = vst [vmem:[%s135 + $0x1ef8] sm:$0xff] %v4201
        %5226 = vst [vmem:[%s135 + $0x1f00] sm:$0xff] %v4202
        %5227 = vst [vmem:[%s135 + $0x1f08] sm:$0xff] %v4203
        %5228 = vst [vmem:[%s135 + $0x1f10] sm:$0xff] %v4204
        %5229 = vst [vmem:[%s135 + $0x1f18] sm:$0xff] %v4205
        %5230 = vst [vmem:[%s135 + $0x1f20] sm:$0xff] %v4206
        %5231 = vst [vmem:[%s135 + $0x1f28] sm:$0xff] %v4207
        %5232 = vst [vmem:[%s135 + $0x1f30] sm:$0xff] %v4208
        %5233 = vst [vmem:[%s135 + $0x1f38] sm:$0xff] %v4209
        %5234 = vst [vmem:[%s135 + $0x1f40] sm:$0xff] %v4210
        %5235 = vst [vmem:[%s135 + $0x1f48] sm:$0xff] %v4211
        %5236 = vst [vmem:[%s135 + $0x1f50] sm:$0xff] %v4212
        %5237 = vst [vmem:[%s135 + $0x1f58] sm:$0xff] %v4213
        %5238 = vst [vmem:[%s135 + $0x1f60] sm:$0xff] %v4214
        %5239 = vst [vmem:[%s135 + $0x1f68] sm:$0xff] %v4215
        %5240 = vst [vmem:[%s135 + $0x1f70] sm:$0xff] %v4216
        %5241 = vst [vmem:[%s135 + $0x1f78] sm:$0xff] %v4217
        %5242 = vst [vmem:[%s135 + $0x1f80] sm:$0xff] %v4218
        %5243 = vst [vmem:[%s135 + $0x1f88] sm:$0xff] %v4219
        %5244 = vst [vmem:[%s135 + $0x1f90] sm:$0xff] %v4220
        %5245 = vst [vmem:[%s135 + $0x1f98] sm:$0xff] %v4221
        %5246 = vst [vmem:[%s135 + $0x1fa0] sm:$0xff] %v4222
        %5247 = vst [vmem:[%s135 + $0x1fa8] sm:$0xff] %v4223
        %5248 = vst [vmem:[%s135 + $0x1fb0] sm:$0xff] %v4224
        %5249 = vst [vmem:[%s135 + $0x1fb8] sm:$0xff] %v4225
        %5250 = vst [vmem:[%s135 + $0x1fc0] sm:$0xff] %v4226
        %5251 = vst [vmem:[%s135 + $0x1fc8] sm:$0xff] %v4227
        %5252 = vst [vmem:[%s135 + $0x1fd0] sm:$0xff] %v4228
        %5253 = vst [vmem:[%s135 + $0x1fd8] sm:$0xff] %v4229
        %5254 = vst [vmem:[%s135 + $0x1fe0] sm:$0xff] %v4230
        %5255 = vst [vmem:[%s135 + $0x1fe8] sm:$0xff] %v4231
        %5256 = vst [vmem:[%s135 + $0x1ff0] sm:$0xff] %v4232
        %5257 = vst [vmem:[%s135 + $0x1ff8] sm:$0xff] %v4233
        %s5258 = sand.u32 %s52, 1
        %s5259 = scalar_lea.sflag [#allocation4], %s5258
        %s5260 = sand.u32 %s52, 1
        %s5261 = smul.addr %s5260, 8192
        %s5262 = scalar_lea.vmem [#allocation5], %s5261
        // Predicated region
        $region29: #{tpu_custom_call.1} parent=23 // pred_check
          %p5263 = pneg %p62
        $region30: #{tpu_custom_call.1} parent=23 // pred_check_branch
          %5265 = sbr.rel (%p5263) target = $region32
        $region31: #{tpu_custom_call.1} parent=23 // pred_region
          %s5266 = smul.u32 128, %s18
          %s5268 = ssub.s32 131072, 131072
          %5269 = vsyncadd %s5259, %s5268
          %s5270 = smul.addr %s5266, 8
          %s5271 = smul.addr %s5270, 128
          %s5272 = scalar_lea.hbm %s1, %s5271
          %s5273 = sshll.u32 %s5262, 4
          %s5274 = int_to_ptr.vmem [resolvable:$true] %s5273
          %5279 = dma.vmem_to_hbm [thread:$0]  %s5274, 131072, %s5272, %s5259, 1024, 1024, 64
        $region32: #{tpu_custom_call.1} parent=23 // pred_fallthru
          _
      $region24: #{tpu_custom_call.1} parent=5 // pred_fallthru
        _
      %p5280 = scmp.le.s32.totalorder 2, %s13
      // Predicated region
      $region33: #{tpu_custom_call.1} parent=5 // pred_check
        %p5281 = pneg %p5280
      $region34: #{tpu_custom_call.1} parent=5 // pred_check_branch
        %5283 = sbr.rel (%p5281) target = $region36
      $region35: #{tpu_custom_call.1} parent=5 // pred_region
        %s5284 = ssub.s32 %s13, 2
        // Predicated region
        $region37: #{tpu_custom_call.1} parent=35 // pred_check
          %p5285 = pneg %p68
        $region38: #{tpu_custom_call.1} parent=35 // pred_check_branch
          %5287 = sbr.rel (%p5285) target = $region40
        $region39: #{tpu_custom_call.1} parent=35 // pred_region
          %s5288 = sand.u32 %s53, 1
          %s5289 = scalar_lea.sflag [#allocation4], %s5288
          %s5290 = sand.u32 %s53, 1
          %s5291 = smul.addr %s5290, 8192
          %s5292 = scalar_lea.vmem [#allocation5], %s5291
          %5293 = dma.done %s5289, 131072
        $region40: #{tpu_custom_call.1} parent=35 // pred_fallthru
          _
      $region36: #{tpu_custom_call.1} parent=5 // pred_fallthru
        _
    $region6: #{tpu_custom_call.1} parent=1 // loop_footer
      %s17 = sadd.s32 1, %s13
    $region7: #{tpu_custom_call.1} parent=1 // loop_footer_branch
      %12 = sbr.rel target = $region3
    $region8: #{tpu_custom_call.1} parent=1 // loop_exit
      _
    %5294 = vsyncpa [#allocation3], 1
    %s5295 = scalar_lea.sflag [#allocation3], 1
    %5296 = vsyncpa %s5295, 1
    %5297 = vsyncpa [#allocation4], 1
    %s5298 = scalar_lea.sflag [#allocation4], 1
    %5299 = vsyncpa %s5298, 1

</llo_original>
